<compile_context>
chip_gen: v5e
topology: v5e:2x2
jax: 0.10.0
libtpu: 0.0.40
codegen_flags: <defaults>
</compile_context>

<pallas_src>
import jax
import jax.numpy as jnp
from jax.experimental import pallas as pl
from jax.experimental.pallas import tpu as pltpu

LANES = 128
TARGET_ROW_TILE = 4096      # 4096 x 128 x 4B = 2 MiB per f32 input block
ACC_ROWS = 512              # fixed-size VMEM accumulator (512 x 128 x 4B = 256 KiB)
FALLBACK_ELEMS = 1 << 18    # below this, plain JAX beats the pallas_call fixed cost


def _make_kernel(rows_valid, row_tile, acc_rows, inner, tail_block):
    """Build the L1-sum kernel with trace-time constants closed over.

    rows_valid : total valid rows in the (rows, 128) input.
    row_tile   : rows per input block.
    acc_rows   : rows of the VMEM accumulator (row_tile % acc_rows == 0).
    inner      : sequential grid steps per core.
    tail_block : logical index of the partial last block, or None if all
                 blocks are full.
    """
    fold = row_tile // acc_rows

    def kernel(a_ref, b_ref, o_ref, acc_ref):
        c = pl.program_id(0)   # core-parallel axis
        i = pl.program_id(1)   # sequential reduction axis

        @pl.when(i == 0)
        def _():
            acc_ref[...] = jnp.zeros_like(acc_ref)

        a = a_ref[...].astype(jnp.float32)
        b = b_ref[...].astype(jnp.float32)
        part = jnp.abs(a - b)

        def accumulate(x):
            if fold > 1:
                # Fold the big block into the fixed-size accumulator.
                # Leading-dim-only reshape: no (8,128) tile crossing, pure VPU adds.
                x = x.reshape(fold, acc_rows, LANES).sum(axis=0)
            acc_ref[...] += x

        if tail_block is None:
            # All blocks are full: interior fast path only.
            accumulate(part)
        else:
            step = c * inner + i

            @pl.when(step != tail_block)
            def _():
                accumulate(part)                       # unmasked interior step

            @pl.when(step == tail_block)
            def _():
                # Partial last block: rows past rows_valid hold garbage from the
                # partial DMA; mask them to zero BEFORE accumulating.
                row_ids = tail_block * row_tile + jax.lax.broadcasted_iota(
                    jnp.int32, (row_tile, LANES), 0)
                accumulate(jnp.where(row_ids < rows_valid, part, 0.0))

        @pl.when(i == inner - 1)
        def _():
            # Single cross-lane/sublane reduce, once per core-range.
            o_ref[...] = jnp.reshape(jnp.sum(acc_ref[...]), (1, 1, 1))

    return kernel


def _l1_abs_sum(a2d, b2d):
    """a2d, b2d: (rows, 128) arrays (any float dtype).

    Returns the scalar sum(|a - b|) as float32.
    """
    rows = a2d.shape[0]

    # Tile selection: big tiles to amortize per-step overhead; a single
    # full-extent block for anything smaller than one target tile.
    row_tile = TARGET_ROW_TILE if rows >= TARGET_ROW_TILE else rows
    nblocks = pl.cdiv(rows, row_tile)

    # Only split across (up to 2) TensorCores when the block count divides
    # evenly, so no clamped/duplicated block DMA is ever issued.  Harmless
    # (near no-op) on single-TC v5e/v6e, shards the stream on v7x.
    ncores = 2 if (nblocks >= 2 and nblocks % 2 == 0) else 1
    inner = nblocks // ncores

    tail_block = (nblocks - 1) if (nblocks * row_tile != rows) else None

    # Fixed-size accumulator whenever the tile folds evenly onto it.
    if row_tile > ACC_ROWS and row_tile % ACC_ROWS == 0:
        acc_rows = ACC_ROWS
    else:
        acc_rows = row_tile

    def in_map(c, i):
        return (c * inner + i, 0)

    kernel = _make_kernel(rows, row_tile, acc_rows, inner, tail_block)

    partials = pl.pallas_call(
        kernel,
        out_shape=jax.ShapeDtypeStruct((ncores, 1, 1), jnp.float32),
        grid_spec=pltpu.PrefetchScalarGridSpec(
            num_scalar_prefetch=0,
            grid=(ncores, inner),
            in_specs=[
                pl.BlockSpec((row_tile, LANES), in_map),
                pl.BlockSpec((row_tile, LANES), in_map),
            ],
            out_specs=pl.BlockSpec((1, 1, 1), lambda c, i: (c, 0, 0)),
            scratch_shapes=[pltpu.VMEM((acc_rows, LANES), jnp.float32)],
        ),
        compiler_params=pltpu.CompilerParams(
            dimension_semantics=("parallel", "arbitrary"),
        ),
    )(a2d, b2d)

    # Add the per-core partial sums (tiny plain-JAX op).
    return jnp.sum(partials)


def _total_abs_diff(a, b):
    """sum(|a - b|) over all elements, routed through the Pallas kernel when large."""
    a_flat = a.reshape(-1)
    b_flat = b.reshape(-1)
    n = a_flat.shape[0]

    if n < FALLBACK_ELEMS:
        # Tiny input: the pallas_call fixed cost exceeds the memory traffic.
        return jnp.sum(jnp.abs(a_flat.astype(jnp.float32) -
                               b_flat.astype(jnp.float32)))

    # Main lane-aligned body goes through the kernel; the (<128-element)
    # ragged tail is reduced in plain JAX — no padded HBM copy of the inputs.
    n_main = (n // LANES) * LANES
    total = _l1_abs_sum(a_flat[:n_main].reshape(-1, LANES),
                        b_flat[:n_main].reshape(-1, LANES))
    if n_main != n:
        total = total + jnp.sum(jnp.abs(a_flat[n_main:].astype(jnp.float32) -
                                        b_flat[n_main:].astype(jnp.float32)))
    return total


class L1AEPallas:
    """JAX/Pallas equivalent of the PyTorch L1_AE loss module."""

    def __init__(self, loss_strategy="sum"):
        assert loss_strategy in ("sum", "mean")
        self.strat = loss_strategy

    def __call__(self, output_batch, input_batch):
        if isinstance(output_batch, dict):
            output_batch = output_batch["x_hat"]

        total_abs = _total_abs_diff(output_batch, input_batch)

        if self.strat == "sum":
            # nn.L1Loss(reduction='sum') / batch_size
            l1 = total_abs / jnp.float32(input_batch.shape[0])
        else:  # 'mean'
            l1 = total_abs / jnp.float32(input_batch.size)

        return {"combined_loss": l1, "reg": l1, "recon_error": l1}


if __name__ == "__main__":
    key = jax.random.PRNGKey(0)
    ks = jax.random.split(key, 8)

    # --- Small NCHW shape consistent with an autoencoder reconstruction loss
    #     (takes the small-input plain-JAX fallback path).
    x_hat = jax.random.normal(ks[0], (2, 4, 16, 16), dtype=jnp.float32)
    x = jax.random.normal(ks[1], (2, 4, 16, 16), dtype=jnp.float32)

    loss = L1AEPallas(loss_strategy="sum")({"x_hat": x_hat}, x)
    jax.block_until_ready(loss["combined_loss"])
    ref = jnp.sum(jnp.abs(x_hat - x)) / x.shape[0]
    assert jnp.allclose(loss["combined_loss"], ref, rtol=1e-5, atol=1e-5)

    loss_mean = L1AEPallas(loss_strategy="mean")({"x_hat": x_hat}, x)
    jax.block_until_ready(loss_mean["combined_loss"])
    ref_mean = jnp.mean(jnp.abs(x_hat - x))
    assert jnp.allclose(loss_mean["combined_loss"], ref_mean, rtol=1e-5, atol=1e-5)

    # --- Large, lane/tile-aligned shape: exercises the Pallas kernel with two
    #     full 4096-row blocks and the 2-way core-parallel split (no tail mask).
    y_hat = jax.random.normal(ks[2], (2, 8, 256, 256), dtype=jnp.float32)
    y = jax.random.normal(ks[3], (2, 8, 256, 256), dtype=jnp.float32)
    loss_big = L1AEPallas(loss_strategy="sum")({"x_hat": y_hat}, y)
    jax.block_until_ready(loss_big["combined_loss"])
    ref_big = jnp.sum(jnp.abs(y_hat - y)) / y.shape[0]
    assert jnp.allclose(loss_big["combined_loss"], ref_big, rtol=1e-4, atol=1e-2)

    # --- Large ragged shape: exercises multiple sequential steps, the
    #     pl.when-gated partial-tail row mask, and the plain-JAX flat tail.
    z_hat = jax.random.normal(ks[4], (2, 4, 360, 365), dtype=jnp.float32)
    z = jax.random.normal(ks[5], (2, 4, 360, 365), dtype=jnp.float32)
    loss_rag = L1AEPallas(loss_strategy="mean")({"x_hat": z_hat}, z)
    jax.block_until_ready(loss_rag["combined_loss"])
    ref_rag = jnp.mean(jnp.abs(z_hat - z))
    assert jnp.allclose(loss_rag["combined_loss"], ref_rag, rtol=1e-5, atol=1e-5)

    loss_rag_sum = L1AEPallas(loss_strategy="sum")({"x_hat": z_hat}, z)
    jax.block_until_ready(loss_rag_sum["combined_loss"])
    ref_rag_sum = jnp.sum(jnp.abs(z_hat - z)) / z.shape[0]
    assert jnp.allclose(loss_rag_sum["combined_loss"], ref_rag_sum, rtol=1e-4, atol=1e-2)

    print("KERNEL_OK")
</pallas_src>

<mosaic_0001>
module attributes {stable_mosaic.version = 11 : i64} {
  func.func @kernel(%arg0: i32, %arg1: i32, %arg2: memref<4096x128xf32, #tpu.memory_space<vmem>>, %arg3: memref<4096x128xf32, #tpu.memory_space<vmem>>, %arg4: memref<1x1x1xf32, #tpu.memory_space<vmem>>, %arg5: memref<512x128xf32, #tpu.memory_space<vmem>>) attributes {dimension_semantics = [#tpu.dimension_semantics<parallel>, #tpu.dimension_semantics<arbitrary>], iteration_bounds = array<i64: 2, 1>, scalar_prefetch = 0 : i64, scratch_operands = 1 : i64, tpu.core_type = #tpu.core_type<tc>, window_params = [{transform_indices = @transform_0, window_bounds = array<i64: 4096, 128>}, {transform_indices = @transform_1, window_bounds = array<i64: 4096, 128>}, {transform_indices = @transform_2, window_bounds = array<i64: 1, 1, 1>}]} {
    %c0_i32 = arith.constant 0 : i32
    %0 = arith.cmpi eq, %arg1, %c0_i32 : i32
    %1 = arith.extui %0 : i1 to i32
    %c0_i32_0 = arith.constant 0 : i32
    %2 = arith.cmpi ne, %1, %c0_i32_0 : i32
    scf.if %2 {
      %cst_10 = arith.constant 0.000000e+00 : f32
      %15 = vector.broadcast %cst_10 : f32 to vector<512x128xf32>
      %c0_11 = arith.constant 0 : index
      %c0_12 = arith.constant 0 : index
      %16 = vector.load %arg5[%c0_11, %c0_12] : memref<512x128xf32, #tpu.memory_space<vmem>>, vector<512x128xf32>
      tpu.vector_store %arg5[%c0_11, %c0_12], %15 {strides = array<i32>} : memref<512x128xf32, #tpu.memory_space<vmem>>, vector<512x128xf32>,
    } else {
    }
    %c0 = arith.constant 0 : index
    %c0_1 = arith.constant 0 : index
    %3 = vector.load %arg2[%c0, %c0_1] : memref<4096x128xf32, #tpu.memory_space<vmem>>, vector<4096x128xf32>
    %c0_2 = arith.constant 0 : index
    %c0_3 = arith.constant 0 : index
    %4 = vector.load %arg3[%c0_2, %c0_3] : memref<4096x128xf32, #tpu.memory_space<vmem>>, vector<4096x128xf32>
    %5 = arith.subf %3, %4 : vector<4096x128xf32>
    %6 = math.absf %5 : vector<4096x128xf32>
    %7 = vector.shape_cast %6 : vector<4096x128xf32> to vector<8x512x128xf32>
    %cst = arith.constant dense<0.000000e+00> : vector<512x128xf32>
    %8 = vector.multi_reduction <add>, %7, %cst [0] : vector<8x512x128xf32> to vector<512x128xf32>
    %c0_4 = arith.constant 0 : index
    %c0_5 = arith.constant 0 : index
    %9 = vector.load %arg5[%c0_4, %c0_5] : memref<512x128xf32, #tpu.memory_space<vmem>>, vector<512x128xf32>
    %10 = arith.addf %9, %8 : vector<512x128xf32>
    %c0_6 = arith.constant 0 : index
    %c0_7 = arith.constant 0 : index
    %11 = vector.load %arg5[%c0_6, %c0_7] : memref<512x128xf32, #tpu.memory_space<vmem>>, vector<512x128xf32>
    tpu.vector_store %arg5[%c0_6, %c0_7], %10 {strides = array<i32>} : memref<512x128xf32, #tpu.memory_space<vmem>>, vector<512x128xf32>,
    %c0_i32_8 = arith.constant 0 : i32
    %12 = arith.cmpi eq, %arg1, %c0_i32_8 : i32
    %13 = arith.extui %12 : i1 to i32
    %c0_i32_9 = arith.constant 0 : i32
    %14 = arith.cmpi ne, %13, %c0_i32_9 : i32
    scf.if %14 {
      %c0_10 = arith.constant 0 : index
      %c0_11 = arith.constant 0 : index
      %15 = vector.load %arg5[%c0_10, %c0_11] : memref<512x128xf32, #tpu.memory_space<vmem>>, vector<512x128xf32>
      %16 = vector.shape_cast %15 : vector<512x128xf32> to vector<1x512x128xf32>
      %cst_12 = arith.constant dense<0.000000e+00> : vector<1xf32>
      %17 = vector.multi_reduction <add>, %16, %cst_12 [1, 2] : vector<1x512x128xf32> to vector<1xf32>
      %18 = vector.shape_cast %17 : vector<1xf32> to vector<1x1x1xf32>
      %19 = vector.extract %18[0, 0, 0] : f32 from vector<1x1x1xf32>
      %20 = vector.broadcast %19 : f32 to vector<1x1x1xf32>
      %c0_13 = arith.constant 0 : index
      %c0_14 = arith.constant 0 : index
      %c0_15 = arith.constant 0 : index
      %21 = vector.load %arg4[%c0_13, %c0_14, %c0_15] : memref<1x1x1xf32, #tpu.memory_space<vmem>>, vector<1x1x1xf32>
      tpu.vector_store %arg4[%c0_13, %c0_14, %c0_15], %20 {strides = array<i32>} : memref<1x1x1xf32, #tpu.memory_space<vmem>>, vector<1x1x1xf32>,
    } else {
    }
    return
  }
  func.func @transform_0(%arg0: i32, %arg1: i32) -> (i32, i32) {
    %c1_i32 = arith.constant 1 : i32
    %0 = arith.muli %arg0, %c1_i32 : i32
    %1 = arith.addi %0, %arg1 : i32
    %c0_i32 = arith.constant 0 : i32
    %c0_i32_0 = arith.constant 0 : i32
    return %1, %c0_i32 : i32, i32
  }
  func.func @transform_1(%arg0: i32, %arg1: i32) -> (i32, i32) {
    %c1_i32 = arith.constant 1 : i32
    %0 = arith.muli %arg0, %c1_i32 : i32
    %1 = arith.addi %0, %arg1 : i32
    %c0_i32 = arith.constant 0 : i32
    %c0_i32_0 = arith.constant 0 : i32
    return %1, %c0_i32 : i32, i32
  }
  func.func @transform_2(%arg0: i32, %arg1: i32) -> (i32, i32, i32) {
    %c0_i32 = arith.constant 0 : i32
    %c0_i32_0 = arith.constant 0 : i32
    %c0_i32_1 = arith.constant 0 : i32
    return %arg0, %c0_i32, %c0_i32_0 : i32, i32, i32
  }
}

</mosaic_0001>

<llo_original>
// kernel: tpu_custom_call.1
$region0: #{tpu_custom_call.1}
  #allocation0 [shape = 'u32[]', space=smem, size = 0x4, offset = 0x4, fixed_abs, tag = 'smem constant byte address 0x4 - core index']
  #allocation1 [shape = 'u32[72,128]{1,0:T(1,128)}', space=vmem, size = 0x9000, scoped, tag = 'internal scratch']
  #allocation2 [shape = 'f32[512,128]{1,0:T(8,128)}', space=vmem, size = 0x40000, scoped, tag = 'scratch operand']
  %s0 = inlined_call_operand.hbm [shape: f32[8192,128], index: 0, kind: input, shape index: {}]
  %s1 = inlined_call_operand.hbm [shape: f32[8192,128], index: 1, kind: input, shape index: {}]
  %s2 = inlined_call_operand.vmem [shape: f32[2,1,1], index: 2, kind: output, shape index: {}]
  %s3 = sld [smem:[#allocation0]]
  $region57: #{tpu_custom_call.1} parent=0
    _
  %s5 = ssub.s32 1, %s3
  %s6 = scalar_select 0, %s5, %s3
  $region1: #{tpu_custom_call.1} parent=0
    #allocation3 [shape = 'u8[4194304]{0}', space=vmem, size = 0x400000, scoped, tag = 'input window, operand 0']
    #allocation4 [shape = 's32[2]{0}', space=sflag, size = 0x8, scoped, tag = 'scoped memory for tpu_custom_call.1']
    #allocation5 [shape = 'u8[4194304]{0}', space=vmem, size = 0x400000, scoped, tag = 'input window, operand 1']
    #allocation6 [shape = 's32[2]{0}', space=sflag, size = 0x8, scoped, tag = 'scoped memory for tpu_custom_call.1']
    %7 = vsyncpa [#allocation4], 0
    %s8 = scalar_lea.sflag [#allocation4], 1
    %9 = vsyncpa %s8, 0
    %10 = vsyncpa [#allocation6], 0
    %s11 = scalar_lea.sflag [#allocation6], 1
    %12 = vsyncpa %s11, 0
    loop: start=0, step=1, limit=4
    $region2: #{tpu_custom_call.1} parent=1 // loop_pre_header
      _
    $region3: #{tpu_custom_call.1} parent=1 // loop_header
      %s14 = sphi 0, %s18
      %p15 = scmp.ge.s32.totalorder %s14, 4
      %s21 = sphi 0, %s33
      %s22 = sphi 0, %s29
      %s23 = sphi 0, %s21
      %s24 = sphi 0, %s22
      %s25 = sphi 0, %s23
      %s26 = sphi 0, %s24
      %s38 = sphi 0, %s40
      %s41 = sphi 0, %s38
      %s42 = sphi 0, %s41
      %s58 = sphi 0, %s42
      %s66 = sphi 0, %s68
      %s69 = sphi 0, %s66
      %s70 = sphi 0, %s69
      %s86 = sphi 0, %s70
      %s92 = sphi 0, %s94
      %s95 = sphi 0, %s92
      %s96 = sphi 0, %s95
      %s112 = sphi 0, %s96
    $region4: #{tpu_custom_call.1} parent=1 // loop_header_branch
      %17 = sbr.rel (%p15) target = $region8
    $region5: #{tpu_custom_call.1} parent=1 // loop_body
      %s19 = ssub.s32 %s14, 1
      %s20 = ssub.s32 %s14, 2
      %s27 = sadd.s32 1, %s22
      %p28 = scmp.ge.s32.totalorder %s27, 1
      %s29 = scalar_select %p28, 0, %s27
      %s30 = sadd.s32 1, %s21
      %s31 = scalar_select %p28, %s30, %s21
      %p32 = scmp.ge.s32.totalorder %s31, 2
      %s33 = scalar_select %p32, 0, %s31
      %s34 = sadd.s32 %s21, %s22
      %s35 = sadd.s32 %s33, %s29
      %s36 = ssub.s32 %s34, %s35
      %p37 = scmp.eq.s32.totalorder %s36, 0
      %s39 = sadd.s32 %s38, 1
      %s40 = scalar_select %p37, %s38, %s39
      %p43 = pneg %p37
      %p44 = scmp.eq.s32.totalorder %s14, 1
      %p45 = por %p43, %p44
      %p46 = scmp.ne.s32.totalorder %s38, %s41
      %p47 = scmp.eq.s32.totalorder %s14, 0
      %p48 = por %p46, %p47
      %p49 = scmp.ne.s32.totalorder %s38, %s41
      %p50 = scmp.eq.s32.totalorder %s19, 1
      %p51 = por %p49, %p50
      %p52 = scmp.ne.s32.totalorder %s41, %s42
      %p53 = scmp.eq.s32.totalorder %s19, 0
      %p54 = por %p52, %p53
      %p55 = scmp.ne.s32.totalorder %s41, %s42
      %p56 = scmp.eq.s32.totalorder %s20, 1
      %p57 = por %p55, %p56
      %p59 = scmp.ne.s32.totalorder %s42, %s58
      %p60 = scmp.eq.s32.totalorder %s20, 0
      %p61 = por %p59, %p60
      %s62 = sadd.s32 %s21, %s22
      %s63 = sadd.s32 %s33, %s29
      %s64 = ssub.s32 %s62, %s63
      %p65 = scmp.eq.s32.totalorder %s64, 0
      %s67 = sadd.s32 %s66, 1
      %s68 = scalar_select %p65, %s66, %s67
      %p71 = pneg %p65
      %p72 = scmp.eq.s32.totalorder %s14, 1
      %p73 = por %p71, %p72
      %p74 = scmp.ne.s32.totalorder %s66, %s69
      %p75 = scmp.eq.s32.totalorder %s14, 0
      %p76 = por %p74, %p75
      %p77 = scmp.ne.s32.totalorder %s66, %s69
      %p78 = scmp.eq.s32.totalorder %s19, 1
      %p79 = por %p77, %p78
      %p80 = scmp.ne.s32.totalorder %s69, %s70
      %p81 = scmp.eq.s32.totalorder %s19, 0
      %p82 = por %p80, %p81
      %p83 = scmp.ne.s32.totalorder %s69, %s70
      %p84 = scmp.eq.s32.totalorder %s20, 1
      %p85 = por %p83, %p84
      %p87 = scmp.ne.s32.totalorder %s70, %s86
      %p88 = scmp.eq.s32.totalorder %s20, 0
      %p89 = por %p87, %p88
      %s90 = ssub.s32 %s21, %s33
      %p91 = scmp.eq.s32.totalorder %s90, 0
      %s93 = sadd.s32 %s92, 1
      %s94 = scalar_select %p91, %s92, %s93
      %p97 = pneg %p91
      %p98 = scmp.eq.s32.totalorder %s14, 1
      %p99 = por %p97, %p98
      %p100 = scmp.ne.s32.totalorder %s92, %s95
      %p101 = scmp.eq.s32.totalorder %s14, 0
      %p102 = por %p100, %p101
      %p103 = scmp.ne.s32.totalorder %s92, %s95
      %p104 = scmp.eq.s32.totalorder %s19, 1
      %p105 = por %p103, %p104
      %p106 = scmp.ne.s32.totalorder %s95, %s96
      %p107 = scmp.eq.s32.totalorder %s19, 0
      %p108 = por %p106, %p107
      %p109 = scmp.ne.s32.totalorder %s95, %s96
      %p110 = scmp.eq.s32.totalorder %s20, 1
      %p111 = por %p109, %p110
      %p113 = scmp.ne.s32.totalorder %s96, %s112
      %p114 = scmp.eq.s32.totalorder %s20, 0
      %p115 = por %p113, %p114
      %p116 = scmp.le.s32.totalorder 1, %s14
      %p117 = scmp.lt.s32.totalorder %s14, 3
      %p118 = pnand %p116, %p117
      %p119 = pneg %p118
      // Predicated region
      $region9: #{tpu_custom_call.1} parent=5 // pred_check
        _
      $region10: #{tpu_custom_call.1} parent=5 // pred_check_branch
        %121 = sbr.rel (%p118) target = $region12
      $region11: #{tpu_custom_call.1} parent=5 // pred_region
        %s122 = ssub.s32 %s14, 1
      $region12: #{tpu_custom_call.1} parent=5 // pred_fallthru
        _
      %p123 = scmp.lt.s32.totalorder %s14, 2
      // Predicated region
      $region13: #{tpu_custom_call.1} parent=5 // pred_check
        %p124 = pneg %p123
      $region14: #{tpu_custom_call.1} parent=5 // pred_check_branch
        %126 = sbr.rel (%p124) target = $region16
      $region15: #{tpu_custom_call.1} parent=5 // pred_region
        // Predicated region
        $region17: #{tpu_custom_call.1} parent=15 // pred_check
          %p127 = pneg %p48
        $region18: #{tpu_custom_call.1} parent=15 // pred_check_branch
          %129 = sbr.rel (%p127) target = $region20
        $region19: #{tpu_custom_call.1} parent=15 // pred_region
          %s130 = sand.u32 %s38, 1
          %s131 = scalar_lea.sflag [#allocation4], %s130
          %s132 = sand.u32 %s38, 1
          %s133 = smul.addr %s132, 4096
          %s134 = scalar_lea.vmem [#allocation3], %s133
          %s135 = sadd.s32 %s21, %s22
          %s136 = smul.u32 512, %s135
          %138 = vsyncadd %s131, 0
          %s139 = smul.addr %s136, 8
          %s140 = scalar_lea.hbm %s0, %s139
          %s141 = sshll.u32 %s140, 4
          %s142 = int_to_ptr.hbm [resolvable:$true] %s141
          %s143 = sshll.u32 %s134, 4
          %s144 = int_to_ptr.vmem [resolvable:$true] %s143
          %149 = dma.hbm_to_vmem [thread:$0]  %s142, 65536, %s144, %s131, 128, 128, 8
        $region20: #{tpu_custom_call.1} parent=15 // pred_fallthru
          _
        // Predicated region
        $region21: #{tpu_custom_call.1} parent=15 // pred_check
          %p150 = pneg %p76
        $region22: #{tpu_custom_call.1} parent=15 // pred_check_branch
          %152 = sbr.rel (%p150) target = $region24
        $region23: #{tpu_custom_call.1} parent=15 // pred_region
          %s153 = sand.u32 %s66, 1
          %s154 = scalar_lea.sflag [#allocation6], %s153
          %s155 = sand.u32 %s66, 1
          %s156 = smul.addr %s155, 4096
          %s157 = scalar_lea.vmem [#allocation5], %s156
          %s158 = sadd.s32 %s21, %s22
          %s159 = smul.u32 512, %s158
          %161 = vsyncadd %s154, 0
          %s162 = smul.addr %s159, 8
          %s163 = scalar_lea.hbm %s1, %s162
          %s164 = sshll.u32 %s163, 4
          %s165 = int_to_ptr.hbm [resolvable:$true] %s164
          %s166 = sshll.u32 %s157, 4
          %s167 = int_to_ptr.vmem [resolvable:$true] %s166
          %172 = dma.hbm_to_vmem [thread:$0]  %s165, 65536, %s167, %s154, 128, 128, 8
        $region24: #{tpu_custom_call.1} parent=15 // pred_fallthru
          _
      $region16: #{tpu_custom_call.1} parent=5 // pred_fallthru
        _
      %p173 = scmp.le.s32.totalorder 1, %s14
      %p174 = scmp.lt.s32.totalorder %s14, 3
      %p175 = pnand %p173, %p174
      %p176 = pneg %p175
      // Predicated region
      $region25: #{tpu_custom_call.1} parent=5 // pred_check
        _
      $region26: #{tpu_custom_call.1} parent=5 // pred_check_branch
        %178 = sbr.rel (%p175) target = $region28
      $region27: #{tpu_custom_call.1} parent=5 // pred_region
        %s179 = ssub.s32 %s14, 1
        %s180 = sand.u32 %s41, 1
        %s181 = scalar_lea.sflag [#allocation4], %s180
        %s182 = sand.u32 %s41, 1
        %s183 = smul.addr %s182, 4096
        %s184 = scalar_lea.vmem [#allocation3], %s183
        // Predicated region
        $region29: #{tpu_custom_call.1} parent=27 // pred_check
          %p185 = pneg %p54
        $region30: #{tpu_custom_call.1} parent=27 // pred_check_branch
          %187 = sbr.rel (%p185) target = $region32
        $region31: #{tpu_custom_call.1} parent=27 // pred_region
          %189 = dma.done %s181, 65536
        $region32: #{tpu_custom_call.1} parent=27 // pred_fallthru
          _
        %s190 = sand.u32 %s69, 1
        %s191 = scalar_lea.sflag [#allocation6], %s190
        %s192 = sand.u32 %s69, 1
        %s193 = smul.addr %s192, 4096
        %s194 = scalar_lea.vmem [#allocation5], %s193
        // Predicated region
        $region33: #{tpu_custom_call.1} parent=27 // pred_check
          %p195 = pneg %p82
        $region34: #{tpu_custom_call.1} parent=27 // pred_check_branch
          %197 = sbr.rel (%p195) target = $region36
        $region35: #{tpu_custom_call.1} parent=27 // pred_region
          %199 = dma.done %s191, 65536
        $region36: #{tpu_custom_call.1} parent=27 // pred_fallthru
          _
        %s200 = sand.u32 %s41, 1
        %s201 = scalar_lea.sflag [#allocation4], %s200
        %s202 = sand.u32 %s41, 1
        %s203 = smul.addr %s202, 4096
        %s204 = scalar_lea.vmem [#allocation3], %s203
        %p205 = pneg %p54
        %p206 = pneg %p51
        %s207 = sand.u32 %s69, 1
        %s208 = scalar_lea.sflag [#allocation6], %s207
        %s209 = sand.u32 %s69, 1
        %s210 = smul.addr %s209, 4096
        %s211 = scalar_lea.vmem [#allocation5], %s210
        %p212 = pneg %p82
        %p213 = pneg %p79
        %p214 = pneg %p108
        %p215 = pneg %p105
        %p216 = scmp.lt.s32.totalorder %s23, 1
        %s217 = scalar_select %p216, %s23, 1
        %s218 = scalar_lea.vmem %s2, %s217
        %s219 = sadd.s32 %s23, %s24
        %s220 = smul.u32 512, %s219
        %s221 = sadd.s32 %s23, %s24
        %s222 = smul.u32 512, %s221
        %p223 = scmp.lt.s32.totalorder %s23, 1
        %s224 = scalar_select %p223, %s23, 1
        %s225 = scalar_lea.vmem %s2, %s224
        %p226 = scmp.eq.s32.totalorder %s24, 0
        // Predicated region
        $region37: #{tpu_custom_call.1} parent=27 // pred_check
          %p227 = pneg %p226
        $region38: #{tpu_custom_call.1} parent=27 // pred_check_branch
          %229 = sbr.rel (%p227) target = $region40
        $region39: #{tpu_custom_call.1} parent=27 // pred_region
          %230 = vst [vmem:[#allocation2] sm:$0xff] 0.0
          %231 = vst [vmem:[#allocation2 + $0x8] sm:$0xff] 0.0
          %232 = vst [vmem:[#allocation2 + $0x10] sm:$0xff] 0.0
          %233 = vst [vmem:[#allocation2 + $0x18] sm:$0xff] 0.0
          %234 = vst [vmem:[#allocation2 + $0x20] sm:$0xff] 0.0
          %235 = vst [vmem:[#allocation2 + $0x28] sm:$0xff] 0.0
          %236 = vst [vmem:[#allocation2 + $0x30] sm:$0xff] 0.0
          %237 = vst [vmem:[#allocation2 + $0x38] sm:$0xff] 0.0
          %238 = vst [vmem:[#allocation2 + $0x40] sm:$0xff] 0.0
          %239 = vst [vmem:[#allocation2 + $0x48] sm:$0xff] 0.0
          %240 = vst [vmem:[#allocation2 + $0x50] sm:$0xff] 0.0
          %241 = vst [vmem:[#allocation2 + $0x58] sm:$0xff] 0.0
          %242 = vst [vmem:[#allocation2 + $0x60] sm:$0xff] 0.0
          %243 = vst [vmem:[#allocation2 + $0x68] sm:$0xff] 0.0
          %244 = vst [vmem:[#allocation2 + $0x70] sm:$0xff] 0.0
          %245 = vst [vmem:[#allocation2 + $0x78] sm:$0xff] 0.0
          %246 = vst [vmem:[#allocation2 + $0x80] sm:$0xff] 0.0
          %247 = vst [vmem:[#allocation2 + $0x88] sm:$0xff] 0.0
          %248 = vst [vmem:[#allocation2 + $0x90] sm:$0xff] 0.0
          %249 = vst [vmem:[#allocation2 + $0x98] sm:$0xff] 0.0
          %250 = vst [vmem:[#allocation2 + $0xa0] sm:$0xff] 0.0
          %251 = vst [vmem:[#allocation2 + $0xa8] sm:$0xff] 0.0
          %252 = vst [vmem:[#allocation2 + $0xb0] sm:$0xff] 0.0
          %253 = vst [vmem:[#allocation2 + $0xb8] sm:$0xff] 0.0
          %254 = vst [vmem:[#allocation2 + $0xc0] sm:$0xff] 0.0
          %255 = vst [vmem:[#allocation2 + $0xc8] sm:$0xff] 0.0
          %256 = vst [vmem:[#allocation2 + $0xd0] sm:$0xff] 0.0
          %257 = vst [vmem:[#allocation2 + $0xd8] sm:$0xff] 0.0
          %258 = vst [vmem:[#allocation2 + $0xe0] sm:$0xff] 0.0
          %259 = vst [vmem:[#allocation2 + $0xe8] sm:$0xff] 0.0
          %260 = vst [vmem:[#allocation2 + $0xf0] sm:$0xff] 0.0
          %261 = vst [vmem:[#allocation2 + $0xf8] sm:$0xff] 0.0
          %262 = vst [vmem:[#allocation2 + $0x100] sm:$0xff] 0.0
          %263 = vst [vmem:[#allocation2 + $0x108] sm:$0xff] 0.0
          %264 = vst [vmem:[#allocation2 + $0x110] sm:$0xff] 0.0
          %265 = vst [vmem:[#allocation2 + $0x118] sm:$0xff] 0.0
          %266 = vst [vmem:[#allocation2 + $0x120] sm:$0xff] 0.0
          %267 = vst [vmem:[#allocation2 + $0x128] sm:$0xff] 0.0
          %268 = vst [vmem:[#allocation2 + $0x130] sm:$0xff] 0.0
          %269 = vst [vmem:[#allocation2 + $0x138] sm:$0xff] 0.0
          %270 = vst [vmem:[#allocation2 + $0x140] sm:$0xff] 0.0
          %271 = vst [vmem:[#allocation2 + $0x148] sm:$0xff] 0.0
          %272 = vst [vmem:[#allocation2 + $0x150] sm:$0xff] 0.0
          %273 = vst [vmem:[#allocation2 + $0x158] sm:$0xff] 0.0
          %274 = vst [vmem:[#allocation2 + $0x160] sm:$0xff] 0.0
          %275 = vst [vmem:[#allocation2 + $0x168] sm:$0xff] 0.0
          %276 = vst [vmem:[#allocation2 + $0x170] sm:$0xff] 0.0
          %277 = vst [vmem:[#allocation2 + $0x178] sm:$0xff] 0.0
          %278 = vst [vmem:[#allocation2 + $0x180] sm:$0xff] 0.0
          %279 = vst [vmem:[#allocation2 + $0x188] sm:$0xff] 0.0
          %280 = vst [vmem:[#allocation2 + $0x190] sm:$0xff] 0.0
          %281 = vst [vmem:[#allocation2 + $0x198] sm:$0xff] 0.0
          %282 = vst [vmem:[#allocation2 + $0x1a0] sm:$0xff] 0.0
          %283 = vst [vmem:[#allocation2 + $0x1a8] sm:$0xff] 0.0
          %284 = vst [vmem:[#allocation2 + $0x1b0] sm:$0xff] 0.0
          %285 = vst [vmem:[#allocation2 + $0x1b8] sm:$0xff] 0.0
          %286 = vst [vmem:[#allocation2 + $0x1c0] sm:$0xff] 0.0
          %287 = vst [vmem:[#allocation2 + $0x1c8] sm:$0xff] 0.0
          %288 = vst [vmem:[#allocation2 + $0x1d0] sm:$0xff] 0.0
          %289 = vst [vmem:[#allocation2 + $0x1d8] sm:$0xff] 0.0
          %290 = vst [vmem:[#allocation2 + $0x1e0] sm:$0xff] 0.0
          %291 = vst [vmem:[#allocation2 + $0x1e8] sm:$0xff] 0.0
          %292 = vst [vmem:[#allocation2 + $0x1f0] sm:$0xff] 0.0
          %293 = vst [vmem:[#allocation2 + $0x1f8] sm:$0xff] 0.0
        $region40: #{tpu_custom_call.1} parent=27 // pred_fallthru
          _
        %v294 = vld [vmem:[%s184] sm:$0xff]
        %v295 = vld [vmem:[%s184 + $0x8] sm:$0xff]
        %v296 = vld [vmem:[%s184 + $0x10] sm:$0xff]
        %v297 = vld [vmem:[%s184 + $0x18] sm:$0xff]
        %v298 = vld [vmem:[%s184 + $0x20] sm:$0xff]
        %v299 = vld [vmem:[%s184 + $0x28] sm:$0xff]
        %v300 = vld [vmem:[%s184 + $0x30] sm:$0xff]
        %v301 = vld [vmem:[%s184 + $0x38] sm:$0xff]
        %v302 = vld [vmem:[%s184 + $0x40] sm:$0xff]
        %v303 = vld [vmem:[%s184 + $0x48] sm:$0xff]
        %v304 = vld [vmem:[%s184 + $0x50] sm:$0xff]
        %v305 = vld [vmem:[%s184 + $0x58] sm:$0xff]
        %v306 = vld [vmem:[%s184 + $0x60] sm:$0xff]
        %v307 = vld [vmem:[%s184 + $0x68] sm:$0xff]
        %v308 = vld [vmem:[%s184 + $0x70] sm:$0xff]
        %v309 = vld [vmem:[%s184 + $0x78] sm:$0xff]
        %v310 = vld [vmem:[%s184 + $0x80] sm:$0xff]
        %v311 = vld [vmem:[%s184 + $0x88] sm:$0xff]
        %v312 = vld [vmem:[%s184 + $0x90] sm:$0xff]
        %v313 = vld [vmem:[%s184 + $0x98] sm:$0xff]
        %v314 = vld [vmem:[%s184 + $0xa0] sm:$0xff]
        %v315 = vld [vmem:[%s184 + $0xa8] sm:$0xff]
        %v316 = vld [vmem:[%s184 + $0xb0] sm:$0xff]
        %v317 = vld [vmem:[%s184 + $0xb8] sm:$0xff]
        %v318 = vld [vmem:[%s184 + $0xc0] sm:$0xff]
        %v319 = vld [vmem:[%s184 + $0xc8] sm:$0xff]
        %v320 = vld [vmem:[%s184 + $0xd0] sm:$0xff]
        %v321 = vld [vmem:[%s184 + $0xd8] sm:$0xff]
        %v322 = vld [vmem:[%s184 + $0xe0] sm:$0xff]
        %v323 = vld [vmem:[%s184 + $0xe8] sm:$0xff]
        %v324 = vld [vmem:[%s184 + $0xf0] sm:$0xff]
        %v325 = vld [vmem:[%s184 + $0xf8] sm:$0xff]
        %v326 = vld [vmem:[%s184 + $0x100] sm:$0xff]
        %v327 = vld [vmem:[%s184 + $0x108] sm:$0xff]
        %v328 = vld [vmem:[%s184 + $0x110] sm:$0xff]
        %v329 = vld [vmem:[%s184 + $0x118] sm:$0xff]
        %v330 = vld [vmem:[%s184 + $0x120] sm:$0xff]
        %v331 = vld [vmem:[%s184 + $0x128] sm:$0xff]
        %v332 = vld [vmem:[%s184 + $0x130] sm:$0xff]
        %v333 = vld [vmem:[%s184 + $0x138] sm:$0xff]
        %v334 = vld [vmem:[%s184 + $0x140] sm:$0xff]
        %v335 = vld [vmem:[%s184 + $0x148] sm:$0xff]
        %v336 = vld [vmem:[%s184 + $0x150] sm:$0xff]
        %v337 = vld [vmem:[%s184 + $0x158] sm:$0xff]
        %v338 = vld [vmem:[%s184 + $0x160] sm:$0xff]
        %v339 = vld [vmem:[%s184 + $0x168] sm:$0xff]
        %v340 = vld [vmem:[%s184 + $0x170] sm:$0xff]
        %v341 = vld [vmem:[%s184 + $0x178] sm:$0xff]
        %v342 = vld [vmem:[%s184 + $0x180] sm:$0xff]
        %v343 = vld [vmem:[%s184 + $0x188] sm:$0xff]
        %v344 = vld [vmem:[%s184 + $0x190] sm:$0xff]
        %v345 = vld [vmem:[%s184 + $0x198] sm:$0xff]
        %v346 = vld [vmem:[%s184 + $0x1a0] sm:$0xff]
        %v347 = vld [vmem:[%s184 + $0x1a8] sm:$0xff]
        %v348 = vld [vmem:[%s184 + $0x1b0] sm:$0xff]
        %v349 = vld [vmem:[%s184 + $0x1b8] sm:$0xff]
        %v350 = vld [vmem:[%s184 + $0x1c0] sm:$0xff]
        %v351 = vld [vmem:[%s184 + $0x1c8] sm:$0xff]
        %v352 = vld [vmem:[%s184 + $0x1d0] sm:$0xff]
        %v353 = vld [vmem:[%s184 + $0x1d8] sm:$0xff]
        %v354 = vld [vmem:[%s184 + $0x1e0] sm:$0xff]
        %v355 = vld [vmem:[%s184 + $0x1e8] sm:$0xff]
        %v356 = vld [vmem:[%s184 + $0x1f0] sm:$0xff]
        %v357 = vld [vmem:[%s184 + $0x1f8] sm:$0xff]
        %v358 = vld [vmem:[%s184 + $0x200] sm:$0xff]
        %v359 = vld [vmem:[%s184 + $0x208] sm:$0xff]
        %v360 = vld [vmem:[%s184 + $0x210] sm:$0xff]
        %v361 = vld [vmem:[%s184 + $0x218] sm:$0xff]
        %v362 = vld [vmem:[%s184 + $0x220] sm:$0xff]
        %v363 = vld [vmem:[%s184 + $0x228] sm:$0xff]
        %v364 = vld [vmem:[%s184 + $0x230] sm:$0xff]
        %v365 = vld [vmem:[%s184 + $0x238] sm:$0xff]
        %v366 = vld [vmem:[%s184 + $0x240] sm:$0xff]
        %v367 = vld [vmem:[%s184 + $0x248] sm:$0xff]
        %v368 = vld [vmem:[%s184 + $0x250] sm:$0xff]
        %v369 = vld [vmem:[%s184 + $0x258] sm:$0xff]
        %v370 = vld [vmem:[%s184 + $0x260] sm:$0xff]
        %v371 = vld [vmem:[%s184 + $0x268] sm:$0xff]
        %v372 = vld [vmem:[%s184 + $0x270] sm:$0xff]
        %v373 = vld [vmem:[%s184 + $0x278] sm:$0xff]
        %v374 = vld [vmem:[%s184 + $0x280] sm:$0xff]
        %v375 = vld [vmem:[%s184 + $0x288] sm:$0xff]
        %v376 = vld [vmem:[%s184 + $0x290] sm:$0xff]
        %v377 = vld [vmem:[%s184 + $0x298] sm:$0xff]
        %v378 = vld [vmem:[%s184 + $0x2a0] sm:$0xff]
        %v379 = vld [vmem:[%s184 + $0x2a8] sm:$0xff]
        %v380 = vld [vmem:[%s184 + $0x2b0] sm:$0xff]
        %v381 = vld [vmem:[%s184 + $0x2b8] sm:$0xff]
        %v382 = vld [vmem:[%s184 + $0x2c0] sm:$0xff]
        %v383 = vld [vmem:[%s184 + $0x2c8] sm:$0xff]
        %v384 = vld [vmem:[%s184 + $0x2d0] sm:$0xff]
        %v385 = vld [vmem:[%s184 + $0x2d8] sm:$0xff]
        %v386 = vld [vmem:[%s184 + $0x2e0] sm:$0xff]
        %v387 = vld [vmem:[%s184 + $0x2e8] sm:$0xff]
        %v388 = vld [vmem:[%s184 + $0x2f0] sm:$0xff]
        %v389 = vld [vmem:[%s184 + $0x2f8] sm:$0xff]
        %v390 = vld [vmem:[%s184 + $0x300] sm:$0xff]
        %v391 = vld [vmem:[%s184 + $0x308] sm:$0xff]
        %v392 = vld [vmem:[%s184 + $0x310] sm:$0xff]
        %v393 = vld [vmem:[%s184 + $0x318] sm:$0xff]
        %v394 = vld [vmem:[%s184 + $0x320] sm:$0xff]
        %v395 = vld [vmem:[%s184 + $0x328] sm:$0xff]
        %v396 = vld [vmem:[%s184 + $0x330] sm:$0xff]
        %v397 = vld [vmem:[%s184 + $0x338] sm:$0xff]
        %v398 = vld [vmem:[%s184 + $0x340] sm:$0xff]
        %v399 = vld [vmem:[%s184 + $0x348] sm:$0xff]
        %v400 = vld [vmem:[%s184 + $0x350] sm:$0xff]
        %v401 = vld [vmem:[%s184 + $0x358] sm:$0xff]
        %v402 = vld [vmem:[%s184 + $0x360] sm:$0xff]
        %v403 = vld [vmem:[%s184 + $0x368] sm:$0xff]
        %v404 = vld [vmem:[%s184 + $0x370] sm:$0xff]
        %v405 = vld [vmem:[%s184 + $0x378] sm:$0xff]
        %v406 = vld [vmem:[%s184 + $0x380] sm:$0xff]
        %v407 = vld [vmem:[%s184 + $0x388] sm:$0xff]
        %v408 = vld [vmem:[%s184 + $0x390] sm:$0xff]
        %v409 = vld [vmem:[%s184 + $0x398] sm:$0xff]
        %v410 = vld [vmem:[%s184 + $0x3a0] sm:$0xff]
        %v411 = vld [vmem:[%s184 + $0x3a8] sm:$0xff]
        %v412 = vld [vmem:[%s184 + $0x3b0] sm:$0xff]
        %v413 = vld [vmem:[%s184 + $0x3b8] sm:$0xff]
        %v414 = vld [vmem:[%s184 + $0x3c0] sm:$0xff]
        %v415 = vld [vmem:[%s184 + $0x3c8] sm:$0xff]
        %v416 = vld [vmem:[%s184 + $0x3d0] sm:$0xff]
        %v417 = vld [vmem:[%s184 + $0x3d8] sm:$0xff]
        %v418 = vld [vmem:[%s184 + $0x3e0] sm:$0xff]
        %v419 = vld [vmem:[%s184 + $0x3e8] sm:$0xff]
        %v420 = vld [vmem:[%s184 + $0x3f0] sm:$0xff]
        %v421 = vld [vmem:[%s184 + $0x3f8] sm:$0xff]
        %v422 = vld [vmem:[%s184 + $0x400] sm:$0xff]
        %v423 = vld [vmem:[%s184 + $0x408] sm:$0xff]
        %v424 = vld [vmem:[%s184 + $0x410] sm:$0xff]
        %v425 = vld [vmem:[%s184 + $0x418] sm:$0xff]
        %v426 = vld [vmem:[%s184 + $0x420] sm:$0xff]
        %v427 = vld [vmem:[%s184 + $0x428] sm:$0xff]
        %v428 = vld [vmem:[%s184 + $0x430] sm:$0xff]
        %v429 = vld [vmem:[%s184 + $0x438] sm:$0xff]
        %v430 = vld [vmem:[%s184 + $0x440] sm:$0xff]
        %v431 = vld [vmem:[%s184 + $0x448] sm:$0xff]
        %v432 = vld [vmem:[%s184 + $0x450] sm:$0xff]
        %v433 = vld [vmem:[%s184 + $0x458] sm:$0xff]
        %v434 = vld [vmem:[%s184 + $0x460] sm:$0xff]
        %v435 = vld [vmem:[%s184 + $0x468] sm:$0xff]
        %v436 = vld [vmem:[%s184 + $0x470] sm:$0xff]
        %v437 = vld [vmem:[%s184 + $0x478] sm:$0xff]
        %v438 = vld [vmem:[%s184 + $0x480] sm:$0xff]
        %v439 = vld [vmem:[%s184 + $0x488] sm:$0xff]
        %v440 = vld [vmem:[%s184 + $0x490] sm:$0xff]
        %v441 = vld [vmem:[%s184 + $0x498] sm:$0xff]
        %v442 = vld [vmem:[%s184 + $0x4a0] sm:$0xff]
        %v443 = vld [vmem:[%s184 + $0x4a8] sm:$0xff]
        %v444 = vld [vmem:[%s184 + $0x4b0] sm:$0xff]
        %v445 = vld [vmem:[%s184 + $0x4b8] sm:$0xff]
        %v446 = vld [vmem:[%s184 + $0x4c0] sm:$0xff]
        %v447 = vld [vmem:[%s184 + $0x4c8] sm:$0xff]
        %v448 = vld [vmem:[%s184 + $0x4d0] sm:$0xff]
        %v449 = vld [vmem:[%s184 + $0x4d8] sm:$0xff]
        %v450 = vld [vmem:[%s184 + $0x4e0] sm:$0xff]
        %v451 = vld [vmem:[%s184 + $0x4e8] sm:$0xff]
        %v452 = vld [vmem:[%s184 + $0x4f0] sm:$0xff]
        %v453 = vld [vmem:[%s184 + $0x4f8] sm:$0xff]
        %v454 = vld [vmem:[%s184 + $0x500] sm:$0xff]
        %v455 = vld [vmem:[%s184 + $0x508] sm:$0xff]
        %v456 = vld [vmem:[%s184 + $0x510] sm:$0xff]
        %v457 = vld [vmem:[%s184 + $0x518] sm:$0xff]
        %v458 = vld [vmem:[%s184 + $0x520] sm:$0xff]
        %v459 = vld [vmem:[%s184 + $0x528] sm:$0xff]
        %v460 = vld [vmem:[%s184 + $0x530] sm:$0xff]
        %v461 = vld [vmem:[%s184 + $0x538] sm:$0xff]
        %v462 = vld [vmem:[%s184 + $0x540] sm:$0xff]
        %v463 = vld [vmem:[%s184 + $0x548] sm:$0xff]
        %v464 = vld [vmem:[%s184 + $0x550] sm:$0xff]
        %v465 = vld [vmem:[%s184 + $0x558] sm:$0xff]
        %v466 = vld [vmem:[%s184 + $0x560] sm:$0xff]
        %v467 = vld [vmem:[%s184 + $0x568] sm:$0xff]
        %v468 = vld [vmem:[%s184 + $0x570] sm:$0xff]
        %v469 = vld [vmem:[%s184 + $0x578] sm:$0xff]
        %v470 = vld [vmem:[%s184 + $0x580] sm:$0xff]
        %v471 = vld [vmem:[%s184 + $0x588] sm:$0xff]
        %v472 = vld [vmem:[%s184 + $0x590] sm:$0xff]
        %v473 = vld [vmem:[%s184 + $0x598] sm:$0xff]
        %v474 = vld [vmem:[%s184 + $0x5a0] sm:$0xff]
        %v475 = vld [vmem:[%s184 + $0x5a8] sm:$0xff]
        %v476 = vld [vmem:[%s184 + $0x5b0] sm:$0xff]
        %v477 = vld [vmem:[%s184 + $0x5b8] sm:$0xff]
        %v478 = vld [vmem:[%s184 + $0x5c0] sm:$0xff]
        %v479 = vld [vmem:[%s184 + $0x5c8] sm:$0xff]
        %v480 = vld [vmem:[%s184 + $0x5d0] sm:$0xff]
        %v481 = vld [vmem:[%s184 + $0x5d8] sm:$0xff]
        %v482 = vld [vmem:[%s184 + $0x5e0] sm:$0xff]
        %v483 = vld [vmem:[%s184 + $0x5e8] sm:$0xff]
        %v484 = vld [vmem:[%s184 + $0x5f0] sm:$0xff]
        %v485 = vld [vmem:[%s184 + $0x5f8] sm:$0xff]
        %v486 = vld [vmem:[%s184 + $0x600] sm:$0xff]
        %v487 = vld [vmem:[%s184 + $0x608] sm:$0xff]
        %v488 = vld [vmem:[%s184 + $0x610] sm:$0xff]
        %v489 = vld [vmem:[%s184 + $0x618] sm:$0xff]
        %v490 = vld [vmem:[%s184 + $0x620] sm:$0xff]
        %v491 = vld [vmem:[%s184 + $0x628] sm:$0xff]
        %v492 = vld [vmem:[%s184 + $0x630] sm:$0xff]
        %v493 = vld [vmem:[%s184 + $0x638] sm:$0xff]
        %v494 = vld [vmem:[%s184 + $0x640] sm:$0xff]
        %v495 = vld [vmem:[%s184 + $0x648] sm:$0xff]
        %v496 = vld [vmem:[%s184 + $0x650] sm:$0xff]
        %v497 = vld [vmem:[%s184 + $0x658] sm:$0xff]
        %v498 = vld [vmem:[%s184 + $0x660] sm:$0xff]
        %v499 = vld [vmem:[%s184 + $0x668] sm:$0xff]
        %v500 = vld [vmem:[%s184 + $0x670] sm:$0xff]
        %v501 = vld [vmem:[%s184 + $0x678] sm:$0xff]
        %v502 = vld [vmem:[%s184 + $0x680] sm:$0xff]
        %v503 = vld [vmem:[%s184 + $0x688] sm:$0xff]
        %v504 = vld [vmem:[%s184 + $0x690] sm:$0xff]
        %v505 = vld [vmem:[%s184 + $0x698] sm:$0xff]
        %v506 = vld [vmem:[%s184 + $0x6a0] sm:$0xff]
        %v507 = vld [vmem:[%s184 + $0x6a8] sm:$0xff]
        %v508 = vld [vmem:[%s184 + $0x6b0] sm:$0xff]
        %v509 = vld [vmem:[%s184 + $0x6b8] sm:$0xff]
        %v510 = vld [vmem:[%s184 + $0x6c0] sm:$0xff]
        %v511 = vld [vmem:[%s184 + $0x6c8] sm:$0xff]
        %v512 = vld [vmem:[%s184 + $0x6d0] sm:$0xff]
        %v513 = vld [vmem:[%s184 + $0x6d8] sm:$0xff]
        %v514 = vld [vmem:[%s184 + $0x6e0] sm:$0xff]
        %v515 = vld [vmem:[%s184 + $0x6e8] sm:$0xff]
        %v516 = vld [vmem:[%s184 + $0x6f0] sm:$0xff]
        %v517 = vld [vmem:[%s184 + $0x6f8] sm:$0xff]
        %v518 = vld [vmem:[%s184 + $0x700] sm:$0xff]
        %v519 = vld [vmem:[%s184 + $0x708] sm:$0xff]
        %v520 = vld [vmem:[%s184 + $0x710] sm:$0xff]
        %v521 = vld [vmem:[%s184 + $0x718] sm:$0xff]
        %v522 = vld [vmem:[%s184 + $0x720] sm:$0xff]
        %v523 = vld [vmem:[%s184 + $0x728] sm:$0xff]
        %v524 = vld [vmem:[%s184 + $0x730] sm:$0xff]
        %v525 = vld [vmem:[%s184 + $0x738] sm:$0xff]
        %v526 = vld [vmem:[%s184 + $0x740] sm:$0xff]
        %v527 = vld [vmem:[%s184 + $0x748] sm:$0xff]
        %v528 = vld [vmem:[%s184 + $0x750] sm:$0xff]
        %v529 = vld [vmem:[%s184 + $0x758] sm:$0xff]
        %v530 = vld [vmem:[%s184 + $0x760] sm:$0xff]
        %v531 = vld [vmem:[%s184 + $0x768] sm:$0xff]
        %v532 = vld [vmem:[%s184 + $0x770] sm:$0xff]
        %v533 = vld [vmem:[%s184 + $0x778] sm:$0xff]
        %v534 = vld [vmem:[%s184 + $0x780] sm:$0xff]
        %v535 = vld [vmem:[%s184 + $0x788] sm:$0xff]
        %v536 = vld [vmem:[%s184 + $0x790] sm:$0xff]
        %v537 = vld [vmem:[%s184 + $0x798] sm:$0xff]
        %v538 = vld [vmem:[%s184 + $0x7a0] sm:$0xff]
        %v539 = vld [vmem:[%s184 + $0x7a8] sm:$0xff]
        %v540 = vld [vmem:[%s184 + $0x7b0] sm:$0xff]
        %v541 = vld [vmem:[%s184 + $0x7b8] sm:$0xff]
        %v542 = vld [vmem:[%s184 + $0x7c0] sm:$0xff]
        %v543 = vld [vmem:[%s184 + $0x7c8] sm:$0xff]
        %v544 = vld [vmem:[%s184 + $0x7d0] sm:$0xff]
        %v545 = vld [vmem:[%s184 + $0x7d8] sm:$0xff]
        %v546 = vld [vmem:[%s184 + $0x7e0] sm:$0xff]
        %v547 = vld [vmem:[%s184 + $0x7e8] sm:$0xff]
        %v548 = vld [vmem:[%s184 + $0x7f0] sm:$0xff]
        %v549 = vld [vmem:[%s184 + $0x7f8] sm:$0xff]
        %v550 = vld [vmem:[%s184 + $0x800] sm:$0xff]
        %v551 = vld [vmem:[%s184 + $0x808] sm:$0xff]
        %v552 = vld [vmem:[%s184 + $0x810] sm:$0xff]
        %v553 = vld [vmem:[%s184 + $0x818] sm:$0xff]
        %v554 = vld [vmem:[%s184 + $0x820] sm:$0xff]
        %v555 = vld [vmem:[%s184 + $0x828] sm:$0xff]
        %v556 = vld [vmem:[%s184 + $0x830] sm:$0xff]
        %v557 = vld [vmem:[%s184 + $0x838] sm:$0xff]
        %v558 = vld [vmem:[%s184 + $0x840] sm:$0xff]
        %v559 = vld [vmem:[%s184 + $0x848] sm:$0xff]
        %v560 = vld [vmem:[%s184 + $0x850] sm:$0xff]
        %v561 = vld [vmem:[%s184 + $0x858] sm:$0xff]
        %v562 = vld [vmem:[%s184 + $0x860] sm:$0xff]
        %v563 = vld [vmem:[%s184 + $0x868] sm:$0xff]
        %v564 = vld [vmem:[%s184 + $0x870] sm:$0xff]
        %v565 = vld [vmem:[%s184 + $0x878] sm:$0xff]
        %v566 = vld [vmem:[%s184 + $0x880] sm:$0xff]
        %v567 = vld [vmem:[%s184 + $0x888] sm:$0xff]
        %v568 = vld [vmem:[%s184 + $0x890] sm:$0xff]
        %v569 = vld [vmem:[%s184 + $0x898] sm:$0xff]
        %v570 = vld [vmem:[%s184 + $0x8a0] sm:$0xff]
        %v571 = vld [vmem:[%s184 + $0x8a8] sm:$0xff]
        %v572 = vld [vmem:[%s184 + $0x8b0] sm:$0xff]
        %v573 = vld [vmem:[%s184 + $0x8b8] sm:$0xff]
        %v574 = vld [vmem:[%s184 + $0x8c0] sm:$0xff]
        %v575 = vld [vmem:[%s184 + $0x8c8] sm:$0xff]
        %v576 = vld [vmem:[%s184 + $0x8d0] sm:$0xff]
        %v577 = vld [vmem:[%s184 + $0x8d8] sm:$0xff]
        %v578 = vld [vmem:[%s184 + $0x8e0] sm:$0xff]
        %v579 = vld [vmem:[%s184 + $0x8e8] sm:$0xff]
        %v580 = vld [vmem:[%s184 + $0x8f0] sm:$0xff]
        %v581 = vld [vmem:[%s184 + $0x8f8] sm:$0xff]
        %v582 = vld [vmem:[%s184 + $0x900] sm:$0xff]
        %v583 = vld [vmem:[%s184 + $0x908] sm:$0xff]
        %v584 = vld [vmem:[%s184 + $0x910] sm:$0xff]
        %v585 = vld [vmem:[%s184 + $0x918] sm:$0xff]
        %v586 = vld [vmem:[%s184 + $0x920] sm:$0xff]
        %v587 = vld [vmem:[%s184 + $0x928] sm:$0xff]
        %v588 = vld [vmem:[%s184 + $0x930] sm:$0xff]
        %v589 = vld [vmem:[%s184 + $0x938] sm:$0xff]
        %v590 = vld [vmem:[%s184 + $0x940] sm:$0xff]
        %v591 = vld [vmem:[%s184 + $0x948] sm:$0xff]
        %v592 = vld [vmem:[%s184 + $0x950] sm:$0xff]
        %v593 = vld [vmem:[%s184 + $0x958] sm:$0xff]
        %v594 = vld [vmem:[%s184 + $0x960] sm:$0xff]
        %v595 = vld [vmem:[%s184 + $0x968] sm:$0xff]
        %v596 = vld [vmem:[%s184 + $0x970] sm:$0xff]
        %v597 = vld [vmem:[%s184 + $0x978] sm:$0xff]
        %v598 = vld [vmem:[%s184 + $0x980] sm:$0xff]
        %v599 = vld [vmem:[%s184 + $0x988] sm:$0xff]
        %v600 = vld [vmem:[%s184 + $0x990] sm:$0xff]
        %v601 = vld [vmem:[%s184 + $0x998] sm:$0xff]
        %v602 = vld [vmem:[%s184 + $0x9a0] sm:$0xff]
        %v603 = vld [vmem:[%s184 + $0x9a8] sm:$0xff]
        %v604 = vld [vmem:[%s184 + $0x9b0] sm:$0xff]
        %v605 = vld [vmem:[%s184 + $0x9b8] sm:$0xff]
        %v606 = vld [vmem:[%s184 + $0x9c0] sm:$0xff]
        %v607 = vld [vmem:[%s184 + $0x9c8] sm:$0xff]
        %v608 = vld [vmem:[%s184 + $0x9d0] sm:$0xff]
        %v609 = vld [vmem:[%s184 + $0x9d8] sm:$0xff]
        %v610 = vld [vmem:[%s184 + $0x9e0] sm:$0xff]
        %v611 = vld [vmem:[%s184 + $0x9e8] sm:$0xff]
        %v612 = vld [vmem:[%s184 + $0x9f0] sm:$0xff]
        %v613 = vld [vmem:[%s184 + $0x9f8] sm:$0xff]
        %v614 = vld [vmem:[%s184 + $0xa00] sm:$0xff]
        %v615 = vld [vmem:[%s184 + $0xa08] sm:$0xff]
        %v616 = vld [vmem:[%s184 + $0xa10] sm:$0xff]
        %v617 = vld [vmem:[%s184 + $0xa18] sm:$0xff]
        %v618 = vld [vmem:[%s184 + $0xa20] sm:$0xff]
        %v619 = vld [vmem:[%s184 + $0xa28] sm:$0xff]
        %v620 = vld [vmem:[%s184 + $0xa30] sm:$0xff]
        %v621 = vld [vmem:[%s184 + $0xa38] sm:$0xff]
        %v622 = vld [vmem:[%s184 + $0xa40] sm:$0xff]
        %v623 = vld [vmem:[%s184 + $0xa48] sm:$0xff]
        %v624 = vld [vmem:[%s184 + $0xa50] sm:$0xff]
        %v625 = vld [vmem:[%s184 + $0xa58] sm:$0xff]
        %v626 = vld [vmem:[%s184 + $0xa60] sm:$0xff]
        %v627 = vld [vmem:[%s184 + $0xa68] sm:$0xff]
        %v628 = vld [vmem:[%s184 + $0xa70] sm:$0xff]
        %v629 = vld [vmem:[%s184 + $0xa78] sm:$0xff]
        %v630 = vld [vmem:[%s184 + $0xa80] sm:$0xff]
        %v631 = vld [vmem:[%s184 + $0xa88] sm:$0xff]
        %v632 = vld [vmem:[%s184 + $0xa90] sm:$0xff]
        %v633 = vld [vmem:[%s184 + $0xa98] sm:$0xff]
        %v634 = vld [vmem:[%s184 + $0xaa0] sm:$0xff]
        %v635 = vld [vmem:[%s184 + $0xaa8] sm:$0xff]
        %v636 = vld [vmem:[%s184 + $0xab0] sm:$0xff]
        %v637 = vld [vmem:[%s184 + $0xab8] sm:$0xff]
        %v638 = vld [vmem:[%s184 + $0xac0] sm:$0xff]
        %v639 = vld [vmem:[%s184 + $0xac8] sm:$0xff]
        %v640 = vld [vmem:[%s184 + $0xad0] sm:$0xff]
        %v641 = vld [vmem:[%s184 + $0xad8] sm:$0xff]
        %v642 = vld [vmem:[%s184 + $0xae0] sm:$0xff]
        %v643 = vld [vmem:[%s184 + $0xae8] sm:$0xff]
        %v644 = vld [vmem:[%s184 + $0xaf0] sm:$0xff]
        %v645 = vld [vmem:[%s184 + $0xaf8] sm:$0xff]
        %v646 = vld [vmem:[%s184 + $0xb00] sm:$0xff]
        %v647 = vld [vmem:[%s184 + $0xb08] sm:$0xff]
        %v648 = vld [vmem:[%s184 + $0xb10] sm:$0xff]
        %v649 = vld [vmem:[%s184 + $0xb18] sm:$0xff]
        %v650 = vld [vmem:[%s184 + $0xb20] sm:$0xff]
        %v651 = vld [vmem:[%s184 + $0xb28] sm:$0xff]
        %v652 = vld [vmem:[%s184 + $0xb30] sm:$0xff]
        %v653 = vld [vmem:[%s184 + $0xb38] sm:$0xff]
        %v654 = vld [vmem:[%s184 + $0xb40] sm:$0xff]
        %v655 = vld [vmem:[%s184 + $0xb48] sm:$0xff]
        %v656 = vld [vmem:[%s184 + $0xb50] sm:$0xff]
        %v657 = vld [vmem:[%s184 + $0xb58] sm:$0xff]
        %v658 = vld [vmem:[%s184 + $0xb60] sm:$0xff]
        %v659 = vld [vmem:[%s184 + $0xb68] sm:$0xff]
        %v660 = vld [vmem:[%s184 + $0xb70] sm:$0xff]
        %v661 = vld [vmem:[%s184 + $0xb78] sm:$0xff]
        %v662 = vld [vmem:[%s184 + $0xb80] sm:$0xff]
        %v663 = vld [vmem:[%s184 + $0xb88] sm:$0xff]
        %v664 = vld [vmem:[%s184 + $0xb90] sm:$0xff]
        %v665 = vld [vmem:[%s184 + $0xb98] sm:$0xff]
        %v666 = vld [vmem:[%s184 + $0xba0] sm:$0xff]
        %v667 = vld [vmem:[%s184 + $0xba8] sm:$0xff]
        %v668 = vld [vmem:[%s184 + $0xbb0] sm:$0xff]
        %v669 = vld [vmem:[%s184 + $0xbb8] sm:$0xff]
        %v670 = vld [vmem:[%s184 + $0xbc0] sm:$0xff]
        %v671 = vld [vmem:[%s184 + $0xbc8] sm:$0xff]
        %v672 = vld [vmem:[%s184 + $0xbd0] sm:$0xff]
        %v673 = vld [vmem:[%s184 + $0xbd8] sm:$0xff]
        %v674 = vld [vmem:[%s184 + $0xbe0] sm:$0xff]
        %v675 = vld [vmem:[%s184 + $0xbe8] sm:$0xff]
        %v676 = vld [vmem:[%s184 + $0xbf0] sm:$0xff]
        %v677 = vld [vmem:[%s184 + $0xbf8] sm:$0xff]
        %v678 = vld [vmem:[%s184 + $0xc00] sm:$0xff]
        %v679 = vld [vmem:[%s184 + $0xc08] sm:$0xff]
        %v680 = vld [vmem:[%s184 + $0xc10] sm:$0xff]
        %v681 = vld [vmem:[%s184 + $0xc18] sm:$0xff]
        %v682 = vld [vmem:[%s184 + $0xc20] sm:$0xff]
        %v683 = vld [vmem:[%s184 + $0xc28] sm:$0xff]
        %v684 = vld [vmem:[%s184 + $0xc30] sm:$0xff]
        %v685 = vld [vmem:[%s184 + $0xc38] sm:$0xff]
        %v686 = vld [vmem:[%s184 + $0xc40] sm:$0xff]
        %v687 = vld [vmem:[%s184 + $0xc48] sm:$0xff]
        %v688 = vld [vmem:[%s184 + $0xc50] sm:$0xff]
        %v689 = vld [vmem:[%s184 + $0xc58] sm:$0xff]
        %v690 = vld [vmem:[%s184 + $0xc60] sm:$0xff]
        %v691 = vld [vmem:[%s184 + $0xc68] sm:$0xff]
        %v692 = vld [vmem:[%s184 + $0xc70] sm:$0xff]
        %v693 = vld [vmem:[%s184 + $0xc78] sm:$0xff]
        %v694 = vld [vmem:[%s184 + $0xc80] sm:$0xff]
        %v695 = vld [vmem:[%s184 + $0xc88] sm:$0xff]
        %v696 = vld [vmem:[%s184 + $0xc90] sm:$0xff]
        %v697 = vld [vmem:[%s184 + $0xc98] sm:$0xff]
        %v698 = vld [vmem:[%s184 + $0xca0] sm:$0xff]
        %v699 = vld [vmem:[%s184 + $0xca8] sm:$0xff]
        %v700 = vld [vmem:[%s184 + $0xcb0] sm:$0xff]
        %v701 = vld [vmem:[%s184 + $0xcb8] sm:$0xff]
        %v702 = vld [vmem:[%s184 + $0xcc0] sm:$0xff]
        %v703 = vld [vmem:[%s184 + $0xcc8] sm:$0xff]
        %v704 = vld [vmem:[%s184 + $0xcd0] sm:$0xff]
        %v705 = vld [vmem:[%s184 + $0xcd8] sm:$0xff]
        %v706 = vld [vmem:[%s184 + $0xce0] sm:$0xff]
        %v707 = vld [vmem:[%s184 + $0xce8] sm:$0xff]
        %v708 = vld [vmem:[%s184 + $0xcf0] sm:$0xff]
        %v709 = vld [vmem:[%s184 + $0xcf8] sm:$0xff]
        %v710 = vld [vmem:[%s184 + $0xd00] sm:$0xff]
        %v711 = vld [vmem:[%s184 + $0xd08] sm:$0xff]
        %v712 = vld [vmem:[%s184 + $0xd10] sm:$0xff]
        %v713 = vld [vmem:[%s184 + $0xd18] sm:$0xff]
        %v714 = vld [vmem:[%s184 + $0xd20] sm:$0xff]
        %v715 = vld [vmem:[%s184 + $0xd28] sm:$0xff]
        %v716 = vld [vmem:[%s184 + $0xd30] sm:$0xff]
        %v717 = vld [vmem:[%s184 + $0xd38] sm:$0xff]
        %v718 = vld [vmem:[%s184 + $0xd40] sm:$0xff]
        %v719 = vld [vmem:[%s184 + $0xd48] sm:$0xff]
        %v720 = vld [vmem:[%s184 + $0xd50] sm:$0xff]
        %v721 = vld [vmem:[%s184 + $0xd58] sm:$0xff]
        %v722 = vld [vmem:[%s184 + $0xd60] sm:$0xff]
        %v723 = vld [vmem:[%s184 + $0xd68] sm:$0xff]
        %v724 = vld [vmem:[%s184 + $0xd70] sm:$0xff]
        %v725 = vld [vmem:[%s184 + $0xd78] sm:$0xff]
        %v726 = vld [vmem:[%s184 + $0xd80] sm:$0xff]
        %v727 = vld [vmem:[%s184 + $0xd88] sm:$0xff]
        %v728 = vld [vmem:[%s184 + $0xd90] sm:$0xff]
        %v729 = vld [vmem:[%s184 + $0xd98] sm:$0xff]
        %v730 = vld [vmem:[%s184 + $0xda0] sm:$0xff]
        %v731 = vld [vmem:[%s184 + $0xda8] sm:$0xff]
        %v732 = vld [vmem:[%s184 + $0xdb0] sm:$0xff]
        %v733 = vld [vmem:[%s184 + $0xdb8] sm:$0xff]
        %v734 = vld [vmem:[%s184 + $0xdc0] sm:$0xff]
        %v735 = vld [vmem:[%s184 + $0xdc8] sm:$0xff]
        %v736 = vld [vmem:[%s184 + $0xdd0] sm:$0xff]
        %v737 = vld [vmem:[%s184 + $0xdd8] sm:$0xff]
        %v738 = vld [vmem:[%s184 + $0xde0] sm:$0xff]
        %v739 = vld [vmem:[%s184 + $0xde8] sm:$0xff]
        %v740 = vld [vmem:[%s184 + $0xdf0] sm:$0xff]
        %v741 = vld [vmem:[%s184 + $0xdf8] sm:$0xff]
        %v742 = vld [vmem:[%s184 + $0xe00] sm:$0xff]
        %v743 = vld [vmem:[%s184 + $0xe08] sm:$0xff]
        %v744 = vld [vmem:[%s184 + $0xe10] sm:$0xff]
        %v745 = vld [vmem:[%s184 + $0xe18] sm:$0xff]
        %v746 = vld [vmem:[%s184 + $0xe20] sm:$0xff]
        %v747 = vld [vmem:[%s184 + $0xe28] sm:$0xff]
        %v748 = vld [vmem:[%s184 + $0xe30] sm:$0xff]
        %v749 = vld [vmem:[%s184 + $0xe38] sm:$0xff]
        %v750 = vld [vmem:[%s184 + $0xe40] sm:$0xff]
        %v751 = vld [vmem:[%s184 + $0xe48] sm:$0xff]
        %v752 = vld [vmem:[%s184 + $0xe50] sm:$0xff]
        %v753 = vld [vmem:[%s184 + $0xe58] sm:$0xff]
        %v754 = vld [vmem:[%s184 + $0xe60] sm:$0xff]
        %v755 = vld [vmem:[%s184 + $0xe68] sm:$0xff]
        %v756 = vld [vmem:[%s184 + $0xe70] sm:$0xff]
        %v757 = vld [vmem:[%s184 + $0xe78] sm:$0xff]
        %v758 = vld [vmem:[%s184 + $0xe80] sm:$0xff]
        %v759 = vld [vmem:[%s184 + $0xe88] sm:$0xff]
        %v760 = vld [vmem:[%s184 + $0xe90] sm:$0xff]
        %v761 = vld [vmem:[%s184 + $0xe98] sm:$0xff]
        %v762 = vld [vmem:[%s184 + $0xea0] sm:$0xff]
        %v763 = vld [vmem:[%s184 + $0xea8] sm:$0xff]
        %v764 = vld [vmem:[%s184 + $0xeb0] sm:$0xff]
        %v765 = vld [vmem:[%s184 + $0xeb8] sm:$0xff]
        %v766 = vld [vmem:[%s184 + $0xec0] sm:$0xff]
        %v767 = vld [vmem:[%s184 + $0xec8] sm:$0xff]
        %v768 = vld [vmem:[%s184 + $0xed0] sm:$0xff]
        %v769 = vld [vmem:[%s184 + $0xed8] sm:$0xff]
        %v770 = vld [vmem:[%s184 + $0xee0] sm:$0xff]
        %v771 = vld [vmem:[%s184 + $0xee8] sm:$0xff]
        %v772 = vld [vmem:[%s184 + $0xef0] sm:$0xff]
        %v773 = vld [vmem:[%s184 + $0xef8] sm:$0xff]
        %v774 = vld [vmem:[%s184 + $0xf00] sm:$0xff]
        %v775 = vld [vmem:[%s184 + $0xf08] sm:$0xff]
        %v776 = vld [vmem:[%s184 + $0xf10] sm:$0xff]
        %v777 = vld [vmem:[%s184 + $0xf18] sm:$0xff]
        %v778 = vld [vmem:[%s184 + $0xf20] sm:$0xff]
        %v779 = vld [vmem:[%s184 + $0xf28] sm:$0xff]
        %v780 = vld [vmem:[%s184 + $0xf30] sm:$0xff]
        %v781 = vld [vmem:[%s184 + $0xf38] sm:$0xff]
        %v782 = vld [vmem:[%s184 + $0xf40] sm:$0xff]
        %v783 = vld [vmem:[%s184 + $0xf48] sm:$0xff]
        %v784 = vld [vmem:[%s184 + $0xf50] sm:$0xff]
        %v785 = vld [vmem:[%s184 + $0xf58] sm:$0xff]
        %v786 = vld [vmem:[%s184 + $0xf60] sm:$0xff]
        %v787 = vld [vmem:[%s184 + $0xf68] sm:$0xff]
        %v788 = vld [vmem:[%s184 + $0xf70] sm:$0xff]
        %v789 = vld [vmem:[%s184 + $0xf78] sm:$0xff]
        %v790 = vld [vmem:[%s184 + $0xf80] sm:$0xff]
        %v791 = vld [vmem:[%s184 + $0xf88] sm:$0xff]
        %v792 = vld [vmem:[%s184 + $0xf90] sm:$0xff]
        %v793 = vld [vmem:[%s184 + $0xf98] sm:$0xff]
        %v794 = vld [vmem:[%s184 + $0xfa0] sm:$0xff]
        %v795 = vld [vmem:[%s184 + $0xfa8] sm:$0xff]
        %v796 = vld [vmem:[%s184 + $0xfb0] sm:$0xff]
        %v797 = vld [vmem:[%s184 + $0xfb8] sm:$0xff]
        %v798 = vld [vmem:[%s184 + $0xfc0] sm:$0xff]
        %v799 = vld [vmem:[%s184 + $0xfc8] sm:$0xff]
        %v800 = vld [vmem:[%s184 + $0xfd0] sm:$0xff]
        %v801 = vld [vmem:[%s184 + $0xfd8] sm:$0xff]
        %v802 = vld [vmem:[%s184 + $0xfe0] sm:$0xff]
        %v803 = vld [vmem:[%s184 + $0xfe8] sm:$0xff]
        %v804 = vld [vmem:[%s184 + $0xff0] sm:$0xff]
        %v805 = vld [vmem:[%s184 + $0xff8] sm:$0xff]
        %v806 = vld [vmem:[%s194] sm:$0xff]
        %v807 = vld [vmem:[%s194 + $0x8] sm:$0xff]
        %v808 = vld [vmem:[%s194 + $0x10] sm:$0xff]
        %v809 = vld [vmem:[%s194 + $0x18] sm:$0xff]
        %v810 = vld [vmem:[%s194 + $0x20] sm:$0xff]
        %v811 = vld [vmem:[%s194 + $0x28] sm:$0xff]
        %v812 = vld [vmem:[%s194 + $0x30] sm:$0xff]
        %v813 = vld [vmem:[%s194 + $0x38] sm:$0xff]
        %v814 = vld [vmem:[%s194 + $0x40] sm:$0xff]
        %v815 = vld [vmem:[%s194 + $0x48] sm:$0xff]
        %v816 = vld [vmem:[%s194 + $0x50] sm:$0xff]
        %v817 = vld [vmem:[%s194 + $0x58] sm:$0xff]
        %v818 = vld [vmem:[%s194 + $0x60] sm:$0xff]
        %v819 = vld [vmem:[%s194 + $0x68] sm:$0xff]
        %v820 = vld [vmem:[%s194 + $0x70] sm:$0xff]
        %v821 = vld [vmem:[%s194 + $0x78] sm:$0xff]
        %v822 = vld [vmem:[%s194 + $0x80] sm:$0xff]
        %v823 = vld [vmem:[%s194 + $0x88] sm:$0xff]
        %v824 = vld [vmem:[%s194 + $0x90] sm:$0xff]
        %v825 = vld [vmem:[%s194 + $0x98] sm:$0xff]
        %v826 = vld [vmem:[%s194 + $0xa0] sm:$0xff]
        %v827 = vld [vmem:[%s194 + $0xa8] sm:$0xff]
        %v828 = vld [vmem:[%s194 + $0xb0] sm:$0xff]
        %v829 = vld [vmem:[%s194 + $0xb8] sm:$0xff]
        %v830 = vld [vmem:[%s194 + $0xc0] sm:$0xff]
        %v831 = vld [vmem:[%s194 + $0xc8] sm:$0xff]
        %v832 = vld [vmem:[%s194 + $0xd0] sm:$0xff]
        %v833 = vld [vmem:[%s194 + $0xd8] sm:$0xff]
        %v834 = vld [vmem:[%s194 + $0xe0] sm:$0xff]
        %v835 = vld [vmem:[%s194 + $0xe8] sm:$0xff]
        %v836 = vld [vmem:[%s194 + $0xf0] sm:$0xff]
        %v837 = vld [vmem:[%s194 + $0xf8] sm:$0xff]
        %v838 = vld [vmem:[%s194 + $0x100] sm:$0xff]
        %v839 = vld [vmem:[%s194 + $0x108] sm:$0xff]
        %v840 = vld [vmem:[%s194 + $0x110] sm:$0xff]
        %v841 = vld [vmem:[%s194 + $0x118] sm:$0xff]
        %v842 = vld [vmem:[%s194 + $0x120] sm:$0xff]
        %v843 = vld [vmem:[%s194 + $0x128] sm:$0xff]
        %v844 = vld [vmem:[%s194 + $0x130] sm:$0xff]
        %v845 = vld [vmem:[%s194 + $0x138] sm:$0xff]
        %v846 = vld [vmem:[%s194 + $0x140] sm:$0xff]
        %v847 = vld [vmem:[%s194 + $0x148] sm:$0xff]
        %v848 = vld [vmem:[%s194 + $0x150] sm:$0xff]
        %v849 = vld [vmem:[%s194 + $0x158] sm:$0xff]
        %v850 = vld [vmem:[%s194 + $0x160] sm:$0xff]
        %v851 = vld [vmem:[%s194 + $0x168] sm:$0xff]
        %v852 = vld [vmem:[%s194 + $0x170] sm:$0xff]
        %v853 = vld [vmem:[%s194 + $0x178] sm:$0xff]
        %v854 = vld [vmem:[%s194 + $0x180] sm:$0xff]
        %v855 = vld [vmem:[%s194 + $0x188] sm:$0xff]
        %v856 = vld [vmem:[%s194 + $0x190] sm:$0xff]
        %v857 = vld [vmem:[%s194 + $0x198] sm:$0xff]
        %v858 = vld [vmem:[%s194 + $0x1a0] sm:$0xff]
        %v859 = vld [vmem:[%s194 + $0x1a8] sm:$0xff]
        %v860 = vld [vmem:[%s194 + $0x1b0] sm:$0xff]
        %v861 = vld [vmem:[%s194 + $0x1b8] sm:$0xff]
        %v862 = vld [vmem:[%s194 + $0x1c0] sm:$0xff]
        %v863 = vld [vmem:[%s194 + $0x1c8] sm:$0xff]
        %v864 = vld [vmem:[%s194 + $0x1d0] sm:$0xff]
        %v865 = vld [vmem:[%s194 + $0x1d8] sm:$0xff]
        %v866 = vld [vmem:[%s194 + $0x1e0] sm:$0xff]
        %v867 = vld [vmem:[%s194 + $0x1e8] sm:$0xff]
        %v868 = vld [vmem:[%s194 + $0x1f0] sm:$0xff]
        %v869 = vld [vmem:[%s194 + $0x1f8] sm:$0xff]
        %v870 = vld [vmem:[%s194 + $0x200] sm:$0xff]
        %v871 = vld [vmem:[%s194 + $0x208] sm:$0xff]
        %v872 = vld [vmem:[%s194 + $0x210] sm:$0xff]
        %v873 = vld [vmem:[%s194 + $0x218] sm:$0xff]
        %v874 = vld [vmem:[%s194 + $0x220] sm:$0xff]
        %v875 = vld [vmem:[%s194 + $0x228] sm:$0xff]
        %v876 = vld [vmem:[%s194 + $0x230] sm:$0xff]
        %v877 = vld [vmem:[%s194 + $0x238] sm:$0xff]
        %v878 = vld [vmem:[%s194 + $0x240] sm:$0xff]
        %v879 = vld [vmem:[%s194 + $0x248] sm:$0xff]
        %v880 = vld [vmem:[%s194 + $0x250] sm:$0xff]
        %v881 = vld [vmem:[%s194 + $0x258] sm:$0xff]
        %v882 = vld [vmem:[%s194 + $0x260] sm:$0xff]
        %v883 = vld [vmem:[%s194 + $0x268] sm:$0xff]
        %v884 = vld [vmem:[%s194 + $0x270] sm:$0xff]
        %v885 = vld [vmem:[%s194 + $0x278] sm:$0xff]
        %v886 = vld [vmem:[%s194 + $0x280] sm:$0xff]
        %v887 = vld [vmem:[%s194 + $0x288] sm:$0xff]
        %v888 = vld [vmem:[%s194 + $0x290] sm:$0xff]
        %v889 = vld [vmem:[%s194 + $0x298] sm:$0xff]
        %v890 = vld [vmem:[%s194 + $0x2a0] sm:$0xff]
        %v891 = vld [vmem:[%s194 + $0x2a8] sm:$0xff]
        %v892 = vld [vmem:[%s194 + $0x2b0] sm:$0xff]
        %v893 = vld [vmem:[%s194 + $0x2b8] sm:$0xff]
        %v894 = vld [vmem:[%s194 + $0x2c0] sm:$0xff]
        %v895 = vld [vmem:[%s194 + $0x2c8] sm:$0xff]
        %v896 = vld [vmem:[%s194 + $0x2d0] sm:$0xff]
        %v897 = vld [vmem:[%s194 + $0x2d8] sm:$0xff]
        %v898 = vld [vmem:[%s194 + $0x2e0] sm:$0xff]
        %v899 = vld [vmem:[%s194 + $0x2e8] sm:$0xff]
        %v900 = vld [vmem:[%s194 + $0x2f0] sm:$0xff]
        %v901 = vld [vmem:[%s194 + $0x2f8] sm:$0xff]
        %v902 = vld [vmem:[%s194 + $0x300] sm:$0xff]
        %v903 = vld [vmem:[%s194 + $0x308] sm:$0xff]
        %v904 = vld [vmem:[%s194 + $0x310] sm:$0xff]
        %v905 = vld [vmem:[%s194 + $0x318] sm:$0xff]
        %v906 = vld [vmem:[%s194 + $0x320] sm:$0xff]
        %v907 = vld [vmem:[%s194 + $0x328] sm:$0xff]
        %v908 = vld [vmem:[%s194 + $0x330] sm:$0xff]
        %v909 = vld [vmem:[%s194 + $0x338] sm:$0xff]
        %v910 = vld [vmem:[%s194 + $0x340] sm:$0xff]
        %v911 = vld [vmem:[%s194 + $0x348] sm:$0xff]
        %v912 = vld [vmem:[%s194 + $0x350] sm:$0xff]
        %v913 = vld [vmem:[%s194 + $0x358] sm:$0xff]
        %v914 = vld [vmem:[%s194 + $0x360] sm:$0xff]
        %v915 = vld [vmem:[%s194 + $0x368] sm:$0xff]
        %v916 = vld [vmem:[%s194 + $0x370] sm:$0xff]
        %v917 = vld [vmem:[%s194 + $0x378] sm:$0xff]
        %v918 = vld [vmem:[%s194 + $0x380] sm:$0xff]
        %v919 = vld [vmem:[%s194 + $0x388] sm:$0xff]
        %v920 = vld [vmem:[%s194 + $0x390] sm:$0xff]
        %v921 = vld [vmem:[%s194 + $0x398] sm:$0xff]
        %v922 = vld [vmem:[%s194 + $0x3a0] sm:$0xff]
        %v923 = vld [vmem:[%s194 + $0x3a8] sm:$0xff]
        %v924 = vld [vmem:[%s194 + $0x3b0] sm:$0xff]
        %v925 = vld [vmem:[%s194 + $0x3b8] sm:$0xff]
        %v926 = vld [vmem:[%s194 + $0x3c0] sm:$0xff]
        %v927 = vld [vmem:[%s194 + $0x3c8] sm:$0xff]
        %v928 = vld [vmem:[%s194 + $0x3d0] sm:$0xff]
        %v929 = vld [vmem:[%s194 + $0x3d8] sm:$0xff]
        %v930 = vld [vmem:[%s194 + $0x3e0] sm:$0xff]
        %v931 = vld [vmem:[%s194 + $0x3e8] sm:$0xff]
        %v932 = vld [vmem:[%s194 + $0x3f0] sm:$0xff]
        %v933 = vld [vmem:[%s194 + $0x3f8] sm:$0xff]
        %v934 = vld [vmem:[%s194 + $0x400] sm:$0xff]
        %v935 = vld [vmem:[%s194 + $0x408] sm:$0xff]
        %v936 = vld [vmem:[%s194 + $0x410] sm:$0xff]
        %v937 = vld [vmem:[%s194 + $0x418] sm:$0xff]
        %v938 = vld [vmem:[%s194 + $0x420] sm:$0xff]
        %v939 = vld [vmem:[%s194 + $0x428] sm:$0xff]
        %v940 = vld [vmem:[%s194 + $0x430] sm:$0xff]
        %v941 = vld [vmem:[%s194 + $0x438] sm:$0xff]
        %v942 = vld [vmem:[%s194 + $0x440] sm:$0xff]
        %v943 = vld [vmem:[%s194 + $0x448] sm:$0xff]
        %v944 = vld [vmem:[%s194 + $0x450] sm:$0xff]
        %v945 = vld [vmem:[%s194 + $0x458] sm:$0xff]
        %v946 = vld [vmem:[%s194 + $0x460] sm:$0xff]
        %v947 = vld [vmem:[%s194 + $0x468] sm:$0xff]
        %v948 = vld [vmem:[%s194 + $0x470] sm:$0xff]
        %v949 = vld [vmem:[%s194 + $0x478] sm:$0xff]
        %v950 = vld [vmem:[%s194 + $0x480] sm:$0xff]
        %v951 = vld [vmem:[%s194 + $0x488] sm:$0xff]
        %v952 = vld [vmem:[%s194 + $0x490] sm:$0xff]
        %v953 = vld [vmem:[%s194 + $0x498] sm:$0xff]
        %v954 = vld [vmem:[%s194 + $0x4a0] sm:$0xff]
        %v955 = vld [vmem:[%s194 + $0x4a8] sm:$0xff]
        %v956 = vld [vmem:[%s194 + $0x4b0] sm:$0xff]
        %v957 = vld [vmem:[%s194 + $0x4b8] sm:$0xff]
        %v958 = vld [vmem:[%s194 + $0x4c0] sm:$0xff]
        %v959 = vld [vmem:[%s194 + $0x4c8] sm:$0xff]
        %v960 = vld [vmem:[%s194 + $0x4d0] sm:$0xff]
        %v961 = vld [vmem:[%s194 + $0x4d8] sm:$0xff]
        %v962 = vld [vmem:[%s194 + $0x4e0] sm:$0xff]
        %v963 = vld [vmem:[%s194 + $0x4e8] sm:$0xff]
        %v964 = vld [vmem:[%s194 + $0x4f0] sm:$0xff]
        %v965 = vld [vmem:[%s194 + $0x4f8] sm:$0xff]
        %v966 = vld [vmem:[%s194 + $0x500] sm:$0xff]
        %v967 = vld [vmem:[%s194 + $0x508] sm:$0xff]
        %v968 = vld [vmem:[%s194 + $0x510] sm:$0xff]
        %v969 = vld [vmem:[%s194 + $0x518] sm:$0xff]
        %v970 = vld [vmem:[%s194 + $0x520] sm:$0xff]
        %v971 = vld [vmem:[%s194 + $0x528] sm:$0xff]
        %v972 = vld [vmem:[%s194 + $0x530] sm:$0xff]
        %v973 = vld [vmem:[%s194 + $0x538] sm:$0xff]
        %v974 = vld [vmem:[%s194 + $0x540] sm:$0xff]
        %v975 = vld [vmem:[%s194 + $0x548] sm:$0xff]
        %v976 = vld [vmem:[%s194 + $0x550] sm:$0xff]
        %v977 = vld [vmem:[%s194 + $0x558] sm:$0xff]
        %v978 = vld [vmem:[%s194 + $0x560] sm:$0xff]
        %v979 = vld [vmem:[%s194 + $0x568] sm:$0xff]
        %v980 = vld [vmem:[%s194 + $0x570] sm:$0xff]
        %v981 = vld [vmem:[%s194 + $0x578] sm:$0xff]
        %v982 = vld [vmem:[%s194 + $0x580] sm:$0xff]
        %v983 = vld [vmem:[%s194 + $0x588] sm:$0xff]
        %v984 = vld [vmem:[%s194 + $0x590] sm:$0xff]
        %v985 = vld [vmem:[%s194 + $0x598] sm:$0xff]
        %v986 = vld [vmem:[%s194 + $0x5a0] sm:$0xff]
        %v987 = vld [vmem:[%s194 + $0x5a8] sm:$0xff]
        %v988 = vld [vmem:[%s194 + $0x5b0] sm:$0xff]
        %v989 = vld [vmem:[%s194 + $0x5b8] sm:$0xff]
        %v990 = vld [vmem:[%s194 + $0x5c0] sm:$0xff]
        %v991 = vld [vmem:[%s194 + $0x5c8] sm:$0xff]
        %v992 = vld [vmem:[%s194 + $0x5d0] sm:$0xff]
        %v993 = vld [vmem:[%s194 + $0x5d8] sm:$0xff]
        %v994 = vld [vmem:[%s194 + $0x5e0] sm:$0xff]
        %v995 = vld [vmem:[%s194 + $0x5e8] sm:$0xff]
        %v996 = vld [vmem:[%s194 + $0x5f0] sm:$0xff]
        %v997 = vld [vmem:[%s194 + $0x5f8] sm:$0xff]
        %v998 = vld [vmem:[%s194 + $0x600] sm:$0xff]
        %v999 = vld [vmem:[%s194 + $0x608] sm:$0xff]
        %v1000 = vld [vmem:[%s194 + $0x610] sm:$0xff]
        %v1001 = vld [vmem:[%s194 + $0x618] sm:$0xff]
        %v1002 = vld [vmem:[%s194 + $0x620] sm:$0xff]
        %v1003 = vld [vmem:[%s194 + $0x628] sm:$0xff]
        %v1004 = vld [vmem:[%s194 + $0x630] sm:$0xff]
        %v1005 = vld [vmem:[%s194 + $0x638] sm:$0xff]
        %v1006 = vld [vmem:[%s194 + $0x640] sm:$0xff]
        %v1007 = vld [vmem:[%s194 + $0x648] sm:$0xff]
        %v1008 = vld [vmem:[%s194 + $0x650] sm:$0xff]
        %v1009 = vld [vmem:[%s194 + $0x658] sm:$0xff]
        %v1010 = vld [vmem:[%s194 + $0x660] sm:$0xff]
        %v1011 = vld [vmem:[%s194 + $0x668] sm:$0xff]
        %v1012 = vld [vmem:[%s194 + $0x670] sm:$0xff]
        %v1013 = vld [vmem:[%s194 + $0x678] sm:$0xff]
        %v1014 = vld [vmem:[%s194 + $0x680] sm:$0xff]
        %v1015 = vld [vmem:[%s194 + $0x688] sm:$0xff]
        %v1016 = vld [vmem:[%s194 + $0x690] sm:$0xff]
        %v1017 = vld [vmem:[%s194 + $0x698] sm:$0xff]
        %v1018 = vld [vmem:[%s194 + $0x6a0] sm:$0xff]
        %v1019 = vld [vmem:[%s194 + $0x6a8] sm:$0xff]
        %v1020 = vld [vmem:[%s194 + $0x6b0] sm:$0xff]
        %v1021 = vld [vmem:[%s194 + $0x6b8] sm:$0xff]
        %v1022 = vld [vmem:[%s194 + $0x6c0] sm:$0xff]
        %v1023 = vld [vmem:[%s194 + $0x6c8] sm:$0xff]
        %v1024 = vld [vmem:[%s194 + $0x6d0] sm:$0xff]
        %v1025 = vld [vmem:[%s194 + $0x6d8] sm:$0xff]
        %v1026 = vld [vmem:[%s194 + $0x6e0] sm:$0xff]
        %v1027 = vld [vmem:[%s194 + $0x6e8] sm:$0xff]
        %v1028 = vld [vmem:[%s194 + $0x6f0] sm:$0xff]
        %v1029 = vld [vmem:[%s194 + $0x6f8] sm:$0xff]
        %v1030 = vld [vmem:[%s194 + $0x700] sm:$0xff]
        %v1031 = vld [vmem:[%s194 + $0x708] sm:$0xff]
        %v1032 = vld [vmem:[%s194 + $0x710] sm:$0xff]
        %v1033 = vld [vmem:[%s194 + $0x718] sm:$0xff]
        %v1034 = vld [vmem:[%s194 + $0x720] sm:$0xff]
        %v1035 = vld [vmem:[%s194 + $0x728] sm:$0xff]
        %v1036 = vld [vmem:[%s194 + $0x730] sm:$0xff]
        %v1037 = vld [vmem:[%s194 + $0x738] sm:$0xff]
        %v1038 = vld [vmem:[%s194 + $0x740] sm:$0xff]
        %v1039 = vld [vmem:[%s194 + $0x748] sm:$0xff]
        %v1040 = vld [vmem:[%s194 + $0x750] sm:$0xff]
        %v1041 = vld [vmem:[%s194 + $0x758] sm:$0xff]
        %v1042 = vld [vmem:[%s194 + $0x760] sm:$0xff]
        %v1043 = vld [vmem:[%s194 + $0x768] sm:$0xff]
        %v1044 = vld [vmem:[%s194 + $0x770] sm:$0xff]
        %v1045 = vld [vmem:[%s194 + $0x778] sm:$0xff]
        %v1046 = vld [vmem:[%s194 + $0x780] sm:$0xff]
        %v1047 = vld [vmem:[%s194 + $0x788] sm:$0xff]
        %v1048 = vld [vmem:[%s194 + $0x790] sm:$0xff]
        %v1049 = vld [vmem:[%s194 + $0x798] sm:$0xff]
        %v1050 = vld [vmem:[%s194 + $0x7a0] sm:$0xff]
        %v1051 = vld [vmem:[%s194 + $0x7a8] sm:$0xff]
        %v1052 = vld [vmem:[%s194 + $0x7b0] sm:$0xff]
        %v1053 = vld [vmem:[%s194 + $0x7b8] sm:$0xff]
        %v1054 = vld [vmem:[%s194 + $0x7c0] sm:$0xff]
        %v1055 = vld [vmem:[%s194 + $0x7c8] sm:$0xff]
        %v1056 = vld [vmem:[%s194 + $0x7d0] sm:$0xff]
        %v1057 = vld [vmem:[%s194 + $0x7d8] sm:$0xff]
        %v1058 = vld [vmem:[%s194 + $0x7e0] sm:$0xff]
        %v1059 = vld [vmem:[%s194 + $0x7e8] sm:$0xff]
        %v1060 = vld [vmem:[%s194 + $0x7f0] sm:$0xff]
        %v1061 = vld [vmem:[%s194 + $0x7f8] sm:$0xff]
        %v1062 = vld [vmem:[%s194 + $0x800] sm:$0xff]
        %v1063 = vld [vmem:[%s194 + $0x808] sm:$0xff]
        %v1064 = vld [vmem:[%s194 + $0x810] sm:$0xff]
        %v1065 = vld [vmem:[%s194 + $0x818] sm:$0xff]
        %v1066 = vld [vmem:[%s194 + $0x820] sm:$0xff]
        %v1067 = vld [vmem:[%s194 + $0x828] sm:$0xff]
        %v1068 = vld [vmem:[%s194 + $0x830] sm:$0xff]
        %v1069 = vld [vmem:[%s194 + $0x838] sm:$0xff]
        %v1070 = vld [vmem:[%s194 + $0x840] sm:$0xff]
        %v1071 = vld [vmem:[%s194 + $0x848] sm:$0xff]
        %v1072 = vld [vmem:[%s194 + $0x850] sm:$0xff]
        %v1073 = vld [vmem:[%s194 + $0x858] sm:$0xff]
        %v1074 = vld [vmem:[%s194 + $0x860] sm:$0xff]
        %v1075 = vld [vmem:[%s194 + $0x868] sm:$0xff]
        %v1076 = vld [vmem:[%s194 + $0x870] sm:$0xff]
        %v1077 = vld [vmem:[%s194 + $0x878] sm:$0xff]
        %v1078 = vld [vmem:[%s194 + $0x880] sm:$0xff]
        %v1079 = vld [vmem:[%s194 + $0x888] sm:$0xff]
        %v1080 = vld [vmem:[%s194 + $0x890] sm:$0xff]
        %v1081 = vld [vmem:[%s194 + $0x898] sm:$0xff]
        %v1082 = vld [vmem:[%s194 + $0x8a0] sm:$0xff]
        %v1083 = vld [vmem:[%s194 + $0x8a8] sm:$0xff]
        %v1084 = vld [vmem:[%s194 + $0x8b0] sm:$0xff]
        %v1085 = vld [vmem:[%s194 + $0x8b8] sm:$0xff]
        %v1086 = vld [vmem:[%s194 + $0x8c0] sm:$0xff]
        %v1087 = vld [vmem:[%s194 + $0x8c8] sm:$0xff]
        %v1088 = vld [vmem:[%s194 + $0x8d0] sm:$0xff]
        %v1089 = vld [vmem:[%s194 + $0x8d8] sm:$0xff]
        %v1090 = vld [vmem:[%s194 + $0x8e0] sm:$0xff]
        %v1091 = vld [vmem:[%s194 + $0x8e8] sm:$0xff]
        %v1092 = vld [vmem:[%s194 + $0x8f0] sm:$0xff]
        %v1093 = vld [vmem:[%s194 + $0x8f8] sm:$0xff]
        %v1094 = vld [vmem:[%s194 + $0x900] sm:$0xff]
        %v1095 = vld [vmem:[%s194 + $0x908] sm:$0xff]
        %v1096 = vld [vmem:[%s194 + $0x910] sm:$0xff]
        %v1097 = vld [vmem:[%s194 + $0x918] sm:$0xff]
        %v1098 = vld [vmem:[%s194 + $0x920] sm:$0xff]
        %v1099 = vld [vmem:[%s194 + $0x928] sm:$0xff]
        %v1100 = vld [vmem:[%s194 + $0x930] sm:$0xff]
        %v1101 = vld [vmem:[%s194 + $0x938] sm:$0xff]
        %v1102 = vld [vmem:[%s194 + $0x940] sm:$0xff]
        %v1103 = vld [vmem:[%s194 + $0x948] sm:$0xff]
        %v1104 = vld [vmem:[%s194 + $0x950] sm:$0xff]
        %v1105 = vld [vmem:[%s194 + $0x958] sm:$0xff]
        %v1106 = vld [vmem:[%s194 + $0x960] sm:$0xff]
        %v1107 = vld [vmem:[%s194 + $0x968] sm:$0xff]
        %v1108 = vld [vmem:[%s194 + $0x970] sm:$0xff]
        %v1109 = vld [vmem:[%s194 + $0x978] sm:$0xff]
        %v1110 = vld [vmem:[%s194 + $0x980] sm:$0xff]
        %v1111 = vld [vmem:[%s194 + $0x988] sm:$0xff]
        %v1112 = vld [vmem:[%s194 + $0x990] sm:$0xff]
        %v1113 = vld [vmem:[%s194 + $0x998] sm:$0xff]
        %v1114 = vld [vmem:[%s194 + $0x9a0] sm:$0xff]
        %v1115 = vld [vmem:[%s194 + $0x9a8] sm:$0xff]
        %v1116 = vld [vmem:[%s194 + $0x9b0] sm:$0xff]
        %v1117 = vld [vmem:[%s194 + $0x9b8] sm:$0xff]
        %v1118 = vld [vmem:[%s194 + $0x9c0] sm:$0xff]
        %v1119 = vld [vmem:[%s194 + $0x9c8] sm:$0xff]
        %v1120 = vld [vmem:[%s194 + $0x9d0] sm:$0xff]
        %v1121 = vld [vmem:[%s194 + $0x9d8] sm:$0xff]
        %v1122 = vld [vmem:[%s194 + $0x9e0] sm:$0xff]
        %v1123 = vld [vmem:[%s194 + $0x9e8] sm:$0xff]
        %v1124 = vld [vmem:[%s194 + $0x9f0] sm:$0xff]
        %v1125 = vld [vmem:[%s194 + $0x9f8] sm:$0xff]
        %v1126 = vld [vmem:[%s194 + $0xa00] sm:$0xff]
        %v1127 = vld [vmem:[%s194 + $0xa08] sm:$0xff]
        %v1128 = vld [vmem:[%s194 + $0xa10] sm:$0xff]
        %v1129 = vld [vmem:[%s194 + $0xa18] sm:$0xff]
        %v1130 = vld [vmem:[%s194 + $0xa20] sm:$0xff]
        %v1131 = vld [vmem:[%s194 + $0xa28] sm:$0xff]
        %v1132 = vld [vmem:[%s194 + $0xa30] sm:$0xff]
        %v1133 = vld [vmem:[%s194 + $0xa38] sm:$0xff]
        %v1134 = vld [vmem:[%s194 + $0xa40] sm:$0xff]
        %v1135 = vld [vmem:[%s194 + $0xa48] sm:$0xff]
        %v1136 = vld [vmem:[%s194 + $0xa50] sm:$0xff]
        %v1137 = vld [vmem:[%s194 + $0xa58] sm:$0xff]
        %v1138 = vld [vmem:[%s194 + $0xa60] sm:$0xff]
        %v1139 = vld [vmem:[%s194 + $0xa68] sm:$0xff]
        %v1140 = vld [vmem:[%s194 + $0xa70] sm:$0xff]
        %v1141 = vld [vmem:[%s194 + $0xa78] sm:$0xff]
        %v1142 = vld [vmem:[%s194 + $0xa80] sm:$0xff]
        %v1143 = vld [vmem:[%s194 + $0xa88] sm:$0xff]
        %v1144 = vld [vmem:[%s194 + $0xa90] sm:$0xff]
        %v1145 = vld [vmem:[%s194 + $0xa98] sm:$0xff]
        %v1146 = vld [vmem:[%s194 + $0xaa0] sm:$0xff]
        %v1147 = vld [vmem:[%s194 + $0xaa8] sm:$0xff]
        %v1148 = vld [vmem:[%s194 + $0xab0] sm:$0xff]
        %v1149 = vld [vmem:[%s194 + $0xab8] sm:$0xff]
        %v1150 = vld [vmem:[%s194 + $0xac0] sm:$0xff]
        %v1151 = vld [vmem:[%s194 + $0xac8] sm:$0xff]
        %v1152 = vld [vmem:[%s194 + $0xad0] sm:$0xff]
        %v1153 = vld [vmem:[%s194 + $0xad8] sm:$0xff]
        %v1154 = vld [vmem:[%s194 + $0xae0] sm:$0xff]
        %v1155 = vld [vmem:[%s194 + $0xae8] sm:$0xff]
        %v1156 = vld [vmem:[%s194 + $0xaf0] sm:$0xff]
        %v1157 = vld [vmem:[%s194 + $0xaf8] sm:$0xff]
        %v1158 = vld [vmem:[%s194 + $0xb00] sm:$0xff]
        %v1159 = vld [vmem:[%s194 + $0xb08] sm:$0xff]
        %v1160 = vld [vmem:[%s194 + $0xb10] sm:$0xff]
        %v1161 = vld [vmem:[%s194 + $0xb18] sm:$0xff]
        %v1162 = vld [vmem:[%s194 + $0xb20] sm:$0xff]
        %v1163 = vld [vmem:[%s194 + $0xb28] sm:$0xff]
        %v1164 = vld [vmem:[%s194 + $0xb30] sm:$0xff]
        %v1165 = vld [vmem:[%s194 + $0xb38] sm:$0xff]
        %v1166 = vld [vmem:[%s194 + $0xb40] sm:$0xff]
        %v1167 = vld [vmem:[%s194 + $0xb48] sm:$0xff]
        %v1168 = vld [vmem:[%s194 + $0xb50] sm:$0xff]
        %v1169 = vld [vmem:[%s194 + $0xb58] sm:$0xff]
        %v1170 = vld [vmem:[%s194 + $0xb60] sm:$0xff]
        %v1171 = vld [vmem:[%s194 + $0xb68] sm:$0xff]
        %v1172 = vld [vmem:[%s194 + $0xb70] sm:$0xff]
        %v1173 = vld [vmem:[%s194 + $0xb78] sm:$0xff]
        %v1174 = vld [vmem:[%s194 + $0xb80] sm:$0xff]
        %v1175 = vld [vmem:[%s194 + $0xb88] sm:$0xff]
        %v1176 = vld [vmem:[%s194 + $0xb90] sm:$0xff]
        %v1177 = vld [vmem:[%s194 + $0xb98] sm:$0xff]
        %v1178 = vld [vmem:[%s194 + $0xba0] sm:$0xff]
        %v1179 = vld [vmem:[%s194 + $0xba8] sm:$0xff]
        %v1180 = vld [vmem:[%s194 + $0xbb0] sm:$0xff]
        %v1181 = vld [vmem:[%s194 + $0xbb8] sm:$0xff]
        %v1182 = vld [vmem:[%s194 + $0xbc0] sm:$0xff]
        %v1183 = vld [vmem:[%s194 + $0xbc8] sm:$0xff]
        %v1184 = vld [vmem:[%s194 + $0xbd0] sm:$0xff]
        %v1185 = vld [vmem:[%s194 + $0xbd8] sm:$0xff]
        %v1186 = vld [vmem:[%s194 + $0xbe0] sm:$0xff]
        %v1187 = vld [vmem:[%s194 + $0xbe8] sm:$0xff]
        %v1188 = vld [vmem:[%s194 + $0xbf0] sm:$0xff]
        %v1189 = vld [vmem:[%s194 + $0xbf8] sm:$0xff]
        %v1190 = vld [vmem:[%s194 + $0xc00] sm:$0xff]
        %v1191 = vld [vmem:[%s194 + $0xc08] sm:$0xff]
        %v1192 = vld [vmem:[%s194 + $0xc10] sm:$0xff]
        %v1193 = vld [vmem:[%s194 + $0xc18] sm:$0xff]
        %v1194 = vld [vmem:[%s194 + $0xc20] sm:$0xff]
        %v1195 = vld [vmem:[%s194 + $0xc28] sm:$0xff]
        %v1196 = vld [vmem:[%s194 + $0xc30] sm:$0xff]
        %v1197 = vld [vmem:[%s194 + $0xc38] sm:$0xff]
        %v1198 = vld [vmem:[%s194 + $0xc40] sm:$0xff]
        %v1199 = vld [vmem:[%s194 + $0xc48] sm:$0xff]
        %v1200 = vld [vmem:[%s194 + $0xc50] sm:$0xff]
        %v1201 = vld [vmem:[%s194 + $0xc58] sm:$0xff]
        %v1202 = vld [vmem:[%s194 + $0xc60] sm:$0xff]
        %v1203 = vld [vmem:[%s194 + $0xc68] sm:$0xff]
        %v1204 = vld [vmem:[%s194 + $0xc70] sm:$0xff]
        %v1205 = vld [vmem:[%s194 + $0xc78] sm:$0xff]
        %v1206 = vld [vmem:[%s194 + $0xc80] sm:$0xff]
        %v1207 = vld [vmem:[%s194 + $0xc88] sm:$0xff]
        %v1208 = vld [vmem:[%s194 + $0xc90] sm:$0xff]
        %v1209 = vld [vmem:[%s194 + $0xc98] sm:$0xff]
        %v1210 = vld [vmem:[%s194 + $0xca0] sm:$0xff]
        %v1211 = vld [vmem:[%s194 + $0xca8] sm:$0xff]
        %v1212 = vld [vmem:[%s194 + $0xcb0] sm:$0xff]
        %v1213 = vld [vmem:[%s194 + $0xcb8] sm:$0xff]
        %v1214 = vld [vmem:[%s194 + $0xcc0] sm:$0xff]
        %v1215 = vld [vmem:[%s194 + $0xcc8] sm:$0xff]
        %v1216 = vld [vmem:[%s194 + $0xcd0] sm:$0xff]
        %v1217 = vld [vmem:[%s194 + $0xcd8] sm:$0xff]
        %v1218 = vld [vmem:[%s194 + $0xce0] sm:$0xff]
        %v1219 = vld [vmem:[%s194 + $0xce8] sm:$0xff]
        %v1220 = vld [vmem:[%s194 + $0xcf0] sm:$0xff]
        %v1221 = vld [vmem:[%s194 + $0xcf8] sm:$0xff]
        %v1222 = vld [vmem:[%s194 + $0xd00] sm:$0xff]
        %v1223 = vld [vmem:[%s194 + $0xd08] sm:$0xff]
        %v1224 = vld [vmem:[%s194 + $0xd10] sm:$0xff]
        %v1225 = vld [vmem:[%s194 + $0xd18] sm:$0xff]
        %v1226 = vld [vmem:[%s194 + $0xd20] sm:$0xff]
        %v1227 = vld [vmem:[%s194 + $0xd28] sm:$0xff]
        %v1228 = vld [vmem:[%s194 + $0xd30] sm:$0xff]
        %v1229 = vld [vmem:[%s194 + $0xd38] sm:$0xff]
        %v1230 = vld [vmem:[%s194 + $0xd40] sm:$0xff]
        %v1231 = vld [vmem:[%s194 + $0xd48] sm:$0xff]
        %v1232 = vld [vmem:[%s194 + $0xd50] sm:$0xff]
        %v1233 = vld [vmem:[%s194 + $0xd58] sm:$0xff]
        %v1234 = vld [vmem:[%s194 + $0xd60] sm:$0xff]
        %v1235 = vld [vmem:[%s194 + $0xd68] sm:$0xff]
        %v1236 = vld [vmem:[%s194 + $0xd70] sm:$0xff]
        %v1237 = vld [vmem:[%s194 + $0xd78] sm:$0xff]
        %v1238 = vld [vmem:[%s194 + $0xd80] sm:$0xff]
        %v1239 = vld [vmem:[%s194 + $0xd88] sm:$0xff]
        %v1240 = vld [vmem:[%s194 + $0xd90] sm:$0xff]
        %v1241 = vld [vmem:[%s194 + $0xd98] sm:$0xff]
        %v1242 = vld [vmem:[%s194 + $0xda0] sm:$0xff]
        %v1243 = vld [vmem:[%s194 + $0xda8] sm:$0xff]
        %v1244 = vld [vmem:[%s194 + $0xdb0] sm:$0xff]
        %v1245 = vld [vmem:[%s194 + $0xdb8] sm:$0xff]
        %v1246 = vld [vmem:[%s194 + $0xdc0] sm:$0xff]
        %v1247 = vld [vmem:[%s194 + $0xdc8] sm:$0xff]
        %v1248 = vld [vmem:[%s194 + $0xdd0] sm:$0xff]
        %v1249 = vld [vmem:[%s194 + $0xdd8] sm:$0xff]
        %v1250 = vld [vmem:[%s194 + $0xde0] sm:$0xff]
        %v1251 = vld [vmem:[%s194 + $0xde8] sm:$0xff]
        %v1252 = vld [vmem:[%s194 + $0xdf0] sm:$0xff]
        %v1253 = vld [vmem:[%s194 + $0xdf8] sm:$0xff]
        %v1254 = vld [vmem:[%s194 + $0xe00] sm:$0xff]
        %v1255 = vld [vmem:[%s194 + $0xe08] sm:$0xff]
        %v1256 = vld [vmem:[%s194 + $0xe10] sm:$0xff]
        %v1257 = vld [vmem:[%s194 + $0xe18] sm:$0xff]
        %v1258 = vld [vmem:[%s194 + $0xe20] sm:$0xff]
        %v1259 = vld [vmem:[%s194 + $0xe28] sm:$0xff]
        %v1260 = vld [vmem:[%s194 + $0xe30] sm:$0xff]
        %v1261 = vld [vmem:[%s194 + $0xe38] sm:$0xff]
        %v1262 = vld [vmem:[%s194 + $0xe40] sm:$0xff]
        %v1263 = vld [vmem:[%s194 + $0xe48] sm:$0xff]
        %v1264 = vld [vmem:[%s194 + $0xe50] sm:$0xff]
        %v1265 = vld [vmem:[%s194 + $0xe58] sm:$0xff]
        %v1266 = vld [vmem:[%s194 + $0xe60] sm:$0xff]
        %v1267 = vld [vmem:[%s194 + $0xe68] sm:$0xff]
        %v1268 = vld [vmem:[%s194 + $0xe70] sm:$0xff]
        %v1269 = vld [vmem:[%s194 + $0xe78] sm:$0xff]
        %v1270 = vld [vmem:[%s194 + $0xe80] sm:$0xff]
        %v1271 = vld [vmem:[%s194 + $0xe88] sm:$0xff]
        %v1272 = vld [vmem:[%s194 + $0xe90] sm:$0xff]
        %v1273 = vld [vmem:[%s194 + $0xe98] sm:$0xff]
        %v1274 = vld [vmem:[%s194 + $0xea0] sm:$0xff]
        %v1275 = vld [vmem:[%s194 + $0xea8] sm:$0xff]
        %v1276 = vld [vmem:[%s194 + $0xeb0] sm:$0xff]
        %v1277 = vld [vmem:[%s194 + $0xeb8] sm:$0xff]
        %v1278 = vld [vmem:[%s194 + $0xec0] sm:$0xff]
        %v1279 = vld [vmem:[%s194 + $0xec8] sm:$0xff]
        %v1280 = vld [vmem:[%s194 + $0xed0] sm:$0xff]
        %v1281 = vld [vmem:[%s194 + $0xed8] sm:$0xff]
        %v1282 = vld [vmem:[%s194 + $0xee0] sm:$0xff]
        %v1283 = vld [vmem:[%s194 + $0xee8] sm:$0xff]
        %v1284 = vld [vmem:[%s194 + $0xef0] sm:$0xff]
        %v1285 = vld [vmem:[%s194 + $0xef8] sm:$0xff]
        %v1286 = vld [vmem:[%s194 + $0xf00] sm:$0xff]
        %v1287 = vld [vmem:[%s194 + $0xf08] sm:$0xff]
        %v1288 = vld [vmem:[%s194 + $0xf10] sm:$0xff]
        %v1289 = vld [vmem:[%s194 + $0xf18] sm:$0xff]
        %v1290 = vld [vmem:[%s194 + $0xf20] sm:$0xff]
        %v1291 = vld [vmem:[%s194 + $0xf28] sm:$0xff]
        %v1292 = vld [vmem:[%s194 + $0xf30] sm:$0xff]
        %v1293 = vld [vmem:[%s194 + $0xf38] sm:$0xff]
        %v1294 = vld [vmem:[%s194 + $0xf40] sm:$0xff]
        %v1295 = vld [vmem:[%s194 + $0xf48] sm:$0xff]
        %v1296 = vld [vmem:[%s194 + $0xf50] sm:$0xff]
        %v1297 = vld [vmem:[%s194 + $0xf58] sm:$0xff]
        %v1298 = vld [vmem:[%s194 + $0xf60] sm:$0xff]
        %v1299 = vld [vmem:[%s194 + $0xf68] sm:$0xff]
        %v1300 = vld [vmem:[%s194 + $0xf70] sm:$0xff]
        %v1301 = vld [vmem:[%s194 + $0xf78] sm:$0xff]
        %v1302 = vld [vmem:[%s194 + $0xf80] sm:$0xff]
        %v1303 = vld [vmem:[%s194 + $0xf88] sm:$0xff]
        %v1304 = vld [vmem:[%s194 + $0xf90] sm:$0xff]
        %v1305 = vld [vmem:[%s194 + $0xf98] sm:$0xff]
        %v1306 = vld [vmem:[%s194 + $0xfa0] sm:$0xff]
        %v1307 = vld [vmem:[%s194 + $0xfa8] sm:$0xff]
        %v1308 = vld [vmem:[%s194 + $0xfb0] sm:$0xff]
        %v1309 = vld [vmem:[%s194 + $0xfb8] sm:$0xff]
        %v1310 = vld [vmem:[%s194 + $0xfc0] sm:$0xff]
        %v1311 = vld [vmem:[%s194 + $0xfc8] sm:$0xff]
        %v1312 = vld [vmem:[%s194 + $0xfd0] sm:$0xff]
        %v1313 = vld [vmem:[%s194 + $0xfd8] sm:$0xff]
        %v1314 = vld [vmem:[%s194 + $0xfe0] sm:$0xff]
        %v1315 = vld [vmem:[%s194 + $0xfe8] sm:$0xff]
        %v1316 = vld [vmem:[%s194 + $0xff0] sm:$0xff]
        %v1317 = vld [vmem:[%s194 + $0xff8] sm:$0xff]
        %v1318 = vsub.f32 %v294, %v806
        %v1319 = vsub.f32 %v295, %v807
        %v1320 = vsub.f32 %v296, %v808
        %v1321 = vsub.f32 %v297, %v809
        %v1322 = vsub.f32 %v298, %v810
        %v1323 = vsub.f32 %v299, %v811
        %v1324 = vsub.f32 %v300, %v812
        %v1325 = vsub.f32 %v301, %v813
        %v1326 = vsub.f32 %v302, %v814
        %v1327 = vsub.f32 %v303, %v815
        %v1328 = vsub.f32 %v304, %v816
        %v1329 = vsub.f32 %v305, %v817
        %v1330 = vsub.f32 %v306, %v818
        %v1331 = vsub.f32 %v307, %v819
        %v1332 = vsub.f32 %v308, %v820
        %v1333 = vsub.f32 %v309, %v821
        %v1334 = vsub.f32 %v310, %v822
        %v1335 = vsub.f32 %v311, %v823
        %v1336 = vsub.f32 %v312, %v824
        %v1337 = vsub.f32 %v313, %v825
        %v1338 = vsub.f32 %v314, %v826
        %v1339 = vsub.f32 %v315, %v827
        %v1340 = vsub.f32 %v316, %v828
        %v1341 = vsub.f32 %v317, %v829
        %v1342 = vsub.f32 %v318, %v830
        %v1343 = vsub.f32 %v319, %v831
        %v1344 = vsub.f32 %v320, %v832
        %v1345 = vsub.f32 %v321, %v833
        %v1346 = vsub.f32 %v322, %v834
        %v1347 = vsub.f32 %v323, %v835
        %v1348 = vsub.f32 %v324, %v836
        %v1349 = vsub.f32 %v325, %v837
        %v1350 = vsub.f32 %v326, %v838
        %v1351 = vsub.f32 %v327, %v839
        %v1352 = vsub.f32 %v328, %v840
        %v1353 = vsub.f32 %v329, %v841
        %v1354 = vsub.f32 %v330, %v842
        %v1355 = vsub.f32 %v331, %v843
        %v1356 = vsub.f32 %v332, %v844
        %v1357 = vsub.f32 %v333, %v845
        %v1358 = vsub.f32 %v334, %v846
        %v1359 = vsub.f32 %v335, %v847
        %v1360 = vsub.f32 %v336, %v848
        %v1361 = vsub.f32 %v337, %v849
        %v1362 = vsub.f32 %v338, %v850
        %v1363 = vsub.f32 %v339, %v851
        %v1364 = vsub.f32 %v340, %v852
        %v1365 = vsub.f32 %v341, %v853
        %v1366 = vsub.f32 %v342, %v854
        %v1367 = vsub.f32 %v343, %v855
        %v1368 = vsub.f32 %v344, %v856
        %v1369 = vsub.f32 %v345, %v857
        %v1370 = vsub.f32 %v346, %v858
        %v1371 = vsub.f32 %v347, %v859
        %v1372 = vsub.f32 %v348, %v860
        %v1373 = vsub.f32 %v349, %v861
        %v1374 = vsub.f32 %v350, %v862
        %v1375 = vsub.f32 %v351, %v863
        %v1376 = vsub.f32 %v352, %v864
        %v1377 = vsub.f32 %v353, %v865
        %v1378 = vsub.f32 %v354, %v866
        %v1379 = vsub.f32 %v355, %v867
        %v1380 = vsub.f32 %v356, %v868
        %v1381 = vsub.f32 %v357, %v869
        %v1382 = vsub.f32 %v358, %v870
        %v1383 = vsub.f32 %v359, %v871
        %v1384 = vsub.f32 %v360, %v872
        %v1385 = vsub.f32 %v361, %v873
        %v1386 = vsub.f32 %v362, %v874
        %v1387 = vsub.f32 %v363, %v875
        %v1388 = vsub.f32 %v364, %v876
        %v1389 = vsub.f32 %v365, %v877
        %v1390 = vsub.f32 %v366, %v878
        %v1391 = vsub.f32 %v367, %v879
        %v1392 = vsub.f32 %v368, %v880
        %v1393 = vsub.f32 %v369, %v881
        %v1394 = vsub.f32 %v370, %v882
        %v1395 = vsub.f32 %v371, %v883
        %v1396 = vsub.f32 %v372, %v884
        %v1397 = vsub.f32 %v373, %v885
        %v1398 = vsub.f32 %v374, %v886
        %v1399 = vsub.f32 %v375, %v887
        %v1400 = vsub.f32 %v376, %v888
        %v1401 = vsub.f32 %v377, %v889
        %v1402 = vsub.f32 %v378, %v890
        %v1403 = vsub.f32 %v379, %v891
        %v1404 = vsub.f32 %v380, %v892
        %v1405 = vsub.f32 %v381, %v893
        %v1406 = vsub.f32 %v382, %v894
        %v1407 = vsub.f32 %v383, %v895
        %v1408 = vsub.f32 %v384, %v896
        %v1409 = vsub.f32 %v385, %v897
        %v1410 = vsub.f32 %v386, %v898
        %v1411 = vsub.f32 %v387, %v899
        %v1412 = vsub.f32 %v388, %v900
        %v1413 = vsub.f32 %v389, %v901
        %v1414 = vsub.f32 %v390, %v902
        %v1415 = vsub.f32 %v391, %v903
        %v1416 = vsub.f32 %v392, %v904
        %v1417 = vsub.f32 %v393, %v905
        %v1418 = vsub.f32 %v394, %v906
        %v1419 = vsub.f32 %v395, %v907
        %v1420 = vsub.f32 %v396, %v908
        %v1421 = vsub.f32 %v397, %v909
        %v1422 = vsub.f32 %v398, %v910
        %v1423 = vsub.f32 %v399, %v911
        %v1424 = vsub.f32 %v400, %v912
        %v1425 = vsub.f32 %v401, %v913
        %v1426 = vsub.f32 %v402, %v914
        %v1427 = vsub.f32 %v403, %v915
        %v1428 = vsub.f32 %v404, %v916
        %v1429 = vsub.f32 %v405, %v917
        %v1430 = vsub.f32 %v406, %v918
        %v1431 = vsub.f32 %v407, %v919
        %v1432 = vsub.f32 %v408, %v920
        %v1433 = vsub.f32 %v409, %v921
        %v1434 = vsub.f32 %v410, %v922
        %v1435 = vsub.f32 %v411, %v923
        %v1436 = vsub.f32 %v412, %v924
        %v1437 = vsub.f32 %v413, %v925
        %v1438 = vsub.f32 %v414, %v926
        %v1439 = vsub.f32 %v415, %v927
        %v1440 = vsub.f32 %v416, %v928
        %v1441 = vsub.f32 %v417, %v929
        %v1442 = vsub.f32 %v418, %v930
        %v1443 = vsub.f32 %v419, %v931
        %v1444 = vsub.f32 %v420, %v932
        %v1445 = vsub.f32 %v421, %v933
        %v1446 = vsub.f32 %v422, %v934
        %v1447 = vsub.f32 %v423, %v935
        %v1448 = vsub.f32 %v424, %v936
        %v1449 = vsub.f32 %v425, %v937
        %v1450 = vsub.f32 %v426, %v938
        %v1451 = vsub.f32 %v427, %v939
        %v1452 = vsub.f32 %v428, %v940
        %v1453 = vsub.f32 %v429, %v941
        %v1454 = vsub.f32 %v430, %v942
        %v1455 = vsub.f32 %v431, %v943
        %v1456 = vsub.f32 %v432, %v944
        %v1457 = vsub.f32 %v433, %v945
        %v1458 = vsub.f32 %v434, %v946
        %v1459 = vsub.f32 %v435, %v947
        %v1460 = vsub.f32 %v436, %v948
        %v1461 = vsub.f32 %v437, %v949
        %v1462 = vsub.f32 %v438, %v950
        %v1463 = vsub.f32 %v439, %v951
        %v1464 = vsub.f32 %v440, %v952
        %v1465 = vsub.f32 %v441, %v953
        %v1466 = vsub.f32 %v442, %v954
        %v1467 = vsub.f32 %v443, %v955
        %v1468 = vsub.f32 %v444, %v956
        %v1469 = vsub.f32 %v445, %v957
        %v1470 = vsub.f32 %v446, %v958
        %v1471 = vsub.f32 %v447, %v959
        %v1472 = vsub.f32 %v448, %v960
        %v1473 = vsub.f32 %v449, %v961
        %v1474 = vsub.f32 %v450, %v962
        %v1475 = vsub.f32 %v451, %v963
        %v1476 = vsub.f32 %v452, %v964
        %v1477 = vsub.f32 %v453, %v965
        %v1478 = vsub.f32 %v454, %v966
        %v1479 = vsub.f32 %v455, %v967
        %v1480 = vsub.f32 %v456, %v968
        %v1481 = vsub.f32 %v457, %v969
        %v1482 = vsub.f32 %v458, %v970
        %v1483 = vsub.f32 %v459, %v971
        %v1484 = vsub.f32 %v460, %v972
        %v1485 = vsub.f32 %v461, %v973
        %v1486 = vsub.f32 %v462, %v974
        %v1487 = vsub.f32 %v463, %v975
        %v1488 = vsub.f32 %v464, %v976
        %v1489 = vsub.f32 %v465, %v977
        %v1490 = vsub.f32 %v466, %v978
        %v1491 = vsub.f32 %v467, %v979
        %v1492 = vsub.f32 %v468, %v980
        %v1493 = vsub.f32 %v469, %v981
        %v1494 = vsub.f32 %v470, %v982
        %v1495 = vsub.f32 %v471, %v983
        %v1496 = vsub.f32 %v472, %v984
        %v1497 = vsub.f32 %v473, %v985
        %v1498 = vsub.f32 %v474, %v986
        %v1499 = vsub.f32 %v475, %v987
        %v1500 = vsub.f32 %v476, %v988
        %v1501 = vsub.f32 %v477, %v989
        %v1502 = vsub.f32 %v478, %v990
        %v1503 = vsub.f32 %v479, %v991
        %v1504 = vsub.f32 %v480, %v992
        %v1505 = vsub.f32 %v481, %v993
        %v1506 = vsub.f32 %v482, %v994
        %v1507 = vsub.f32 %v483, %v995
        %v1508 = vsub.f32 %v484, %v996
        %v1509 = vsub.f32 %v485, %v997
        %v1510 = vsub.f32 %v486, %v998
        %v1511 = vsub.f32 %v487, %v999
        %v1512 = vsub.f32 %v488, %v1000
        %v1513 = vsub.f32 %v489, %v1001
        %v1514 = vsub.f32 %v490, %v1002
        %v1515 = vsub.f32 %v491, %v1003
        %v1516 = vsub.f32 %v492, %v1004
        %v1517 = vsub.f32 %v493, %v1005
        %v1518 = vsub.f32 %v494, %v1006
        %v1519 = vsub.f32 %v495, %v1007
        %v1520 = vsub.f32 %v496, %v1008
        %v1521 = vsub.f32 %v497, %v1009
        %v1522 = vsub.f32 %v498, %v1010
        %v1523 = vsub.f32 %v499, %v1011
        %v1524 = vsub.f32 %v500, %v1012
        %v1525 = vsub.f32 %v501, %v1013
        %v1526 = vsub.f32 %v502, %v1014
        %v1527 = vsub.f32 %v503, %v1015
        %v1528 = vsub.f32 %v504, %v1016
        %v1529 = vsub.f32 %v505, %v1017
        %v1530 = vsub.f32 %v506, %v1018
        %v1531 = vsub.f32 %v507, %v1019
        %v1532 = vsub.f32 %v508, %v1020
        %v1533 = vsub.f32 %v509, %v1021
        %v1534 = vsub.f32 %v510, %v1022
        %v1535 = vsub.f32 %v511, %v1023
        %v1536 = vsub.f32 %v512, %v1024
        %v1537 = vsub.f32 %v513, %v1025
        %v1538 = vsub.f32 %v514, %v1026
        %v1539 = vsub.f32 %v515, %v1027
        %v1540 = vsub.f32 %v516, %v1028
        %v1541 = vsub.f32 %v517, %v1029
        %v1542 = vsub.f32 %v518, %v1030
        %v1543 = vsub.f32 %v519, %v1031
        %v1544 = vsub.f32 %v520, %v1032
        %v1545 = vsub.f32 %v521, %v1033
        %v1546 = vsub.f32 %v522, %v1034
        %v1547 = vsub.f32 %v523, %v1035
        %v1548 = vsub.f32 %v524, %v1036
        %v1549 = vsub.f32 %v525, %v1037
        %v1550 = vsub.f32 %v526, %v1038
        %v1551 = vsub.f32 %v527, %v1039
        %v1552 = vsub.f32 %v528, %v1040
        %v1553 = vsub.f32 %v529, %v1041
        %v1554 = vsub.f32 %v530, %v1042
        %v1555 = vsub.f32 %v531, %v1043
        %v1556 = vsub.f32 %v532, %v1044
        %v1557 = vsub.f32 %v533, %v1045
        %v1558 = vsub.f32 %v534, %v1046
        %v1559 = vsub.f32 %v535, %v1047
        %v1560 = vsub.f32 %v536, %v1048
        %v1561 = vsub.f32 %v537, %v1049
        %v1562 = vsub.f32 %v538, %v1050
        %v1563 = vsub.f32 %v539, %v1051
        %v1564 = vsub.f32 %v540, %v1052
        %v1565 = vsub.f32 %v541, %v1053
        %v1566 = vsub.f32 %v542, %v1054
        %v1567 = vsub.f32 %v543, %v1055
        %v1568 = vsub.f32 %v544, %v1056
        %v1569 = vsub.f32 %v545, %v1057
        %v1570 = vsub.f32 %v546, %v1058
        %v1571 = vsub.f32 %v547, %v1059
        %v1572 = vsub.f32 %v548, %v1060
        %v1573 = vsub.f32 %v549, %v1061
        %v1574 = vsub.f32 %v550, %v1062
        %v1575 = vsub.f32 %v551, %v1063
        %v1576 = vsub.f32 %v552, %v1064
        %v1577 = vsub.f32 %v553, %v1065
        %v1578 = vsub.f32 %v554, %v1066
        %v1579 = vsub.f32 %v555, %v1067
        %v1580 = vsub.f32 %v556, %v1068
        %v1581 = vsub.f32 %v557, %v1069
        %v1582 = vsub.f32 %v558, %v1070
        %v1583 = vsub.f32 %v559, %v1071
        %v1584 = vsub.f32 %v560, %v1072
        %v1585 = vsub.f32 %v561, %v1073
        %v1586 = vsub.f32 %v562, %v1074
        %v1587 = vsub.f32 %v563, %v1075
        %v1588 = vsub.f32 %v564, %v1076
        %v1589 = vsub.f32 %v565, %v1077
        %v1590 = vsub.f32 %v566, %v1078
        %v1591 = vsub.f32 %v567, %v1079
        %v1592 = vsub.f32 %v568, %v1080
        %v1593 = vsub.f32 %v569, %v1081
        %v1594 = vsub.f32 %v570, %v1082
        %v1595 = vsub.f32 %v571, %v1083
        %v1596 = vsub.f32 %v572, %v1084
        %v1597 = vsub.f32 %v573, %v1085
        %v1598 = vsub.f32 %v574, %v1086
        %v1599 = vsub.f32 %v575, %v1087
        %v1600 = vsub.f32 %v576, %v1088
        %v1601 = vsub.f32 %v577, %v1089
        %v1602 = vsub.f32 %v578, %v1090
        %v1603 = vsub.f32 %v579, %v1091
        %v1604 = vsub.f32 %v580, %v1092
        %v1605 = vsub.f32 %v581, %v1093
        %v1606 = vsub.f32 %v582, %v1094
        %v1607 = vsub.f32 %v583, %v1095
        %v1608 = vsub.f32 %v584, %v1096
        %v1609 = vsub.f32 %v585, %v1097
        %v1610 = vsub.f32 %v586, %v1098
        %v1611 = vsub.f32 %v587, %v1099
        %v1612 = vsub.f32 %v588, %v1100
        %v1613 = vsub.f32 %v589, %v1101
        %v1614 = vsub.f32 %v590, %v1102
        %v1615 = vsub.f32 %v591, %v1103
        %v1616 = vsub.f32 %v592, %v1104
        %v1617 = vsub.f32 %v593, %v1105
        %v1618 = vsub.f32 %v594, %v1106
        %v1619 = vsub.f32 %v595, %v1107
        %v1620 = vsub.f32 %v596, %v1108
        %v1621 = vsub.f32 %v597, %v1109
        %v1622 = vsub.f32 %v598, %v1110
        %v1623 = vsub.f32 %v599, %v1111
        %v1624 = vsub.f32 %v600, %v1112
        %v1625 = vsub.f32 %v601, %v1113
        %v1626 = vsub.f32 %v602, %v1114
        %v1627 = vsub.f32 %v603, %v1115
        %v1628 = vsub.f32 %v604, %v1116
        %v1629 = vsub.f32 %v605, %v1117
        %v1630 = vsub.f32 %v606, %v1118
        %v1631 = vsub.f32 %v607, %v1119
        %v1632 = vsub.f32 %v608, %v1120
        %v1633 = vsub.f32 %v609, %v1121
        %v1634 = vsub.f32 %v610, %v1122
        %v1635 = vsub.f32 %v611, %v1123
        %v1636 = vsub.f32 %v612, %v1124
        %v1637 = vsub.f32 %v613, %v1125
        %v1638 = vsub.f32 %v614, %v1126
        %v1639 = vsub.f32 %v615, %v1127
        %v1640 = vsub.f32 %v616, %v1128
        %v1641 = vsub.f32 %v617, %v1129
        %v1642 = vsub.f32 %v618, %v1130
        %v1643 = vsub.f32 %v619, %v1131
        %v1644 = vsub.f32 %v620, %v1132
        %v1645 = vsub.f32 %v621, %v1133
        %v1646 = vsub.f32 %v622, %v1134
        %v1647 = vsub.f32 %v623, %v1135
        %v1648 = vsub.f32 %v624, %v1136
        %v1649 = vsub.f32 %v625, %v1137
        %v1650 = vsub.f32 %v626, %v1138
        %v1651 = vsub.f32 %v627, %v1139
        %v1652 = vsub.f32 %v628, %v1140
        %v1653 = vsub.f32 %v629, %v1141
        %v1654 = vsub.f32 %v630, %v1142
        %v1655 = vsub.f32 %v631, %v1143
        %v1656 = vsub.f32 %v632, %v1144
        %v1657 = vsub.f32 %v633, %v1145
        %v1658 = vsub.f32 %v634, %v1146
        %v1659 = vsub.f32 %v635, %v1147
        %v1660 = vsub.f32 %v636, %v1148
        %v1661 = vsub.f32 %v637, %v1149
        %v1662 = vsub.f32 %v638, %v1150
        %v1663 = vsub.f32 %v639, %v1151
        %v1664 = vsub.f32 %v640, %v1152
        %v1665 = vsub.f32 %v641, %v1153
        %v1666 = vsub.f32 %v642, %v1154
        %v1667 = vsub.f32 %v643, %v1155
        %v1668 = vsub.f32 %v644, %v1156
        %v1669 = vsub.f32 %v645, %v1157
        %v1670 = vsub.f32 %v646, %v1158
        %v1671 = vsub.f32 %v647, %v1159
        %v1672 = vsub.f32 %v648, %v1160
        %v1673 = vsub.f32 %v649, %v1161
        %v1674 = vsub.f32 %v650, %v1162
        %v1675 = vsub.f32 %v651, %v1163
        %v1676 = vsub.f32 %v652, %v1164
        %v1677 = vsub.f32 %v653, %v1165
        %v1678 = vsub.f32 %v654, %v1166
        %v1679 = vsub.f32 %v655, %v1167
        %v1680 = vsub.f32 %v656, %v1168
        %v1681 = vsub.f32 %v657, %v1169
        %v1682 = vsub.f32 %v658, %v1170
        %v1683 = vsub.f32 %v659, %v1171
        %v1684 = vsub.f32 %v660, %v1172
        %v1685 = vsub.f32 %v661, %v1173
        %v1686 = vsub.f32 %v662, %v1174
        %v1687 = vsub.f32 %v663, %v1175
        %v1688 = vsub.f32 %v664, %v1176
        %v1689 = vsub.f32 %v665, %v1177
        %v1690 = vsub.f32 %v666, %v1178
        %v1691 = vsub.f32 %v667, %v1179
        %v1692 = vsub.f32 %v668, %v1180
        %v1693 = vsub.f32 %v669, %v1181
        %v1694 = vsub.f32 %v670, %v1182
        %v1695 = vsub.f32 %v671, %v1183
        %v1696 = vsub.f32 %v672, %v1184
        %v1697 = vsub.f32 %v673, %v1185
        %v1698 = vsub.f32 %v674, %v1186
        %v1699 = vsub.f32 %v675, %v1187
        %v1700 = vsub.f32 %v676, %v1188
        %v1701 = vsub.f32 %v677, %v1189
        %v1702 = vsub.f32 %v678, %v1190
        %v1703 = vsub.f32 %v679, %v1191
        %v1704 = vsub.f32 %v680, %v1192
        %v1705 = vsub.f32 %v681, %v1193
        %v1706 = vsub.f32 %v682, %v1194
        %v1707 = vsub.f32 %v683, %v1195
        %v1708 = vsub.f32 %v684, %v1196
        %v1709 = vsub.f32 %v685, %v1197
        %v1710 = vsub.f32 %v686, %v1198
        %v1711 = vsub.f32 %v687, %v1199
        %v1712 = vsub.f32 %v688, %v1200
        %v1713 = vsub.f32 %v689, %v1201
        %v1714 = vsub.f32 %v690, %v1202
        %v1715 = vsub.f32 %v691, %v1203
        %v1716 = vsub.f32 %v692, %v1204
        %v1717 = vsub.f32 %v693, %v1205
        %v1718 = vsub.f32 %v694, %v1206
        %v1719 = vsub.f32 %v695, %v1207
        %v1720 = vsub.f32 %v696, %v1208
        %v1721 = vsub.f32 %v697, %v1209
        %v1722 = vsub.f32 %v698, %v1210
        %v1723 = vsub.f32 %v699, %v1211
        %v1724 = vsub.f32 %v700, %v1212
        %v1725 = vsub.f32 %v701, %v1213
        %v1726 = vsub.f32 %v702, %v1214
        %v1727 = vsub.f32 %v703, %v1215
        %v1728 = vsub.f32 %v704, %v1216
        %v1729 = vsub.f32 %v705, %v1217
        %v1730 = vsub.f32 %v706, %v1218
        %v1731 = vsub.f32 %v707, %v1219
        %v1732 = vsub.f32 %v708, %v1220
        %v1733 = vsub.f32 %v709, %v1221
        %v1734 = vsub.f32 %v710, %v1222
        %v1735 = vsub.f32 %v711, %v1223
        %v1736 = vsub.f32 %v712, %v1224
        %v1737 = vsub.f32 %v713, %v1225
        %v1738 = vsub.f32 %v714, %v1226
        %v1739 = vsub.f32 %v715, %v1227
        %v1740 = vsub.f32 %v716, %v1228
        %v1741 = vsub.f32 %v717, %v1229
        %v1742 = vsub.f32 %v718, %v1230
        %v1743 = vsub.f32 %v719, %v1231
        %v1744 = vsub.f32 %v720, %v1232
        %v1745 = vsub.f32 %v721, %v1233
        %v1746 = vsub.f32 %v722, %v1234
        %v1747 = vsub.f32 %v723, %v1235
        %v1748 = vsub.f32 %v724, %v1236
        %v1749 = vsub.f32 %v725, %v1237
        %v1750 = vsub.f32 %v726, %v1238
        %v1751 = vsub.f32 %v727, %v1239
        %v1752 = vsub.f32 %v728, %v1240
        %v1753 = vsub.f32 %v729, %v1241
        %v1754 = vsub.f32 %v730, %v1242
        %v1755 = vsub.f32 %v731, %v1243
        %v1756 = vsub.f32 %v732, %v1244
        %v1757 = vsub.f32 %v733, %v1245
        %v1758 = vsub.f32 %v734, %v1246
        %v1759 = vsub.f32 %v735, %v1247
        %v1760 = vsub.f32 %v736, %v1248
        %v1761 = vsub.f32 %v737, %v1249
        %v1762 = vsub.f32 %v738, %v1250
        %v1763 = vsub.f32 %v739, %v1251
        %v1764 = vsub.f32 %v740, %v1252
        %v1765 = vsub.f32 %v741, %v1253
        %v1766 = vsub.f32 %v742, %v1254
        %v1767 = vsub.f32 %v743, %v1255
        %v1768 = vsub.f32 %v744, %v1256
        %v1769 = vsub.f32 %v745, %v1257
        %v1770 = vsub.f32 %v746, %v1258
        %v1771 = vsub.f32 %v747, %v1259
        %v1772 = vsub.f32 %v748, %v1260
        %v1773 = vsub.f32 %v749, %v1261
        %v1774 = vsub.f32 %v750, %v1262
        %v1775 = vsub.f32 %v751, %v1263
        %v1776 = vsub.f32 %v752, %v1264
        %v1777 = vsub.f32 %v753, %v1265
        %v1778 = vsub.f32 %v754, %v1266
        %v1779 = vsub.f32 %v755, %v1267
        %v1780 = vsub.f32 %v756, %v1268
        %v1781 = vsub.f32 %v757, %v1269
        %v1782 = vsub.f32 %v758, %v1270
        %v1783 = vsub.f32 %v759, %v1271
        %v1784 = vsub.f32 %v760, %v1272
        %v1785 = vsub.f32 %v761, %v1273
        %v1786 = vsub.f32 %v762, %v1274
        %v1787 = vsub.f32 %v763, %v1275
        %v1788 = vsub.f32 %v764, %v1276
        %v1789 = vsub.f32 %v765, %v1277
        %v1790 = vsub.f32 %v766, %v1278
        %v1791 = vsub.f32 %v767, %v1279
        %v1792 = vsub.f32 %v768, %v1280
        %v1793 = vsub.f32 %v769, %v1281
        %v1794 = vsub.f32 %v770, %v1282
        %v1795 = vsub.f32 %v771, %v1283
        %v1796 = vsub.f32 %v772, %v1284
        %v1797 = vsub.f32 %v773, %v1285
        %v1798 = vsub.f32 %v774, %v1286
        %v1799 = vsub.f32 %v775, %v1287
        %v1800 = vsub.f32 %v776, %v1288
        %v1801 = vsub.f32 %v777, %v1289
        %v1802 = vsub.f32 %v778, %v1290
        %v1803 = vsub.f32 %v779, %v1291
        %v1804 = vsub.f32 %v780, %v1292
        %v1805 = vsub.f32 %v781, %v1293
        %v1806 = vsub.f32 %v782, %v1294
        %v1807 = vsub.f32 %v783, %v1295
        %v1808 = vsub.f32 %v784, %v1296
        %v1809 = vsub.f32 %v785, %v1297
        %v1810 = vsub.f32 %v786, %v1298
        %v1811 = vsub.f32 %v787, %v1299
        %v1812 = vsub.f32 %v788, %v1300
        %v1813 = vsub.f32 %v789, %v1301
        %v1814 = vsub.f32 %v790, %v1302
        %v1815 = vsub.f32 %v791, %v1303
        %v1816 = vsub.f32 %v792, %v1304
        %v1817 = vsub.f32 %v793, %v1305
        %v1818 = vsub.f32 %v794, %v1306
        %v1819 = vsub.f32 %v795, %v1307
        %v1820 = vsub.f32 %v796, %v1308
        %v1821 = vsub.f32 %v797, %v1309
        %v1822 = vsub.f32 %v798, %v1310
        %v1823 = vsub.f32 %v799, %v1311
        %v1824 = vsub.f32 %v800, %v1312
        %v1825 = vsub.f32 %v801, %v1313
        %v1826 = vsub.f32 %v802, %v1314
        %v1827 = vsub.f32 %v803, %v1315
        %v1828 = vsub.f32 %v804, %v1316
        %v1829 = vsub.f32 %v805, %v1317
        %v1830 = vand.u32 2147483647, %v1318
        %v1831 = vand.u32 2147483647, %v1319
        %v1832 = vand.u32 2147483647, %v1320
        %v1833 = vand.u32 2147483647, %v1321
        %v1834 = vand.u32 2147483647, %v1322
        %v1835 = vand.u32 2147483647, %v1323
        %v1836 = vand.u32 2147483647, %v1324
        %v1837 = vand.u32 2147483647, %v1325
        %v1838 = vand.u32 2147483647, %v1326
        %v1839 = vand.u32 2147483647, %v1327
        %v1840 = vand.u32 2147483647, %v1328
        %v1841 = vand.u32 2147483647, %v1329
        %v1842 = vand.u32 2147483647, %v1330
        %v1843 = vand.u32 2147483647, %v1331
        %v1844 = vand.u32 2147483647, %v1332
        %v1845 = vand.u32 2147483647, %v1333
        %v1846 = vand.u32 2147483647, %v1334
        %v1847 = vand.u32 2147483647, %v1335
        %v1848 = vand.u32 2147483647, %v1336
        %v1849 = vand.u32 2147483647, %v1337
        %v1850 = vand.u32 2147483647, %v1338
        %v1851 = vand.u32 2147483647, %v1339
        %v1852 = vand.u32 2147483647, %v1340
        %v1853 = vand.u32 2147483647, %v1341
        %v1854 = vand.u32 2147483647, %v1342
        %v1855 = vand.u32 2147483647, %v1343
        %v1856 = vand.u32 2147483647, %v1344
        %v1857 = vand.u32 2147483647, %v1345
        %v1858 = vand.u32 2147483647, %v1346
        %v1859 = vand.u32 2147483647, %v1347
        %v1860 = vand.u32 2147483647, %v1348
        %v1861 = vand.u32 2147483647, %v1349
        %v1862 = vand.u32 2147483647, %v1350
        %v1863 = vand.u32 2147483647, %v1351
        %v1864 = vand.u32 2147483647, %v1352
        %v1865 = vand.u32 2147483647, %v1353
        %v1866 = vand.u32 2147483647, %v1354
        %v1867 = vand.u32 2147483647, %v1355
        %v1868 = vand.u32 2147483647, %v1356
        %v1869 = vand.u32 2147483647, %v1357
        %v1870 = vand.u32 2147483647, %v1358
        %v1871 = vand.u32 2147483647, %v1359
        %v1872 = vand.u32 2147483647, %v1360
        %v1873 = vand.u32 2147483647, %v1361
        %v1874 = vand.u32 2147483647, %v1362
        %v1875 = vand.u32 2147483647, %v1363
        %v1876 = vand.u32 2147483647, %v1364
        %v1877 = vand.u32 2147483647, %v1365
        %v1878 = vand.u32 2147483647, %v1366
        %v1879 = vand.u32 2147483647, %v1367
        %v1880 = vand.u32 2147483647, %v1368
        %v1881 = vand.u32 2147483647, %v1369
        %v1882 = vand.u32 2147483647, %v1370
        %v1883 = vand.u32 2147483647, %v1371
        %v1884 = vand.u32 2147483647, %v1372
        %v1885 = vand.u32 2147483647, %v1373
        %v1886 = vand.u32 2147483647, %v1374
        %v1887 = vand.u32 2147483647, %v1375
        %v1888 = vand.u32 2147483647, %v1376
        %v1889 = vand.u32 2147483647, %v1377
        %v1890 = vand.u32 2147483647, %v1378
        %v1891 = vand.u32 2147483647, %v1379
        %v1892 = vand.u32 2147483647, %v1380
        %v1893 = vand.u32 2147483647, %v1381
        %v1894 = vand.u32 2147483647, %v1382
        %v1895 = vand.u32 2147483647, %v1383
        %v1896 = vand.u32 2147483647, %v1384
        %v1897 = vand.u32 2147483647, %v1385
        %v1898 = vand.u32 2147483647, %v1386
        %v1899 = vand.u32 2147483647, %v1387
        %v1900 = vand.u32 2147483647, %v1388
        %v1901 = vand.u32 2147483647, %v1389
        %v1902 = vand.u32 2147483647, %v1390
        %v1903 = vand.u32 2147483647, %v1391
        %v1904 = vand.u32 2147483647, %v1392
        %v1905 = vand.u32 2147483647, %v1393
        %v1906 = vand.u32 2147483647, %v1394
        %v1907 = vand.u32 2147483647, %v1395
        %v1908 = vand.u32 2147483647, %v1396
        %v1909 = vand.u32 2147483647, %v1397
        %v1910 = vand.u32 2147483647, %v1398
        %v1911 = vand.u32 2147483647, %v1399
        %v1912 = vand.u32 2147483647, %v1400
        %v1913 = vand.u32 2147483647, %v1401
        %v1914 = vand.u32 2147483647, %v1402
        %v1915 = vand.u32 2147483647, %v1403
        %v1916 = vand.u32 2147483647, %v1404
        %v1917 = vand.u32 2147483647, %v1405
        %v1918 = vand.u32 2147483647, %v1406
        %v1919 = vand.u32 2147483647, %v1407
        %v1920 = vand.u32 2147483647, %v1408
        %v1921 = vand.u32 2147483647, %v1409
        %v1922 = vand.u32 2147483647, %v1410
        %v1923 = vand.u32 2147483647, %v1411
        %v1924 = vand.u32 2147483647, %v1412
        %v1925 = vand.u32 2147483647, %v1413
        %v1926 = vand.u32 2147483647, %v1414
        %v1927 = vand.u32 2147483647, %v1415
        %v1928 = vand.u32 2147483647, %v1416
        %v1929 = vand.u32 2147483647, %v1417
        %v1930 = vand.u32 2147483647, %v1418
        %v1931 = vand.u32 2147483647, %v1419
        %v1932 = vand.u32 2147483647, %v1420
        %v1933 = vand.u32 2147483647, %v1421
        %v1934 = vand.u32 2147483647, %v1422
        %v1935 = vand.u32 2147483647, %v1423
        %v1936 = vand.u32 2147483647, %v1424
        %v1937 = vand.u32 2147483647, %v1425
        %v1938 = vand.u32 2147483647, %v1426
        %v1939 = vand.u32 2147483647, %v1427
        %v1940 = vand.u32 2147483647, %v1428
        %v1941 = vand.u32 2147483647, %v1429
        %v1942 = vand.u32 2147483647, %v1430
        %v1943 = vand.u32 2147483647, %v1431
        %v1944 = vand.u32 2147483647, %v1432
        %v1945 = vand.u32 2147483647, %v1433
        %v1946 = vand.u32 2147483647, %v1434
        %v1947 = vand.u32 2147483647, %v1435
        %v1948 = vand.u32 2147483647, %v1436
        %v1949 = vand.u32 2147483647, %v1437
        %v1950 = vand.u32 2147483647, %v1438
        %v1951 = vand.u32 2147483647, %v1439
        %v1952 = vand.u32 2147483647, %v1440
        %v1953 = vand.u32 2147483647, %v1441
        %v1954 = vand.u32 2147483647, %v1442
        %v1955 = vand.u32 2147483647, %v1443
        %v1956 = vand.u32 2147483647, %v1444
        %v1957 = vand.u32 2147483647, %v1445
        %v1958 = vand.u32 2147483647, %v1446
        %v1959 = vand.u32 2147483647, %v1447
        %v1960 = vand.u32 2147483647, %v1448
        %v1961 = vand.u32 2147483647, %v1449
        %v1962 = vand.u32 2147483647, %v1450
        %v1963 = vand.u32 2147483647, %v1451
        %v1964 = vand.u32 2147483647, %v1452
        %v1965 = vand.u32 2147483647, %v1453
        %v1966 = vand.u32 2147483647, %v1454
        %v1967 = vand.u32 2147483647, %v1455
        %v1968 = vand.u32 2147483647, %v1456
        %v1969 = vand.u32 2147483647, %v1457
        %v1970 = vand.u32 2147483647, %v1458
        %v1971 = vand.u32 2147483647, %v1459
        %v1972 = vand.u32 2147483647, %v1460
        %v1973 = vand.u32 2147483647, %v1461
        %v1974 = vand.u32 2147483647, %v1462
        %v1975 = vand.u32 2147483647, %v1463
        %v1976 = vand.u32 2147483647, %v1464
        %v1977 = vand.u32 2147483647, %v1465
        %v1978 = vand.u32 2147483647, %v1466
        %v1979 = vand.u32 2147483647, %v1467
        %v1980 = vand.u32 2147483647, %v1468
        %v1981 = vand.u32 2147483647, %v1469
        %v1982 = vand.u32 2147483647, %v1470
        %v1983 = vand.u32 2147483647, %v1471
        %v1984 = vand.u32 2147483647, %v1472
        %v1985 = vand.u32 2147483647, %v1473
        %v1986 = vand.u32 2147483647, %v1474
        %v1987 = vand.u32 2147483647, %v1475
        %v1988 = vand.u32 2147483647, %v1476
        %v1989 = vand.u32 2147483647, %v1477
        %v1990 = vand.u32 2147483647, %v1478
        %v1991 = vand.u32 2147483647, %v1479
        %v1992 = vand.u32 2147483647, %v1480
        %v1993 = vand.u32 2147483647, %v1481
        %v1994 = vand.u32 2147483647, %v1482
        %v1995 = vand.u32 2147483647, %v1483
        %v1996 = vand.u32 2147483647, %v1484
        %v1997 = vand.u32 2147483647, %v1485
        %v1998 = vand.u32 2147483647, %v1486
        %v1999 = vand.u32 2147483647, %v1487
        %v2000 = vand.u32 2147483647, %v1488
        %v2001 = vand.u32 2147483647, %v1489
        %v2002 = vand.u32 2147483647, %v1490
        %v2003 = vand.u32 2147483647, %v1491
        %v2004 = vand.u32 2147483647, %v1492
        %v2005 = vand.u32 2147483647, %v1493
        %v2006 = vand.u32 2147483647, %v1494
        %v2007 = vand.u32 2147483647, %v1495
        %v2008 = vand.u32 2147483647, %v1496
        %v2009 = vand.u32 2147483647, %v1497
        %v2010 = vand.u32 2147483647, %v1498
        %v2011 = vand.u32 2147483647, %v1499
        %v2012 = vand.u32 2147483647, %v1500
        %v2013 = vand.u32 2147483647, %v1501
        %v2014 = vand.u32 2147483647, %v1502
        %v2015 = vand.u32 2147483647, %v1503
        %v2016 = vand.u32 2147483647, %v1504
        %v2017 = vand.u32 2147483647, %v1505
        %v2018 = vand.u32 2147483647, %v1506
        %v2019 = vand.u32 2147483647, %v1507
        %v2020 = vand.u32 2147483647, %v1508
        %v2021 = vand.u32 2147483647, %v1509
        %v2022 = vand.u32 2147483647, %v1510
        %v2023 = vand.u32 2147483647, %v1511
        %v2024 = vand.u32 2147483647, %v1512
        %v2025 = vand.u32 2147483647, %v1513
        %v2026 = vand.u32 2147483647, %v1514
        %v2027 = vand.u32 2147483647, %v1515
        %v2028 = vand.u32 2147483647, %v1516
        %v2029 = vand.u32 2147483647, %v1517
        %v2030 = vand.u32 2147483647, %v1518
        %v2031 = vand.u32 2147483647, %v1519
        %v2032 = vand.u32 2147483647, %v1520
        %v2033 = vand.u32 2147483647, %v1521
        %v2034 = vand.u32 2147483647, %v1522
        %v2035 = vand.u32 2147483647, %v1523
        %v2036 = vand.u32 2147483647, %v1524
        %v2037 = vand.u32 2147483647, %v1525
        %v2038 = vand.u32 2147483647, %v1526
        %v2039 = vand.u32 2147483647, %v1527
        %v2040 = vand.u32 2147483647, %v1528
        %v2041 = vand.u32 2147483647, %v1529
        %v2042 = vand.u32 2147483647, %v1530
        %v2043 = vand.u32 2147483647, %v1531
        %v2044 = vand.u32 2147483647, %v1532
        %v2045 = vand.u32 2147483647, %v1533
        %v2046 = vand.u32 2147483647, %v1534
        %v2047 = vand.u32 2147483647, %v1535
        %v2048 = vand.u32 2147483647, %v1536
        %v2049 = vand.u32 2147483647, %v1537
        %v2050 = vand.u32 2147483647, %v1538
        %v2051 = vand.u32 2147483647, %v1539
        %v2052 = vand.u32 2147483647, %v1540
        %v2053 = vand.u32 2147483647, %v1541
        %v2054 = vand.u32 2147483647, %v1542
        %v2055 = vand.u32 2147483647, %v1543
        %v2056 = vand.u32 2147483647, %v1544
        %v2057 = vand.u32 2147483647, %v1545
        %v2058 = vand.u32 2147483647, %v1546
        %v2059 = vand.u32 2147483647, %v1547
        %v2060 = vand.u32 2147483647, %v1548
        %v2061 = vand.u32 2147483647, %v1549
        %v2062 = vand.u32 2147483647, %v1550
        %v2063 = vand.u32 2147483647, %v1551
        %v2064 = vand.u32 2147483647, %v1552
        %v2065 = vand.u32 2147483647, %v1553
        %v2066 = vand.u32 2147483647, %v1554
        %v2067 = vand.u32 2147483647, %v1555
        %v2068 = vand.u32 2147483647, %v1556
        %v2069 = vand.u32 2147483647, %v1557
        %v2070 = vand.u32 2147483647, %v1558
        %v2071 = vand.u32 2147483647, %v1559
        %v2072 = vand.u32 2147483647, %v1560
        %v2073 = vand.u32 2147483647, %v1561
        %v2074 = vand.u32 2147483647, %v1562
        %v2075 = vand.u32 2147483647, %v1563
        %v2076 = vand.u32 2147483647, %v1564
        %v2077 = vand.u32 2147483647, %v1565
        %v2078 = vand.u32 2147483647, %v1566
        %v2079 = vand.u32 2147483647, %v1567
        %v2080 = vand.u32 2147483647, %v1568
        %v2081 = vand.u32 2147483647, %v1569
        %v2082 = vand.u32 2147483647, %v1570
        %v2083 = vand.u32 2147483647, %v1571
        %v2084 = vand.u32 2147483647, %v1572
        %v2085 = vand.u32 2147483647, %v1573
        %v2086 = vand.u32 2147483647, %v1574
        %v2087 = vand.u32 2147483647, %v1575
        %v2088 = vand.u32 2147483647, %v1576
        %v2089 = vand.u32 2147483647, %v1577
        %v2090 = vand.u32 2147483647, %v1578
        %v2091 = vand.u32 2147483647, %v1579
        %v2092 = vand.u32 2147483647, %v1580
        %v2093 = vand.u32 2147483647, %v1581
        %v2094 = vand.u32 2147483647, %v1582
        %v2095 = vand.u32 2147483647, %v1583
        %v2096 = vand.u32 2147483647, %v1584
        %v2097 = vand.u32 2147483647, %v1585
        %v2098 = vand.u32 2147483647, %v1586
        %v2099 = vand.u32 2147483647, %v1587
        %v2100 = vand.u32 2147483647, %v1588
        %v2101 = vand.u32 2147483647, %v1589
        %v2102 = vand.u32 2147483647, %v1590
        %v2103 = vand.u32 2147483647, %v1591
        %v2104 = vand.u32 2147483647, %v1592
        %v2105 = vand.u32 2147483647, %v1593
        %v2106 = vand.u32 2147483647, %v1594
        %v2107 = vand.u32 2147483647, %v1595
        %v2108 = vand.u32 2147483647, %v1596
        %v2109 = vand.u32 2147483647, %v1597
        %v2110 = vand.u32 2147483647, %v1598
        %v2111 = vand.u32 2147483647, %v1599
        %v2112 = vand.u32 2147483647, %v1600
        %v2113 = vand.u32 2147483647, %v1601
        %v2114 = vand.u32 2147483647, %v1602
        %v2115 = vand.u32 2147483647, %v1603
        %v2116 = vand.u32 2147483647, %v1604
        %v2117 = vand.u32 2147483647, %v1605
        %v2118 = vand.u32 2147483647, %v1606
        %v2119 = vand.u32 2147483647, %v1607
        %v2120 = vand.u32 2147483647, %v1608
        %v2121 = vand.u32 2147483647, %v1609
        %v2122 = vand.u32 2147483647, %v1610
        %v2123 = vand.u32 2147483647, %v1611
        %v2124 = vand.u32 2147483647, %v1612
        %v2125 = vand.u32 2147483647, %v1613
        %v2126 = vand.u32 2147483647, %v1614
        %v2127 = vand.u32 2147483647, %v1615
        %v2128 = vand.u32 2147483647, %v1616
        %v2129 = vand.u32 2147483647, %v1617
        %v2130 = vand.u32 2147483647, %v1618
        %v2131 = vand.u32 2147483647, %v1619
        %v2132 = vand.u32 2147483647, %v1620
        %v2133 = vand.u32 2147483647, %v1621
        %v2134 = vand.u32 2147483647, %v1622
        %v2135 = vand.u32 2147483647, %v1623
        %v2136 = vand.u32 2147483647, %v1624
        %v2137 = vand.u32 2147483647, %v1625
        %v2138 = vand.u32 2147483647, %v1626
        %v2139 = vand.u32 2147483647, %v1627
        %v2140 = vand.u32 2147483647, %v1628
        %v2141 = vand.u32 2147483647, %v1629
        %v2142 = vand.u32 2147483647, %v1630
        %v2143 = vand.u32 2147483647, %v1631
        %v2144 = vand.u32 2147483647, %v1632
        %v2145 = vand.u32 2147483647, %v1633
        %v2146 = vand.u32 2147483647, %v1634
        %v2147 = vand.u32 2147483647, %v1635
        %v2148 = vand.u32 2147483647, %v1636
        %v2149 = vand.u32 2147483647, %v1637
        %v2150 = vand.u32 2147483647, %v1638
        %v2151 = vand.u32 2147483647, %v1639
        %v2152 = vand.u32 2147483647, %v1640
        %v2153 = vand.u32 2147483647, %v1641
        %v2154 = vand.u32 2147483647, %v1642
        %v2155 = vand.u32 2147483647, %v1643
        %v2156 = vand.u32 2147483647, %v1644
        %v2157 = vand.u32 2147483647, %v1645
        %v2158 = vand.u32 2147483647, %v1646
        %v2159 = vand.u32 2147483647, %v1647
        %v2160 = vand.u32 2147483647, %v1648
        %v2161 = vand.u32 2147483647, %v1649
        %v2162 = vand.u32 2147483647, %v1650
        %v2163 = vand.u32 2147483647, %v1651
        %v2164 = vand.u32 2147483647, %v1652
        %v2165 = vand.u32 2147483647, %v1653
        %v2166 = vand.u32 2147483647, %v1654
        %v2167 = vand.u32 2147483647, %v1655
        %v2168 = vand.u32 2147483647, %v1656
        %v2169 = vand.u32 2147483647, %v1657
        %v2170 = vand.u32 2147483647, %v1658
        %v2171 = vand.u32 2147483647, %v1659
        %v2172 = vand.u32 2147483647, %v1660
        %v2173 = vand.u32 2147483647, %v1661
        %v2174 = vand.u32 2147483647, %v1662
        %v2175 = vand.u32 2147483647, %v1663
        %v2176 = vand.u32 2147483647, %v1664
        %v2177 = vand.u32 2147483647, %v1665
        %v2178 = vand.u32 2147483647, %v1666
        %v2179 = vand.u32 2147483647, %v1667
        %v2180 = vand.u32 2147483647, %v1668
        %v2181 = vand.u32 2147483647, %v1669
        %v2182 = vand.u32 2147483647, %v1670
        %v2183 = vand.u32 2147483647, %v1671
        %v2184 = vand.u32 2147483647, %v1672
        %v2185 = vand.u32 2147483647, %v1673
        %v2186 = vand.u32 2147483647, %v1674
        %v2187 = vand.u32 2147483647, %v1675
        %v2188 = vand.u32 2147483647, %v1676
        %v2189 = vand.u32 2147483647, %v1677
        %v2190 = vand.u32 2147483647, %v1678
        %v2191 = vand.u32 2147483647, %v1679
        %v2192 = vand.u32 2147483647, %v1680
        %v2193 = vand.u32 2147483647, %v1681
        %v2194 = vand.u32 2147483647, %v1682
        %v2195 = vand.u32 2147483647, %v1683
        %v2196 = vand.u32 2147483647, %v1684
        %v2197 = vand.u32 2147483647, %v1685
        %v2198 = vand.u32 2147483647, %v1686
        %v2199 = vand.u32 2147483647, %v1687
        %v2200 = vand.u32 2147483647, %v1688
        %v2201 = vand.u32 2147483647, %v1689
        %v2202 = vand.u32 2147483647, %v1690
        %v2203 = vand.u32 2147483647, %v1691
        %v2204 = vand.u32 2147483647, %v1692
        %v2205 = vand.u32 2147483647, %v1693
        %v2206 = vand.u32 2147483647, %v1694
        %v2207 = vand.u32 2147483647, %v1695
        %v2208 = vand.u32 2147483647, %v1696
        %v2209 = vand.u32 2147483647, %v1697
        %v2210 = vand.u32 2147483647, %v1698
        %v2211 = vand.u32 2147483647, %v1699
        %v2212 = vand.u32 2147483647, %v1700
        %v2213 = vand.u32 2147483647, %v1701
        %v2214 = vand.u32 2147483647, %v1702
        %v2215 = vand.u32 2147483647, %v1703
        %v2216 = vand.u32 2147483647, %v1704
        %v2217 = vand.u32 2147483647, %v1705
        %v2218 = vand.u32 2147483647, %v1706
        %v2219 = vand.u32 2147483647, %v1707
        %v2220 = vand.u32 2147483647, %v1708
        %v2221 = vand.u32 2147483647, %v1709
        %v2222 = vand.u32 2147483647, %v1710
        %v2223 = vand.u32 2147483647, %v1711
        %v2224 = vand.u32 2147483647, %v1712
        %v2225 = vand.u32 2147483647, %v1713
        %v2226 = vand.u32 2147483647, %v1714
        %v2227 = vand.u32 2147483647, %v1715
        %v2228 = vand.u32 2147483647, %v1716
        %v2229 = vand.u32 2147483647, %v1717
        %v2230 = vand.u32 2147483647, %v1718
        %v2231 = vand.u32 2147483647, %v1719
        %v2232 = vand.u32 2147483647, %v1720
        %v2233 = vand.u32 2147483647, %v1721
        %v2234 = vand.u32 2147483647, %v1722
        %v2235 = vand.u32 2147483647, %v1723
        %v2236 = vand.u32 2147483647, %v1724
        %v2237 = vand.u32 2147483647, %v1725
        %v2238 = vand.u32 2147483647, %v1726
        %v2239 = vand.u32 2147483647, %v1727
        %v2240 = vand.u32 2147483647, %v1728
        %v2241 = vand.u32 2147483647, %v1729
        %v2242 = vand.u32 2147483647, %v1730
        %v2243 = vand.u32 2147483647, %v1731
        %v2244 = vand.u32 2147483647, %v1732
        %v2245 = vand.u32 2147483647, %v1733
        %v2246 = vand.u32 2147483647, %v1734
        %v2247 = vand.u32 2147483647, %v1735
        %v2248 = vand.u32 2147483647, %v1736
        %v2249 = vand.u32 2147483647, %v1737
        %v2250 = vand.u32 2147483647, %v1738
        %v2251 = vand.u32 2147483647, %v1739
        %v2252 = vand.u32 2147483647, %v1740
        %v2253 = vand.u32 2147483647, %v1741
        %v2254 = vand.u32 2147483647, %v1742
        %v2255 = vand.u32 2147483647, %v1743
        %v2256 = vand.u32 2147483647, %v1744
        %v2257 = vand.u32 2147483647, %v1745
        %v2258 = vand.u32 2147483647, %v1746
        %v2259 = vand.u32 2147483647, %v1747
        %v2260 = vand.u32 2147483647, %v1748
        %v2261 = vand.u32 2147483647, %v1749
        %v2262 = vand.u32 2147483647, %v1750
        %v2263 = vand.u32 2147483647, %v1751
        %v2264 = vand.u32 2147483647, %v1752
        %v2265 = vand.u32 2147483647, %v1753
        %v2266 = vand.u32 2147483647, %v1754
        %v2267 = vand.u32 2147483647, %v1755
        %v2268 = vand.u32 2147483647, %v1756
        %v2269 = vand.u32 2147483647, %v1757
        %v2270 = vand.u32 2147483647, %v1758
        %v2271 = vand.u32 2147483647, %v1759
        %v2272 = vand.u32 2147483647, %v1760
        %v2273 = vand.u32 2147483647, %v1761
        %v2274 = vand.u32 2147483647, %v1762
        %v2275 = vand.u32 2147483647, %v1763
        %v2276 = vand.u32 2147483647, %v1764
        %v2277 = vand.u32 2147483647, %v1765
        %v2278 = vand.u32 2147483647, %v1766
        %v2279 = vand.u32 2147483647, %v1767
        %v2280 = vand.u32 2147483647, %v1768
        %v2281 = vand.u32 2147483647, %v1769
        %v2282 = vand.u32 2147483647, %v1770
        %v2283 = vand.u32 2147483647, %v1771
        %v2284 = vand.u32 2147483647, %v1772
        %v2285 = vand.u32 2147483647, %v1773
        %v2286 = vand.u32 2147483647, %v1774
        %v2287 = vand.u32 2147483647, %v1775
        %v2288 = vand.u32 2147483647, %v1776
        %v2289 = vand.u32 2147483647, %v1777
        %v2290 = vand.u32 2147483647, %v1778
        %v2291 = vand.u32 2147483647, %v1779
        %v2292 = vand.u32 2147483647, %v1780
        %v2293 = vand.u32 2147483647, %v1781
        %v2294 = vand.u32 2147483647, %v1782
        %v2295 = vand.u32 2147483647, %v1783
        %v2296 = vand.u32 2147483647, %v1784
        %v2297 = vand.u32 2147483647, %v1785
        %v2298 = vand.u32 2147483647, %v1786
        %v2299 = vand.u32 2147483647, %v1787
        %v2300 = vand.u32 2147483647, %v1788
        %v2301 = vand.u32 2147483647, %v1789
        %v2302 = vand.u32 2147483647, %v1790
        %v2303 = vand.u32 2147483647, %v1791
        %v2304 = vand.u32 2147483647, %v1792
        %v2305 = vand.u32 2147483647, %v1793
        %v2306 = vand.u32 2147483647, %v1794
        %v2307 = vand.u32 2147483647, %v1795
        %v2308 = vand.u32 2147483647, %v1796
        %v2309 = vand.u32 2147483647, %v1797
        %v2310 = vand.u32 2147483647, %v1798
        %v2311 = vand.u32 2147483647, %v1799
        %v2312 = vand.u32 2147483647, %v1800
        %v2313 = vand.u32 2147483647, %v1801
        %v2314 = vand.u32 2147483647, %v1802
        %v2315 = vand.u32 2147483647, %v1803
        %v2316 = vand.u32 2147483647, %v1804
        %v2317 = vand.u32 2147483647, %v1805
        %v2318 = vand.u32 2147483647, %v1806
        %v2319 = vand.u32 2147483647, %v1807
        %v2320 = vand.u32 2147483647, %v1808
        %v2321 = vand.u32 2147483647, %v1809
        %v2322 = vand.u32 2147483647, %v1810
        %v2323 = vand.u32 2147483647, %v1811
        %v2324 = vand.u32 2147483647, %v1812
        %v2325 = vand.u32 2147483647, %v1813
        %v2326 = vand.u32 2147483647, %v1814
        %v2327 = vand.u32 2147483647, %v1815
        %v2328 = vand.u32 2147483647, %v1816
        %v2329 = vand.u32 2147483647, %v1817
        %v2330 = vand.u32 2147483647, %v1818
        %v2331 = vand.u32 2147483647, %v1819
        %v2332 = vand.u32 2147483647, %v1820
        %v2333 = vand.u32 2147483647, %v1821
        %v2334 = vand.u32 2147483647, %v1822
        %v2335 = vand.u32 2147483647, %v1823
        %v2336 = vand.u32 2147483647, %v1824
        %v2337 = vand.u32 2147483647, %v1825
        %v2338 = vand.u32 2147483647, %v1826
        %v2339 = vand.u32 2147483647, %v1827
        %v2340 = vand.u32 2147483647, %v1828
        %v2341 = vand.u32 2147483647, %v1829
        %v2342 = vadd.f32 %v1830, %v1894
        %v2343 = vadd.f32 %v2342, %v1958
        %v2344 = vadd.f32 %v2343, %v2022
        %v2345 = vadd.f32 %v2344, %v2086
        %v2346 = vadd.f32 %v2345, %v2150
        %v2347 = vadd.f32 %v2346, %v2214
        %v2348 = vadd.f32 %v2347, %v2278
        %v2349 = vadd.f32 %v1831, %v1895
        %v2350 = vadd.f32 %v2349, %v1959
        %v2351 = vadd.f32 %v2350, %v2023
        %v2352 = vadd.f32 %v2351, %v2087
        %v2353 = vadd.f32 %v2352, %v2151
        %v2354 = vadd.f32 %v2353, %v2215
        %v2355 = vadd.f32 %v2354, %v2279
        %v2356 = vadd.f32 %v1832, %v1896
        %v2357 = vadd.f32 %v2356, %v1960
        %v2358 = vadd.f32 %v2357, %v2024
        %v2359 = vadd.f32 %v2358, %v2088
        %v2360 = vadd.f32 %v2359, %v2152
        %v2361 = vadd.f32 %v2360, %v2216
        %v2362 = vadd.f32 %v2361, %v2280
        %v2363 = vadd.f32 %v1833, %v1897
        %v2364 = vadd.f32 %v2363, %v1961
        %v2365 = vadd.f32 %v2364, %v2025
        %v2366 = vadd.f32 %v2365, %v2089
        %v2367 = vadd.f32 %v2366, %v2153
        %v2368 = vadd.f32 %v2367, %v2217
        %v2369 = vadd.f32 %v2368, %v2281
        %v2370 = vadd.f32 %v1834, %v1898
        %v2371 = vadd.f32 %v2370, %v1962
        %v2372 = vadd.f32 %v2371, %v2026
        %v2373 = vadd.f32 %v2372, %v2090
        %v2374 = vadd.f32 %v2373, %v2154
        %v2375 = vadd.f32 %v2374, %v2218
        %v2376 = vadd.f32 %v2375, %v2282
        %v2377 = vadd.f32 %v1835, %v1899
        %v2378 = vadd.f32 %v2377, %v1963
        %v2379 = vadd.f32 %v2378, %v2027
        %v2380 = vadd.f32 %v2379, %v2091
        %v2381 = vadd.f32 %v2380, %v2155
        %v2382 = vadd.f32 %v2381, %v2219
        %v2383 = vadd.f32 %v2382, %v2283
        %v2384 = vadd.f32 %v1836, %v1900
        %v2385 = vadd.f32 %v2384, %v1964
        %v2386 = vadd.f32 %v2385, %v2028
        %v2387 = vadd.f32 %v2386, %v2092
        %v2388 = vadd.f32 %v2387, %v2156
        %v2389 = vadd.f32 %v2388, %v2220
        %v2390 = vadd.f32 %v2389, %v2284
        %v2391 = vadd.f32 %v1837, %v1901
        %v2392 = vadd.f32 %v2391, %v1965
        %v2393 = vadd.f32 %v2392, %v2029
        %v2394 = vadd.f32 %v2393, %v2093
        %v2395 = vadd.f32 %v2394, %v2157
        %v2396 = vadd.f32 %v2395, %v2221
        %v2397 = vadd.f32 %v2396, %v2285
        %v2398 = vadd.f32 %v1838, %v1902
        %v2399 = vadd.f32 %v2398, %v1966
        %v2400 = vadd.f32 %v2399, %v2030
        %v2401 = vadd.f32 %v2400, %v2094
        %v2402 = vadd.f32 %v2401, %v2158
        %v2403 = vadd.f32 %v2402, %v2222
        %v2404 = vadd.f32 %v2403, %v2286
        %v2405 = vadd.f32 %v1839, %v1903
        %v2406 = vadd.f32 %v2405, %v1967
        %v2407 = vadd.f32 %v2406, %v2031
        %v2408 = vadd.f32 %v2407, %v2095
        %v2409 = vadd.f32 %v2408, %v2159
        %v2410 = vadd.f32 %v2409, %v2223
        %v2411 = vadd.f32 %v2410, %v2287
        %v2412 = vadd.f32 %v1840, %v1904
        %v2413 = vadd.f32 %v2412, %v1968
        %v2414 = vadd.f32 %v2413, %v2032
        %v2415 = vadd.f32 %v2414, %v2096
        %v2416 = vadd.f32 %v2415, %v2160
        %v2417 = vadd.f32 %v2416, %v2224
        %v2418 = vadd.f32 %v2417, %v2288
        %v2419 = vadd.f32 %v1841, %v1905
        %v2420 = vadd.f32 %v2419, %v1969
        %v2421 = vadd.f32 %v2420, %v2033
        %v2422 = vadd.f32 %v2421, %v2097
        %v2423 = vadd.f32 %v2422, %v2161
        %v2424 = vadd.f32 %v2423, %v2225
        %v2425 = vadd.f32 %v2424, %v2289
        %v2426 = vadd.f32 %v1842, %v1906
        %v2427 = vadd.f32 %v2426, %v1970
        %v2428 = vadd.f32 %v2427, %v2034
        %v2429 = vadd.f32 %v2428, %v2098
        %v2430 = vadd.f32 %v2429, %v2162
        %v2431 = vadd.f32 %v2430, %v2226
        %v2432 = vadd.f32 %v2431, %v2290
        %v2433 = vadd.f32 %v1843, %v1907
        %v2434 = vadd.f32 %v2433, %v1971
        %v2435 = vadd.f32 %v2434, %v2035
        %v2436 = vadd.f32 %v2435, %v2099
        %v2437 = vadd.f32 %v2436, %v2163
        %v2438 = vadd.f32 %v2437, %v2227
        %v2439 = vadd.f32 %v2438, %v2291
        %v2440 = vadd.f32 %v1844, %v1908
        %v2441 = vadd.f32 %v2440, %v1972
        %v2442 = vadd.f32 %v2441, %v2036
        %v2443 = vadd.f32 %v2442, %v2100
        %v2444 = vadd.f32 %v2443, %v2164
        %v2445 = vadd.f32 %v2444, %v2228
        %v2446 = vadd.f32 %v2445, %v2292
        %v2447 = vadd.f32 %v1845, %v1909
        %v2448 = vadd.f32 %v2447, %v1973
        %v2449 = vadd.f32 %v2448, %v2037
        %v2450 = vadd.f32 %v2449, %v2101
        %v2451 = vadd.f32 %v2450, %v2165
        %v2452 = vadd.f32 %v2451, %v2229
        %v2453 = vadd.f32 %v2452, %v2293
        %v2454 = vadd.f32 %v1846, %v1910
        %v2455 = vadd.f32 %v2454, %v1974
        %v2456 = vadd.f32 %v2455, %v2038
        %v2457 = vadd.f32 %v2456, %v2102
        %v2458 = vadd.f32 %v2457, %v2166
        %v2459 = vadd.f32 %v2458, %v2230
        %v2460 = vadd.f32 %v2459, %v2294
        %v2461 = vadd.f32 %v1847, %v1911
        %v2462 = vadd.f32 %v2461, %v1975
        %v2463 = vadd.f32 %v2462, %v2039
        %v2464 = vadd.f32 %v2463, %v2103
        %v2465 = vadd.f32 %v2464, %v2167
        %v2466 = vadd.f32 %v2465, %v2231
        %v2467 = vadd.f32 %v2466, %v2295
        %v2468 = vadd.f32 %v1848, %v1912
        %v2469 = vadd.f32 %v2468, %v1976
        %v2470 = vadd.f32 %v2469, %v2040
        %v2471 = vadd.f32 %v2470, %v2104
        %v2472 = vadd.f32 %v2471, %v2168
        %v2473 = vadd.f32 %v2472, %v2232
        %v2474 = vadd.f32 %v2473, %v2296
        %v2475 = vadd.f32 %v1849, %v1913
        %v2476 = vadd.f32 %v2475, %v1977
        %v2477 = vadd.f32 %v2476, %v2041
        %v2478 = vadd.f32 %v2477, %v2105
        %v2479 = vadd.f32 %v2478, %v2169
        %v2480 = vadd.f32 %v2479, %v2233
        %v2481 = vadd.f32 %v2480, %v2297
        %v2482 = vadd.f32 %v1850, %v1914
        %v2483 = vadd.f32 %v2482, %v1978
        %v2484 = vadd.f32 %v2483, %v2042
        %v2485 = vadd.f32 %v2484, %v2106
        %v2486 = vadd.f32 %v2485, %v2170
        %v2487 = vadd.f32 %v2486, %v2234
        %v2488 = vadd.f32 %v2487, %v2298
        %v2489 = vadd.f32 %v1851, %v1915
        %v2490 = vadd.f32 %v2489, %v1979
        %v2491 = vadd.f32 %v2490, %v2043
        %v2492 = vadd.f32 %v2491, %v2107
        %v2493 = vadd.f32 %v2492, %v2171
        %v2494 = vadd.f32 %v2493, %v2235
        %v2495 = vadd.f32 %v2494, %v2299
        %v2496 = vadd.f32 %v1852, %v1916
        %v2497 = vadd.f32 %v2496, %v1980
        %v2498 = vadd.f32 %v2497, %v2044
        %v2499 = vadd.f32 %v2498, %v2108
        %v2500 = vadd.f32 %v2499, %v2172
        %v2501 = vadd.f32 %v2500, %v2236
        %v2502 = vadd.f32 %v2501, %v2300
        %v2503 = vadd.f32 %v1853, %v1917
        %v2504 = vadd.f32 %v2503, %v1981
        %v2505 = vadd.f32 %v2504, %v2045
        %v2506 = vadd.f32 %v2505, %v2109
        %v2507 = vadd.f32 %v2506, %v2173
        %v2508 = vadd.f32 %v2507, %v2237
        %v2509 = vadd.f32 %v2508, %v2301
        %v2510 = vadd.f32 %v1854, %v1918
        %v2511 = vadd.f32 %v2510, %v1982
        %v2512 = vadd.f32 %v2511, %v2046
        %v2513 = vadd.f32 %v2512, %v2110
        %v2514 = vadd.f32 %v2513, %v2174
        %v2515 = vadd.f32 %v2514, %v2238
        %v2516 = vadd.f32 %v2515, %v2302
        %v2517 = vadd.f32 %v1855, %v1919
        %v2518 = vadd.f32 %v2517, %v1983
        %v2519 = vadd.f32 %v2518, %v2047
        %v2520 = vadd.f32 %v2519, %v2111
        %v2521 = vadd.f32 %v2520, %v2175
        %v2522 = vadd.f32 %v2521, %v2239
        %v2523 = vadd.f32 %v2522, %v2303
        %v2524 = vadd.f32 %v1856, %v1920
        %v2525 = vadd.f32 %v2524, %v1984
        %v2526 = vadd.f32 %v2525, %v2048
        %v2527 = vadd.f32 %v2526, %v2112
        %v2528 = vadd.f32 %v2527, %v2176
        %v2529 = vadd.f32 %v2528, %v2240
        %v2530 = vadd.f32 %v2529, %v2304
        %v2531 = vadd.f32 %v1857, %v1921
        %v2532 = vadd.f32 %v2531, %v1985
        %v2533 = vadd.f32 %v2532, %v2049
        %v2534 = vadd.f32 %v2533, %v2113
        %v2535 = vadd.f32 %v2534, %v2177
        %v2536 = vadd.f32 %v2535, %v2241
        %v2537 = vadd.f32 %v2536, %v2305
        %v2538 = vadd.f32 %v1858, %v1922
        %v2539 = vadd.f32 %v2538, %v1986
        %v2540 = vadd.f32 %v2539, %v2050
        %v2541 = vadd.f32 %v2540, %v2114
        %v2542 = vadd.f32 %v2541, %v2178
        %v2543 = vadd.f32 %v2542, %v2242
        %v2544 = vadd.f32 %v2543, %v2306
        %v2545 = vadd.f32 %v1859, %v1923
        %v2546 = vadd.f32 %v2545, %v1987
        %v2547 = vadd.f32 %v2546, %v2051
        %v2548 = vadd.f32 %v2547, %v2115
        %v2549 = vadd.f32 %v2548, %v2179
        %v2550 = vadd.f32 %v2549, %v2243
        %v2551 = vadd.f32 %v2550, %v2307
        %v2552 = vadd.f32 %v1860, %v1924
        %v2553 = vadd.f32 %v2552, %v1988
        %v2554 = vadd.f32 %v2553, %v2052
        %v2555 = vadd.f32 %v2554, %v2116
        %v2556 = vadd.f32 %v2555, %v2180
        %v2557 = vadd.f32 %v2556, %v2244
        %v2558 = vadd.f32 %v2557, %v2308
        %v2559 = vadd.f32 %v1861, %v1925
        %v2560 = vadd.f32 %v2559, %v1989
        %v2561 = vadd.f32 %v2560, %v2053
        %v2562 = vadd.f32 %v2561, %v2117
        %v2563 = vadd.f32 %v2562, %v2181
        %v2564 = vadd.f32 %v2563, %v2245
        %v2565 = vadd.f32 %v2564, %v2309
        %v2566 = vadd.f32 %v1862, %v1926
        %v2567 = vadd.f32 %v2566, %v1990
        %v2568 = vadd.f32 %v2567, %v2054
        %v2569 = vadd.f32 %v2568, %v2118
        %v2570 = vadd.f32 %v2569, %v2182
        %v2571 = vadd.f32 %v2570, %v2246
        %v2572 = vadd.f32 %v2571, %v2310
        %v2573 = vadd.f32 %v1863, %v1927
        %v2574 = vadd.f32 %v2573, %v1991
        %v2575 = vadd.f32 %v2574, %v2055
        %v2576 = vadd.f32 %v2575, %v2119
        %v2577 = vadd.f32 %v2576, %v2183
        %v2578 = vadd.f32 %v2577, %v2247
        %v2579 = vadd.f32 %v2578, %v2311
        %v2580 = vadd.f32 %v1864, %v1928
        %v2581 = vadd.f32 %v2580, %v1992
        %v2582 = vadd.f32 %v2581, %v2056
        %v2583 = vadd.f32 %v2582, %v2120
        %v2584 = vadd.f32 %v2583, %v2184
        %v2585 = vadd.f32 %v2584, %v2248
        %v2586 = vadd.f32 %v2585, %v2312
        %v2587 = vadd.f32 %v1865, %v1929
        %v2588 = vadd.f32 %v2587, %v1993
        %v2589 = vadd.f32 %v2588, %v2057
        %v2590 = vadd.f32 %v2589, %v2121
        %v2591 = vadd.f32 %v2590, %v2185
        %v2592 = vadd.f32 %v2591, %v2249
        %v2593 = vadd.f32 %v2592, %v2313
        %v2594 = vadd.f32 %v1866, %v1930
        %v2595 = vadd.f32 %v2594, %v1994
        %v2596 = vadd.f32 %v2595, %v2058
        %v2597 = vadd.f32 %v2596, %v2122
        %v2598 = vadd.f32 %v2597, %v2186
        %v2599 = vadd.f32 %v2598, %v2250
        %v2600 = vadd.f32 %v2599, %v2314
        %v2601 = vadd.f32 %v1867, %v1931
        %v2602 = vadd.f32 %v2601, %v1995
        %v2603 = vadd.f32 %v2602, %v2059
        %v2604 = vadd.f32 %v2603, %v2123
        %v2605 = vadd.f32 %v2604, %v2187
        %v2606 = vadd.f32 %v2605, %v2251
        %v2607 = vadd.f32 %v2606, %v2315
        %v2608 = vadd.f32 %v1868, %v1932
        %v2609 = vadd.f32 %v2608, %v1996
        %v2610 = vadd.f32 %v2609, %v2060
        %v2611 = vadd.f32 %v2610, %v2124
        %v2612 = vadd.f32 %v2611, %v2188
        %v2613 = vadd.f32 %v2612, %v2252
        %v2614 = vadd.f32 %v2613, %v2316
        %v2615 = vadd.f32 %v1869, %v1933
        %v2616 = vadd.f32 %v2615, %v1997
        %v2617 = vadd.f32 %v2616, %v2061
        %v2618 = vadd.f32 %v2617, %v2125
        %v2619 = vadd.f32 %v2618, %v2189
        %v2620 = vadd.f32 %v2619, %v2253
        %v2621 = vadd.f32 %v2620, %v2317
        %v2622 = vadd.f32 %v1870, %v1934
        %v2623 = vadd.f32 %v2622, %v1998
        %v2624 = vadd.f32 %v2623, %v2062
        %v2625 = vadd.f32 %v2624, %v2126
        %v2626 = vadd.f32 %v2625, %v2190
        %v2627 = vadd.f32 %v2626, %v2254
        %v2628 = vadd.f32 %v2627, %v2318
        %v2629 = vadd.f32 %v1871, %v1935
        %v2630 = vadd.f32 %v2629, %v1999
        %v2631 = vadd.f32 %v2630, %v2063
        %v2632 = vadd.f32 %v2631, %v2127
        %v2633 = vadd.f32 %v2632, %v2191
        %v2634 = vadd.f32 %v2633, %v2255
        %v2635 = vadd.f32 %v2634, %v2319
        %v2636 = vadd.f32 %v1872, %v1936
        %v2637 = vadd.f32 %v2636, %v2000
        %v2638 = vadd.f32 %v2637, %v2064
        %v2639 = vadd.f32 %v2638, %v2128
        %v2640 = vadd.f32 %v2639, %v2192
        %v2641 = vadd.f32 %v2640, %v2256
        %v2642 = vadd.f32 %v2641, %v2320
        %v2643 = vadd.f32 %v1873, %v1937
        %v2644 = vadd.f32 %v2643, %v2001
        %v2645 = vadd.f32 %v2644, %v2065
        %v2646 = vadd.f32 %v2645, %v2129
        %v2647 = vadd.f32 %v2646, %v2193
        %v2648 = vadd.f32 %v2647, %v2257
        %v2649 = vadd.f32 %v2648, %v2321
        %v2650 = vadd.f32 %v1874, %v1938
        %v2651 = vadd.f32 %v2650, %v2002
        %v2652 = vadd.f32 %v2651, %v2066
        %v2653 = vadd.f32 %v2652, %v2130
        %v2654 = vadd.f32 %v2653, %v2194
        %v2655 = vadd.f32 %v2654, %v2258
        %v2656 = vadd.f32 %v2655, %v2322
        %v2657 = vadd.f32 %v1875, %v1939
        %v2658 = vadd.f32 %v2657, %v2003
        %v2659 = vadd.f32 %v2658, %v2067
        %v2660 = vadd.f32 %v2659, %v2131
        %v2661 = vadd.f32 %v2660, %v2195
        %v2662 = vadd.f32 %v2661, %v2259
        %v2663 = vadd.f32 %v2662, %v2323
        %v2664 = vadd.f32 %v1876, %v1940
        %v2665 = vadd.f32 %v2664, %v2004
        %v2666 = vadd.f32 %v2665, %v2068
        %v2667 = vadd.f32 %v2666, %v2132
        %v2668 = vadd.f32 %v2667, %v2196
        %v2669 = vadd.f32 %v2668, %v2260
        %v2670 = vadd.f32 %v2669, %v2324
        %v2671 = vadd.f32 %v1877, %v1941
        %v2672 = vadd.f32 %v2671, %v2005
        %v2673 = vadd.f32 %v2672, %v2069
        %v2674 = vadd.f32 %v2673, %v2133
        %v2675 = vadd.f32 %v2674, %v2197
        %v2676 = vadd.f32 %v2675, %v2261
        %v2677 = vadd.f32 %v2676, %v2325
        %v2678 = vadd.f32 %v1878, %v1942
        %v2679 = vadd.f32 %v2678, %v2006
        %v2680 = vadd.f32 %v2679, %v2070
        %v2681 = vadd.f32 %v2680, %v2134
        %v2682 = vadd.f32 %v2681, %v2198
        %v2683 = vadd.f32 %v2682, %v2262
        %v2684 = vadd.f32 %v2683, %v2326
        %v2685 = vadd.f32 %v1879, %v1943
        %v2686 = vadd.f32 %v2685, %v2007
        %v2687 = vadd.f32 %v2686, %v2071
        %v2688 = vadd.f32 %v2687, %v2135
        %v2689 = vadd.f32 %v2688, %v2199
        %v2690 = vadd.f32 %v2689, %v2263
        %v2691 = vadd.f32 %v2690, %v2327
        %v2692 = vadd.f32 %v1880, %v1944
        %v2693 = vadd.f32 %v2692, %v2008
        %v2694 = vadd.f32 %v2693, %v2072
        %v2695 = vadd.f32 %v2694, %v2136
        %v2696 = vadd.f32 %v2695, %v2200
        %v2697 = vadd.f32 %v2696, %v2264
        %v2698 = vadd.f32 %v2697, %v2328
        %v2699 = vadd.f32 %v1881, %v1945
        %v2700 = vadd.f32 %v2699, %v2009
        %v2701 = vadd.f32 %v2700, %v2073
        %v2702 = vadd.f32 %v2701, %v2137
        %v2703 = vadd.f32 %v2702, %v2201
        %v2704 = vadd.f32 %v2703, %v2265
        %v2705 = vadd.f32 %v2704, %v2329
        %v2706 = vadd.f32 %v1882, %v1946
        %v2707 = vadd.f32 %v2706, %v2010
        %v2708 = vadd.f32 %v2707, %v2074
        %v2709 = vadd.f32 %v2708, %v2138
        %v2710 = vadd.f32 %v2709, %v2202
        %v2711 = vadd.f32 %v2710, %v2266
        %v2712 = vadd.f32 %v2711, %v2330
        %v2713 = vadd.f32 %v1883, %v1947
        %v2714 = vadd.f32 %v2713, %v2011
        %v2715 = vadd.f32 %v2714, %v2075
        %v2716 = vadd.f32 %v2715, %v2139
        %v2717 = vadd.f32 %v2716, %v2203
        %v2718 = vadd.f32 %v2717, %v2267
        %v2719 = vadd.f32 %v2718, %v2331
        %v2720 = vadd.f32 %v1884, %v1948
        %v2721 = vadd.f32 %v2720, %v2012
        %v2722 = vadd.f32 %v2721, %v2076
        %v2723 = vadd.f32 %v2722, %v2140
        %v2724 = vadd.f32 %v2723, %v2204
        %v2725 = vadd.f32 %v2724, %v2268
        %v2726 = vadd.f32 %v2725, %v2332
        %v2727 = vadd.f32 %v1885, %v1949
        %v2728 = vadd.f32 %v2727, %v2013
        %v2729 = vadd.f32 %v2728, %v2077
        %v2730 = vadd.f32 %v2729, %v2141
        %v2731 = vadd.f32 %v2730, %v2205
        %v2732 = vadd.f32 %v2731, %v2269
        %v2733 = vadd.f32 %v2732, %v2333
        %v2734 = vadd.f32 %v1886, %v1950
        %v2735 = vadd.f32 %v2734, %v2014
        %v2736 = vadd.f32 %v2735, %v2078
        %v2737 = vadd.f32 %v2736, %v2142
        %v2738 = vadd.f32 %v2737, %v2206
        %v2739 = vadd.f32 %v2738, %v2270
        %v2740 = vadd.f32 %v2739, %v2334
        %v2741 = vadd.f32 %v1887, %v1951
        %v2742 = vadd.f32 %v2741, %v2015
        %v2743 = vadd.f32 %v2742, %v2079
        %v2744 = vadd.f32 %v2743, %v2143
        %v2745 = vadd.f32 %v2744, %v2207
        %v2746 = vadd.f32 %v2745, %v2271
        %v2747 = vadd.f32 %v2746, %v2335
        %v2748 = vadd.f32 %v1888, %v1952
        %v2749 = vadd.f32 %v2748, %v2016
        %v2750 = vadd.f32 %v2749, %v2080
        %v2751 = vadd.f32 %v2750, %v2144
        %v2752 = vadd.f32 %v2751, %v2208
        %v2753 = vadd.f32 %v2752, %v2272
        %v2754 = vadd.f32 %v2753, %v2336
        %v2755 = vadd.f32 %v1889, %v1953
        %v2756 = vadd.f32 %v2755, %v2017
        %v2757 = vadd.f32 %v2756, %v2081
        %v2758 = vadd.f32 %v2757, %v2145
        %v2759 = vadd.f32 %v2758, %v2209
        %v2760 = vadd.f32 %v2759, %v2273
        %v2761 = vadd.f32 %v2760, %v2337
        %v2762 = vadd.f32 %v1890, %v1954
        %v2763 = vadd.f32 %v2762, %v2018
        %v2764 = vadd.f32 %v2763, %v2082
        %v2765 = vadd.f32 %v2764, %v2146
        %v2766 = vadd.f32 %v2765, %v2210
        %v2767 = vadd.f32 %v2766, %v2274
        %v2768 = vadd.f32 %v2767, %v2338
        %v2769 = vadd.f32 %v1891, %v1955
        %v2770 = vadd.f32 %v2769, %v2019
        %v2771 = vadd.f32 %v2770, %v2083
        %v2772 = vadd.f32 %v2771, %v2147
        %v2773 = vadd.f32 %v2772, %v2211
        %v2774 = vadd.f32 %v2773, %v2275
        %v2775 = vadd.f32 %v2774, %v2339
        %v2776 = vadd.f32 %v1892, %v1956
        %v2777 = vadd.f32 %v2776, %v2020
        %v2778 = vadd.f32 %v2777, %v2084
        %v2779 = vadd.f32 %v2778, %v2148
        %v2780 = vadd.f32 %v2779, %v2212
        %v2781 = vadd.f32 %v2780, %v2276
        %v2782 = vadd.f32 %v2781, %v2340
        %v2783 = vadd.f32 %v1893, %v1957
        %v2784 = vadd.f32 %v2783, %v2021
        %v2785 = vadd.f32 %v2784, %v2085
        %v2786 = vadd.f32 %v2785, %v2149
        %v2787 = vadd.f32 %v2786, %v2213
        %v2788 = vadd.f32 %v2787, %v2277
        %v2789 = vadd.f32 %v2788, %v2341
        %v2790 = vld [vmem:[#allocation2] sm:$0xff]
        %v2791 = vld [vmem:[#allocation2 + $0x8] sm:$0xff]
        %v2792 = vld [vmem:[#allocation2 + $0x10] sm:$0xff]
        %v2793 = vld [vmem:[#allocation2 + $0x18] sm:$0xff]
        %v2794 = vld [vmem:[#allocation2 + $0x20] sm:$0xff]
        %v2795 = vld [vmem:[#allocation2 + $0x28] sm:$0xff]
        %v2796 = vld [vmem:[#allocation2 + $0x30] sm:$0xff]
        %v2797 = vld [vmem:[#allocation2 + $0x38] sm:$0xff]
        %v2798 = vld [vmem:[#allocation2 + $0x40] sm:$0xff]
        %v2799 = vld [vmem:[#allocation2 + $0x48] sm:$0xff]
        %v2800 = vld [vmem:[#allocation2 + $0x50] sm:$0xff]
        %v2801 = vld [vmem:[#allocation2 + $0x58] sm:$0xff]
        %v2802 = vld [vmem:[#allocation2 + $0x60] sm:$0xff]
        %v2803 = vld [vmem:[#allocation2 + $0x68] sm:$0xff]
        %v2804 = vld [vmem:[#allocation2 + $0x70] sm:$0xff]
        %v2805 = vld [vmem:[#allocation2 + $0x78] sm:$0xff]
        %v2806 = vld [vmem:[#allocation2 + $0x80] sm:$0xff]
        %v2807 = vld [vmem:[#allocation2 + $0x88] sm:$0xff]
        %v2808 = vld [vmem:[#allocation2 + $0x90] sm:$0xff]
        %v2809 = vld [vmem:[#allocation2 + $0x98] sm:$0xff]
        %v2810 = vld [vmem:[#allocation2 + $0xa0] sm:$0xff]
        %v2811 = vld [vmem:[#allocation2 + $0xa8] sm:$0xff]
        %v2812 = vld [vmem:[#allocation2 + $0xb0] sm:$0xff]
        %v2813 = vld [vmem:[#allocation2 + $0xb8] sm:$0xff]
        %v2814 = vld [vmem:[#allocation2 + $0xc0] sm:$0xff]
        %v2815 = vld [vmem:[#allocation2 + $0xc8] sm:$0xff]
        %v2816 = vld [vmem:[#allocation2 + $0xd0] sm:$0xff]
        %v2817 = vld [vmem:[#allocation2 + $0xd8] sm:$0xff]
        %v2818 = vld [vmem:[#allocation2 + $0xe0] sm:$0xff]
        %v2819 = vld [vmem:[#allocation2 + $0xe8] sm:$0xff]
        %v2820 = vld [vmem:[#allocation2 + $0xf0] sm:$0xff]
        %v2821 = vld [vmem:[#allocation2 + $0xf8] sm:$0xff]
        %v2822 = vld [vmem:[#allocation2 + $0x100] sm:$0xff]
        %v2823 = vld [vmem:[#allocation2 + $0x108] sm:$0xff]
        %v2824 = vld [vmem:[#allocation2 + $0x110] sm:$0xff]
        %v2825 = vld [vmem:[#allocation2 + $0x118] sm:$0xff]
        %v2826 = vld [vmem:[#allocation2 + $0x120] sm:$0xff]
        %v2827 = vld [vmem:[#allocation2 + $0x128] sm:$0xff]
        %v2828 = vld [vmem:[#allocation2 + $0x130] sm:$0xff]
        %v2829 = vld [vmem:[#allocation2 + $0x138] sm:$0xff]
        %v2830 = vld [vmem:[#allocation2 + $0x140] sm:$0xff]
        %v2831 = vld [vmem:[#allocation2 + $0x148] sm:$0xff]
        %v2832 = vld [vmem:[#allocation2 + $0x150] sm:$0xff]
        %v2833 = vld [vmem:[#allocation2 + $0x158] sm:$0xff]
        %v2834 = vld [vmem:[#allocation2 + $0x160] sm:$0xff]
        %v2835 = vld [vmem:[#allocation2 + $0x168] sm:$0xff]
        %v2836 = vld [vmem:[#allocation2 + $0x170] sm:$0xff]
        %v2837 = vld [vmem:[#allocation2 + $0x178] sm:$0xff]
        %v2838 = vld [vmem:[#allocation2 + $0x180] sm:$0xff]
        %v2839 = vld [vmem:[#allocation2 + $0x188] sm:$0xff]
        %v2840 = vld [vmem:[#allocation2 + $0x190] sm:$0xff]
        %v2841 = vld [vmem:[#allocation2 + $0x198] sm:$0xff]
        %v2842 = vld [vmem:[#allocation2 + $0x1a0] sm:$0xff]
        %v2843 = vld [vmem:[#allocation2 + $0x1a8] sm:$0xff]
        %v2844 = vld [vmem:[#allocation2 + $0x1b0] sm:$0xff]
        %v2845 = vld [vmem:[#allocation2 + $0x1b8] sm:$0xff]
        %v2846 = vld [vmem:[#allocation2 + $0x1c0] sm:$0xff]
        %v2847 = vld [vmem:[#allocation2 + $0x1c8] sm:$0xff]
        %v2848 = vld [vmem:[#allocation2 + $0x1d0] sm:$0xff]
        %v2849 = vld [vmem:[#allocation2 + $0x1d8] sm:$0xff]
        %v2850 = vld [vmem:[#allocation2 + $0x1e0] sm:$0xff]
        %v2851 = vld [vmem:[#allocation2 + $0x1e8] sm:$0xff]
        %v2852 = vld [vmem:[#allocation2 + $0x1f0] sm:$0xff]
        %v2853 = vld [vmem:[#allocation2 + $0x1f8] sm:$0xff]
        %v2854 = vadd.f32 %v2790, %v2348
        %v2855 = vadd.f32 %v2791, %v2355
        %v2856 = vadd.f32 %v2792, %v2362
        %v2857 = vadd.f32 %v2793, %v2369
        %v2858 = vadd.f32 %v2794, %v2376
        %v2859 = vadd.f32 %v2795, %v2383
        %v2860 = vadd.f32 %v2796, %v2390
        %v2861 = vadd.f32 %v2797, %v2397
        %v2862 = vadd.f32 %v2798, %v2404
        %v2863 = vadd.f32 %v2799, %v2411
        %v2864 = vadd.f32 %v2800, %v2418
        %v2865 = vadd.f32 %v2801, %v2425
        %v2866 = vadd.f32 %v2802, %v2432
        %v2867 = vadd.f32 %v2803, %v2439
        %v2868 = vadd.f32 %v2804, %v2446
        %v2869 = vadd.f32 %v2805, %v2453
        %v2870 = vadd.f32 %v2806, %v2460
        %v2871 = vadd.f32 %v2807, %v2467
        %v2872 = vadd.f32 %v2808, %v2474
        %v2873 = vadd.f32 %v2809, %v2481
        %v2874 = vadd.f32 %v2810, %v2488
        %v2875 = vadd.f32 %v2811, %v2495
        %v2876 = vadd.f32 %v2812, %v2502
        %v2877 = vadd.f32 %v2813, %v2509
        %v2878 = vadd.f32 %v2814, %v2516
        %v2879 = vadd.f32 %v2815, %v2523
        %v2880 = vadd.f32 %v2816, %v2530
        %v2881 = vadd.f32 %v2817, %v2537
        %v2882 = vadd.f32 %v2818, %v2544
        %v2883 = vadd.f32 %v2819, %v2551
        %v2884 = vadd.f32 %v2820, %v2558
        %v2885 = vadd.f32 %v2821, %v2565
        %v2886 = vadd.f32 %v2822, %v2572
        %v2887 = vadd.f32 %v2823, %v2579
        %v2888 = vadd.f32 %v2824, %v2586
        %v2889 = vadd.f32 %v2825, %v2593
        %v2890 = vadd.f32 %v2826, %v2600
        %v2891 = vadd.f32 %v2827, %v2607
        %v2892 = vadd.f32 %v2828, %v2614
        %v2893 = vadd.f32 %v2829, %v2621
        %v2894 = vadd.f32 %v2830, %v2628
        %v2895 = vadd.f32 %v2831, %v2635
        %v2896 = vadd.f32 %v2832, %v2642
        %v2897 = vadd.f32 %v2833, %v2649
        %v2898 = vadd.f32 %v2834, %v2656
        %v2899 = vadd.f32 %v2835, %v2663
        %v2900 = vadd.f32 %v2836, %v2670
        %v2901 = vadd.f32 %v2837, %v2677
        %v2902 = vadd.f32 %v2838, %v2684
        %v2903 = vadd.f32 %v2839, %v2691
        %v2904 = vadd.f32 %v2840, %v2698
        %v2905 = vadd.f32 %v2841, %v2705
        %v2906 = vadd.f32 %v2842, %v2712
        %v2907 = vadd.f32 %v2843, %v2719
        %v2908 = vadd.f32 %v2844, %v2726
        %v2909 = vadd.f32 %v2845, %v2733
        %v2910 = vadd.f32 %v2846, %v2740
        %v2911 = vadd.f32 %v2847, %v2747
        %v2912 = vadd.f32 %v2848, %v2754
        %v2913 = vadd.f32 %v2849, %v2761
        %v2914 = vadd.f32 %v2850, %v2768
        %v2915 = vadd.f32 %v2851, %v2775
        %v2916 = vadd.f32 %v2852, %v2782
        %v2917 = vadd.f32 %v2853, %v2789
        %2918 = vst [vmem:[#allocation2] sm:$0xff] %v2854
        %2919 = vst [vmem:[#allocation2 + $0x8] sm:$0xff] %v2855
        %2920 = vst [vmem:[#allocation2 + $0x10] sm:$0xff] %v2856
        %2921 = vst [vmem:[#allocation2 + $0x18] sm:$0xff] %v2857
        %2922 = vst [vmem:[#allocation2 + $0x20] sm:$0xff] %v2858
        %2923 = vst [vmem:[#allocation2 + $0x28] sm:$0xff] %v2859
        %2924 = vst [vmem:[#allocation2 + $0x30] sm:$0xff] %v2860
        %2925 = vst [vmem:[#allocation2 + $0x38] sm:$0xff] %v2861
        %2926 = vst [vmem:[#allocation2 + $0x40] sm:$0xff] %v2862
        %2927 = vst [vmem:[#allocation2 + $0x48] sm:$0xff] %v2863
        %2928 = vst [vmem:[#allocation2 + $0x50] sm:$0xff] %v2864
        %2929 = vst [vmem:[#allocation2 + $0x58] sm:$0xff] %v2865
        %2930 = vst [vmem:[#allocation2 + $0x60] sm:$0xff] %v2866
        %2931 = vst [vmem:[#allocation2 + $0x68] sm:$0xff] %v2867
        %2932 = vst [vmem:[#allocation2 + $0x70] sm:$0xff] %v2868
        %2933 = vst [vmem:[#allocation2 + $0x78] sm:$0xff] %v2869
        %2934 = vst [vmem:[#allocation2 + $0x80] sm:$0xff] %v2870
        %2935 = vst [vmem:[#allocation2 + $0x88] sm:$0xff] %v2871
        %2936 = vst [vmem:[#allocation2 + $0x90] sm:$0xff] %v2872
        %2937 = vst [vmem:[#allocation2 + $0x98] sm:$0xff] %v2873
        %2938 = vst [vmem:[#allocation2 + $0xa0] sm:$0xff] %v2874
        %2939 = vst [vmem:[#allocation2 + $0xa8] sm:$0xff] %v2875
        %2940 = vst [vmem:[#allocation2 + $0xb0] sm:$0xff] %v2876
        %2941 = vst [vmem:[#allocation2 + $0xb8] sm:$0xff] %v2877
        %2942 = vst [vmem:[#allocation2 + $0xc0] sm:$0xff] %v2878
        %2943 = vst [vmem:[#allocation2 + $0xc8] sm:$0xff] %v2879
        %2944 = vst [vmem:[#allocation2 + $0xd0] sm:$0xff] %v2880
        %2945 = vst [vmem:[#allocation2 + $0xd8] sm:$0xff] %v2881
        %2946 = vst [vmem:[#allocation2 + $0xe0] sm:$0xff] %v2882
        %2947 = vst [vmem:[#allocation2 + $0xe8] sm:$0xff] %v2883
        %2948 = vst [vmem:[#allocation2 + $0xf0] sm:$0xff] %v2884
        %2949 = vst [vmem:[#allocation2 + $0xf8] sm:$0xff] %v2885
        %2950 = vst [vmem:[#allocation2 + $0x100] sm:$0xff] %v2886
        %2951 = vst [vmem:[#allocation2 + $0x108] sm:$0xff] %v2887
        %2952 = vst [vmem:[#allocation2 + $0x110] sm:$0xff] %v2888
        %2953 = vst [vmem:[#allocation2 + $0x118] sm:$0xff] %v2889
        %2954 = vst [vmem:[#allocation2 + $0x120] sm:$0xff] %v2890
        %2955 = vst [vmem:[#allocation2 + $0x128] sm:$0xff] %v2891
        %2956 = vst [vmem:[#allocation2 + $0x130] sm:$0xff] %v2892
        %2957 = vst [vmem:[#allocation2 + $0x138] sm:$0xff] %v2893
        %2958 = vst [vmem:[#allocation2 + $0x140] sm:$0xff] %v2894
        %2959 = vst [vmem:[#allocation2 + $0x148] sm:$0xff] %v2895
        %2960 = vst [vmem:[#allocation2 + $0x150] sm:$0xff] %v2896
        %2961 = vst [vmem:[#allocation2 + $0x158] sm:$0xff] %v2897
        %2962 = vst [vmem:[#allocation2 + $0x160] sm:$0xff] %v2898
        %2963 = vst [vmem:[#allocation2 + $0x168] sm:$0xff] %v2899
        %2964 = vst [vmem:[#allocation2 + $0x170] sm:$0xff] %v2900
        %2965 = vst [vmem:[#allocation2 + $0x178] sm:$0xff] %v2901
        %2966 = vst [vmem:[#allocation2 + $0x180] sm:$0xff] %v2902
        %2967 = vst [vmem:[#allocation2 + $0x188] sm:$0xff] %v2903
        %2968 = vst [vmem:[#allocation2 + $0x190] sm:$0xff] %v2904
        %2969 = vst [vmem:[#allocation2 + $0x198] sm:$0xff] %v2905
        %2970 = vst [vmem:[#allocation2 + $0x1a0] sm:$0xff] %v2906
        %2971 = vst [vmem:[#allocation2 + $0x1a8] sm:$0xff] %v2907
        %2972 = vst [vmem:[#allocation2 + $0x1b0] sm:$0xff] %v2908
        %2973 = vst [vmem:[#allocation2 + $0x1b8] sm:$0xff] %v2909
        %2974 = vst [vmem:[#allocation2 + $0x1c0] sm:$0xff] %v2910
        %2975 = vst [vmem:[#allocation2 + $0x1c8] sm:$0xff] %v2911
        %2976 = vst [vmem:[#allocation2 + $0x1d0] sm:$0xff] %v2912
        %2977 = vst [vmem:[#allocation2 + $0x1d8] sm:$0xff] %v2913
        %2978 = vst [vmem:[#allocation2 + $0x1e0] sm:$0xff] %v2914
        %2979 = vst [vmem:[#allocation2 + $0x1e8] sm:$0xff] %v2915
        %2980 = vst [vmem:[#allocation2 + $0x1f0] sm:$0xff] %v2916
        %2981 = vst [vmem:[#allocation2 + $0x1f8] sm:$0xff] %v2917
        // Predicated region
        $region41: #{tpu_custom_call.1} parent=27 // pred_check
          %p2982 = pneg %p226
        $region42: #{tpu_custom_call.1} parent=27 // pred_check_branch
          %2984 = sbr.rel (%p2982) target = $region44
        $region43: #{tpu_custom_call.1} parent=27 // pred_region
          %v2985 = vld [vmem:[#allocation2] sm:$0xff]
          %v2986 = vld [vmem:[#allocation2 + $0x8] sm:$0xff]
          %v2987 = vld [vmem:[#allocation2 + $0x10] sm:$0xff]
          %v2988 = vld [vmem:[#allocation2 + $0x18] sm:$0xff]
          %v2989 = vld [vmem:[#allocation2 + $0x20] sm:$0xff]
          %v2990 = vld [vmem:[#allocation2 + $0x28] sm:$0xff]
          %v2991 = vld [vmem:[#allocation2 + $0x30] sm:$0xff]
          %v2992 = vld [vmem:[#allocation2 + $0x38] sm:$0xff]
          %v2993 = vld [vmem:[#allocation2 + $0x40] sm:$0xff]
          %v2994 = vld [vmem:[#allocation2 + $0x48] sm:$0xff]
          %v2995 = vld [vmem:[#allocation2 + $0x50] sm:$0xff]
          %v2996 = vld [vmem:[#allocation2 + $0x58] sm:$0xff]
          %v2997 = vld [vmem:[#allocation2 + $0x60] sm:$0xff]
          %v2998 = vld [vmem:[#allocation2 + $0x68] sm:$0xff]
          %v2999 = vld [vmem:[#allocation2 + $0x70] sm:$0xff]
          %v3000 = vld [vmem:[#allocation2 + $0x78] sm:$0xff]
          %v3001 = vld [vmem:[#allocation2 + $0x80] sm:$0xff]
          %v3002 = vld [vmem:[#allocation2 + $0x88] sm:$0xff]
          %v3003 = vld [vmem:[#allocation2 + $0x90] sm:$0xff]
          %v3004 = vld [vmem:[#allocation2 + $0x98] sm:$0xff]
          %v3005 = vld [vmem:[#allocation2 + $0xa0] sm:$0xff]
          %v3006 = vld [vmem:[#allocation2 + $0xa8] sm:$0xff]
          %v3007 = vld [vmem:[#allocation2 + $0xb0] sm:$0xff]
          %v3008 = vld [vmem:[#allocation2 + $0xb8] sm:$0xff]
          %v3009 = vld [vmem:[#allocation2 + $0xc0] sm:$0xff]
          %v3010 = vld [vmem:[#allocation2 + $0xc8] sm:$0xff]
          %v3011 = vld [vmem:[#allocation2 + $0xd0] sm:$0xff]
          %v3012 = vld [vmem:[#allocation2 + $0xd8] sm:$0xff]
          %v3013 = vld [vmem:[#allocation2 + $0xe0] sm:$0xff]
          %v3014 = vld [vmem:[#allocation2 + $0xe8] sm:$0xff]
          %v3015 = vld [vmem:[#allocation2 + $0xf0] sm:$0xff]
          %v3016 = vld [vmem:[#allocation2 + $0xf8] sm:$0xff]
          %v3017 = vld [vmem:[#allocation2 + $0x100] sm:$0xff]
          %v3018 = vld [vmem:[#allocation2 + $0x108] sm:$0xff]
          %v3019 = vld [vmem:[#allocation2 + $0x110] sm:$0xff]
          %v3020 = vld [vmem:[#allocation2 + $0x118] sm:$0xff]
          %v3021 = vld [vmem:[#allocation2 + $0x120] sm:$0xff]
          %v3022 = vld [vmem:[#allocation2 + $0x128] sm:$0xff]
          %v3023 = vld [vmem:[#allocation2 + $0x130] sm:$0xff]
          %v3024 = vld [vmem:[#allocation2 + $0x138] sm:$0xff]
          %v3025 = vld [vmem:[#allocation2 + $0x140] sm:$0xff]
          %v3026 = vld [vmem:[#allocation2 + $0x148] sm:$0xff]
          %v3027 = vld [vmem:[#allocation2 + $0x150] sm:$0xff]
          %v3028 = vld [vmem:[#allocation2 + $0x158] sm:$0xff]
          %v3029 = vld [vmem:[#allocation2 + $0x160] sm:$0xff]
          %v3030 = vld [vmem:[#allocation2 + $0x168] sm:$0xff]
          %v3031 = vld [vmem:[#allocation2 + $0x170] sm:$0xff]
          %v3032 = vld [vmem:[#allocation2 + $0x178] sm:$0xff]
          %v3033 = vld [vmem:[#allocation2 + $0x180] sm:$0xff]
          %v3034 = vld [vmem:[#allocation2 + $0x188] sm:$0xff]
          %v3035 = vld [vmem:[#allocation2 + $0x190] sm:$0xff]
          %v3036 = vld [vmem:[#allocation2 + $0x198] sm:$0xff]
          %v3037 = vld [vmem:[#allocation2 + $0x1a0] sm:$0xff]
          %v3038 = vld [vmem:[#allocation2 + $0x1a8] sm:$0xff]
          %v3039 = vld [vmem:[#allocation2 + $0x1b0] sm:$0xff]
          %v3040 = vld [vmem:[#allocation2 + $0x1b8] sm:$0xff]
          %v3041 = vld [vmem:[#allocation2 + $0x1c0] sm:$0xff]
          %v3042 = vld [vmem:[#allocation2 + $0x1c8] sm:$0xff]
          %v3043 = vld [vmem:[#allocation2 + $0x1d0] sm:$0xff]
          %v3044 = vld [vmem:[#allocation2 + $0x1d8] sm:$0xff]
          %v3045 = vld [vmem:[#allocation2 + $0x1e0] sm:$0xff]
          %v3046 = vld [vmem:[#allocation2 + $0x1e8] sm:$0xff]
          %v3047 = vld [vmem:[#allocation2 + $0x1f0] sm:$0xff]
          %v3048 = vld [vmem:[#allocation2 + $0x1f8] sm:$0xff]
          %v3049 = vadd.f32 %v2985, %v2986
          %v3050 = vadd.f32 %v3049, %v2987
          %v3051 = vadd.f32 %v3050, %v2988
          %v3052 = vadd.f32 %v3051, %v2989
          %v3053 = vadd.f32 %v3052, %v2990
          %v3054 = vadd.f32 %v3053, %v2991
          %v3055 = vadd.f32 %v3054, %v2992
          %v3056 = vadd.f32 %v3055, %v2993
          %v3057 = vadd.f32 %v3056, %v2994
          %v3058 = vadd.f32 %v3057, %v2995
          %v3059 = vadd.f32 %v3058, %v2996
          %v3060 = vadd.f32 %v3059, %v2997
          %v3061 = vadd.f32 %v3060, %v2998
          %v3062 = vadd.f32 %v3061, %v2999
          %v3063 = vadd.f32 %v3062, %v3000
          %v3064 = vadd.f32 %v3063, %v3001
          %v3065 = vadd.f32 %v3064, %v3002
          %v3066 = vadd.f32 %v3065, %v3003
          %v3067 = vadd.f32 %v3066, %v3004
          %v3068 = vadd.f32 %v3067, %v3005
          %v3069 = vadd.f32 %v3068, %v3006
          %v3070 = vadd.f32 %v3069, %v3007
          %v3071 = vadd.f32 %v3070, %v3008
          %v3072 = vadd.f32 %v3071, %v3009
          %v3073 = vadd.f32 %v3072, %v3010
          %v3074 = vadd.f32 %v3073, %v3011
          %v3075 = vadd.f32 %v3074, %v3012
          %v3076 = vadd.f32 %v3075, %v3013
          %v3077 = vadd.f32 %v3076, %v3014
          %v3078 = vadd.f32 %v3077, %v3015
          %v3079 = vadd.f32 %v3078, %v3016
          %v3080 = vadd.f32 %v3079, %v3017
          %v3081 = vadd.f32 %v3080, %v3018
          %v3082 = vadd.f32 %v3081, %v3019
          %v3083 = vadd.f32 %v3082, %v3020
          %v3084 = vadd.f32 %v3083, %v3021
          %v3085 = vadd.f32 %v3084, %v3022
          %v3086 = vadd.f32 %v3085, %v3023
          %v3087 = vadd.f32 %v3086, %v3024
          %v3088 = vadd.f32 %v3087, %v3025
          %v3089 = vadd.f32 %v3088, %v3026
          %v3090 = vadd.f32 %v3089, %v3027
          %v3091 = vadd.f32 %v3090, %v3028
          %v3092 = vadd.f32 %v3091, %v3029
          %v3093 = vadd.f32 %v3092, %v3030
          %v3094 = vadd.f32 %v3093, %v3031
          %v3095 = vadd.f32 %v3094, %v3032
          %v3096 = vadd.f32 %v3095, %v3033
          %v3097 = vadd.f32 %v3096, %v3034
          %v3098 = vadd.f32 %v3097, %v3035
          %v3099 = vadd.f32 %v3098, %v3036
          %v3100 = vadd.f32 %v3099, %v3037
          %v3101 = vadd.f32 %v3100, %v3038
          %v3102 = vadd.f32 %v3101, %v3039
          %v3103 = vadd.f32 %v3102, %v3040
          %v3104 = vadd.f32 %v3103, %v3041
          %v3105 = vadd.f32 %v3104, %v3042
          %v3106 = vadd.f32 %v3105, %v3043
          %v3107 = vadd.f32 %v3106, %v3044
          %v3108 = vadd.f32 %v3107, %v3045
          %v3109 = vadd.f32 %v3108, %v3046
          %v3110 = vadd.f32 %v3109, %v3047
          %v3111 = vadd.f32 %v3110, %v3048
          %3112 = vadd.xlane.f32.xlu0 %v3111
          %v3113 = vpop.xlane.xlu0 %3112
          %v3114 = vrot.slane %v3113, 4
          %v3115 = vadd.f32 %v3113, %v3114
          %v3116 = vrot.slane %v3115, 2
          %v3117 = vadd.f32 %v3115, %v3116
          %v3118 = vrot.slane %v3117, 1
          %v3119 = vadd.f32 %v3117, %v3118
          %s3120 = vtos %v3119
          %v3121 = vstv %s3120
          %vm3122 = vcmask 0
          %3123 = vst.msk [vmem:[%s225] sm:$0x1] %vm3122, %v3121
        $region44: #{tpu_custom_call.1} parent=27 // pred_fallthru
          _
        %p3124 = scmp.lt.s32.totalorder %s23, 1
        %s3125 = scalar_select %p3124, %s23, 1
        %s3126 = scalar_lea.vmem %s2, %s3125
        // Predicated region
        $region45: #{tpu_custom_call.1} parent=27 // pred_check
          %p3127 = pneg %p105
        $region46: #{tpu_custom_call.1} parent=27 // pred_check_branch
          %3129 = sbr.rel (%p3127) target = $region48
        $region47: #{tpu_custom_call.1} parent=27 // pred_region
          _
        $region48: #{tpu_custom_call.1} parent=27 // pred_fallthru
          _
      $region28: #{tpu_custom_call.1} parent=5 // pred_fallthru
        _
      %p3130 = scmp.le.s32.totalorder 2, %s14
      // Predicated region
      $region49: #{tpu_custom_call.1} parent=5 // pred_check
        %p3131 = pneg %p3130
      $region50: #{tpu_custom_call.1} parent=5 // pred_check_branch
        %3133 = sbr.rel (%p3131) target = $region52
      $region51: #{tpu_custom_call.1} parent=5 // pred_region
        %s3134 = ssub.s32 %s14, 2
        // Predicated region
        $region53: #{tpu_custom_call.1} parent=51 // pred_check
          %p3135 = pneg %p111
        $region54: #{tpu_custom_call.1} parent=51 // pred_check_branch
          %3137 = sbr.rel (%p3135) target = $region56
        $region55: #{tpu_custom_call.1} parent=51 // pred_region
          %p3138 = scmp.lt.s32.totalorder %s25, 1
          %s3139 = scalar_select %p3138, %s25, 1
          %s3140 = scalar_lea.vmem %s2, %s3139
        $region56: #{tpu_custom_call.1} parent=51 // pred_fallthru
          _
      $region52: #{tpu_custom_call.1} parent=5 // pred_fallthru
        _
    $region6: #{tpu_custom_call.1} parent=1 // loop_footer
      %s18 = sadd.s32 1, %s14
    $region7: #{tpu_custom_call.1} parent=1 // loop_footer_branch
      %13 = sbr.rel target = $region3
    $region8: #{tpu_custom_call.1} parent=1 // loop_exit
      _
    %3141 = vsyncpa [#allocation4], 1
    %s3142 = scalar_lea.sflag [#allocation4], 1
    %3143 = vsyncpa %s3142, 1
    %3144 = vsyncpa [#allocation6], 1
    %s3145 = scalar_lea.sflag [#allocation6], 1
    %3146 = vsyncpa %s3145, 1

</llo_original>
